<compile_context>
chip_gen: v7x
topology: tpu7x:2x2x1
jax: 0.10.0
libtpu: 0.0.40
codegen_flags: <defaults>
</compile_context>

<pallas_src>
import functools

import jax
import jax.numpy as jnp
from jax import lax
from jax.experimental import pallas as pl
from jax.experimental.pallas import tpu as pltpu

# ---- model hyperparameters (from the PyTorch module) -----------------------
N_EMBD = 64
N_HEAD = 8
N_LAYER = 2
BLOCK_SIZE = 33
VOCAB_SIZE = 65          # chars of the training text; synthetic choice
VOCAB_PAD = 128          # lane-dense padded vocab for the lm_head output
LN_EPS = 1e-5
HEAD_DIM = N_EMBD // N_HEAD
ROWS_TARGET = 256        # target token rows per grid step (fills v6e/v7x MXU)
# dropout = 0.2 in the module; identity at eval time.


# ---- in-kernel helpers ------------------------------------------------------
def _linear(h16, w16, b):
    """h16: (M, in) bf16, w16: (out, in) bf16 [PyTorch layout], b: (1, out) f32."""
    y = lax.dot_general(h16, w16, (((1,), (1,)), ((), ())),
                        preferred_element_type=jnp.float32)
    return y + b


def _layernorm(h, g, b):
    mu = jnp.mean(h, axis=-1, keepdims=True)
    var = jnp.mean(jnp.square(h - mu), axis=-1, keepdims=True)
    return (h - mu) * lax.rsqrt(var + LN_EPS) * g + b


# ---- fused forward kernel (BB sequences per grid step) ----------------------
def gpt_kernel(x_ref,
               ln1_g_ref, ln1_b_ref, qkv_w_ref, qkv_b_ref,
               wop_ref, bop_ref,
               ln2_g_ref, ln2_b_ref, w1_ref, b1_ref, w2_ref, b2_ref,
               lnf_g_ref, lnf_b_ref, lm_w_ref, lm_b_ref,
               logits_ref, xf_ref,
               attn_buf, *, bb, tp):
    bf16 = jnp.bfloat16
    E, H, Dh = N_EMBD, N_HEAD, HEAD_DIM
    scale = 1.0 / (Dh ** 0.5)

    # ---- masks built in-kernel (2-D iotas only; no DMA'd mask tensors) ------
    # Key-major ("interleaved") per-head layout: lane/row index r = j*H + h
    # (j = key position, h = head).  Causal condition j <= i  <=>  r < (i+1)*H.
    row = lax.broadcasted_iota(jnp.int32, (tp, tp * H), 0)
    col = lax.broadcasted_iota(jnp.int32, (tp, tp * H), 1)
    amask = jnp.where(col < (row + 1) * H, 0.0, -1e30).astype(jnp.float32)

    # head selector hm[h, e] = 1 iff e // Dh == h  (built without division),
    # replicated per key position along sublanes: bm[j*H + h, e] = hm[h, e].
    hh = lax.broadcasted_iota(jnp.int32, (H, E), 0)
    ee = lax.broadcasted_iota(jnp.int32, (H, E), 1)
    hm = jnp.where((ee >= hh * Dh) & (ee < hh * Dh + Dh), 1.0, 0.0)
    bm = jnp.broadcast_to(hm[None], (tp, H, E)).reshape(tp * H, E)
    bm16 = bm.astype(bf16)                                     # (tp*H, E)

    x = x_ref[...]                                             # (M, E) f32

    def block(x, l):
        # ----- multi-head causal self-attention (pre-LN) -----
        h = _layernorm(x, ln1_g_ref[l], ln1_b_ref[l])
        qkv = _linear(h.astype(bf16), qkv_w_ref[l], qkv_b_ref[l])   # (M, 3E) f32
        q = qkv[:, 0 * E:1 * E] * scale
        k = qkv[:, 1 * E:2 * E]
        v = qkv[:, 2 * E:3 * E]

        # short per-sequence loop: only score / P*V / denominator matmuls here
        for s in range(bb):
            r0 = s * tp
            qs16 = q[r0:r0 + tp, :].astype(bf16)               # (tp, E)
            ks = k[r0:r0 + tp, :]
            vs = v[r0:r0 + tp, :]
            # replicate K/V per head (sublane broadcast, key-major order) and
            # zero cross-head lanes, so per-head attention is lane-dense matmuls.
            k_t = (jnp.broadcast_to(ks[:, None, :], (tp, H, E))
                   .reshape(tp * H, E).astype(bf16) * bm16)    # (tp*H, E)
            v_t = (jnp.broadcast_to(vs[:, None, :], (tp, H, E))
                   .reshape(tp * H, E).astype(bf16) * bm16)

            sc = lax.dot_general(qs16, k_t, (((1,), (1,)), ((), ())),
                                 preferred_element_type=jnp.float32)  # (tp, tp*H)
            sc = sc + amask                       # causal (and pad-key) mask
            sc = sc - jnp.max(sc, axis=-1, keepdims=True)      # row-wide max (valid)
            p16 = jnp.exp(sc).astype(bf16)

            # per-head softmax numerator / denominator (denominator broadcast into
            # the head's Dh lanes via the same selector matrix).
            num = jnp.dot(p16, v_t, preferred_element_type=jnp.float32)   # (tp, E)
            den = jnp.dot(p16, bm16, preferred_element_type=jnp.float32)  # (tp, E)
            attn_buf[r0:r0 + tp, :] = num * pl.reciprocal(den, approx=True)

        # fused out_proj . proj over the whole (M, E) token block (dropout = id)
        attn = attn_buf[...]
        x = x + _linear(attn.astype(bf16), wop_ref[l], bop_ref[l])

        # ----- feed-forward (pre-LN) -----
        h2 = _layernorm(x, ln2_g_ref[l], ln2_b_ref[l])
        f = _linear(h2.astype(bf16), w1_ref[l], b1_ref[l])     # (M, 4E)
        f = jnp.maximum(f, 0.0)                                # ReLU (f32)
        x = x + _linear(f.astype(bf16), w2_ref[l], b2_ref[l])  # ffwd dropout = id
        return x

    for l in range(N_LAYER):
        x = block(x, l)

    # ---- final LayerNorm + lm_head (vocab padded to 128 lanes) ----
    xf = _layernorm(x, lnf_g_ref[...], lnf_b_ref[...])
    # xf kept 64-wide f32 (exact hidden states); lane-dense padding skipped to avoid
    # a minor-dim concat in the kernel -- the store is tiny relative to the logits.
    xf_ref[...] = xf
    logits_ref[...] = _linear(xf.astype(bf16), lm_w_ref[...], lm_b_ref[...])


# ---- parameter construction (deterministic, synthetic, PyTorch layout) ------
def init_params(key):
    E, L, V = N_EMBD, N_LAYER, VOCAB_SIZE
    ks = iter(jax.random.split(key, 16))

    def nrm(shape):
        return (0.02 * jax.random.normal(next(ks), shape)).astype(jnp.float32)

    return {
        "tok_emb": nrm((V, E)),
        "pos_emb": nrm((BLOCK_SIZE, E)),
        "ln1_g": jnp.ones((L, 1, E), jnp.float32),
        "ln1_b": jnp.zeros((L, 1, E), jnp.float32),
        "qkv_w": nrm((L, 3 * E, E)),            # MultiheadAttention in_proj_weight
        "qkv_b": jnp.zeros((L, 1, 3 * E), jnp.float32),
        "outp_w": nrm((L, E, E)),               # MultiheadAttention out_proj
        "outp_b": jnp.zeros((L, 1, E), jnp.float32),
        "proj_w": nrm((L, E, E)),               # extra proj Linear in wrapper
        "proj_b": jnp.zeros((L, 1, E), jnp.float32),
        "ln2_g": jnp.ones((L, 1, E), jnp.float32),
        "ln2_b": jnp.zeros((L, 1, E), jnp.float32),
        "ff1_w": nrm((L, 4 * E, E)),
        "ff1_b": jnp.zeros((L, 1, 4 * E), jnp.float32),
        "ff2_w": nrm((L, E, 4 * E)),
        "ff2_b": jnp.zeros((L, 1, E), jnp.float32),
        "lnf_g": jnp.ones((1, E), jnp.float32),
        "lnf_b": jnp.zeros((1, E), jnp.float32),
        "lm_w": nrm((V, E)),
        "lm_b": jnp.zeros((1, V), jnp.float32),
        # TODO(synk): hidden_state_value / hidden_state_key / token_query params are
        # only used on the prev_hidden_states branch, not exercised by forward(idx).
    }


def prepare_params(params):
    """One-time conversion of raw (PyTorch-layout) params into kernel-ready arrays."""
    bf16 = jnp.bfloat16
    E = N_EMBD
    wo, bo = params["outp_w"], params["outp_b"]     # (L,E,E), (L,1,E)
    wp, bp = params["proj_w"], params["proj_b"]
    # out_proj followed by proj (two Linears, dropout = identity between them):
    #   y = a @ wo^T + bo ; z = y @ wp^T + bp  =>  z = a @ (wp wo)^T + (bo wp^T + bp)
    wop = jnp.einsum("lij,ljk->lik", wp, wo)
    bop = jnp.einsum("lxk,lik->lxi", bo, wp) + bp
    lm_w = jnp.zeros((VOCAB_PAD, E), jnp.float32).at[:VOCAB_SIZE].set(params["lm_w"])
    lm_b = jnp.zeros((1, VOCAB_PAD), jnp.float32).at[:, :VOCAB_SIZE].set(params["lm_b"])
    return {
        "tok_emb": params["tok_emb"],
        "pos_emb": params["pos_emb"],
        "ln1_g": params["ln1_g"], "ln1_b": params["ln1_b"],
        "qkv_w": params["qkv_w"].astype(bf16), "qkv_b": params["qkv_b"],
        "wop": wop.astype(bf16), "bop": bop,
        "ln2_g": params["ln2_g"], "ln2_b": params["ln2_b"],
        "ff1_w": params["ff1_w"].astype(bf16), "ff1_b": params["ff1_b"],
        "ff2_w": params["ff2_w"].astype(bf16), "ff2_b": params["ff2_b"],
        "lnf_g": params["lnf_g"], "lnf_b": params["lnf_b"],
        "lm_w": lm_w.astype(bf16), "lm_b": lm_b,
    }


# ---- wrapper ----------------------------------------------------------------
def gpt_forward(idx, prep):
    """idx: (B, T) int32 token ids, T <= BLOCK_SIZE.  Returns (logits, loss, x)."""
    B, T = idx.shape
    assert T <= BLOCK_SIZE
    E = N_EMBD
    Tp = ((T + 7) // 8) * 8                      # sublane-aligned sequence length
    BB = max(1, min(B, ROWS_TARGET // Tp))       # sequences per grid step
    G = -(-B // BB)                              # ceil(B / BB)
    B_pad = G * BB
    M = BB * Tp                                  # token rows per grid step

    # embedding gathers are glue (plain JAX); all dense compute lives in the kernel
    tok = prep["tok_emb"][idx]                   # (B, T, E)
    pos = prep["pos_emb"][:T]
    x = (tok + pos[None, :, :]).astype(jnp.float32)
    x = jnp.pad(x, ((0, B_pad - B), (0, Tp - T), (0, 0)))
    x = x.reshape(B_pad * Tp, E)                 # token-flattened layout

    weights = (prep["ln1_g"], prep["ln1_b"], prep["qkv_w"], prep["qkv_b"],
               prep["wop"], prep["bop"],
               prep["ln2_g"], prep["ln2_b"],
               prep["ff1_w"], prep["ff1_b"], prep["ff2_w"], prep["ff2_b"],
               prep["lnf_g"], prep["lnf_b"], prep["lm_w"], prep["lm_b"])

    def full_spec(a):
        nd = a.ndim
        return pl.BlockSpec(a.shape, lambda g, _nd=nd: (0,) * _nd)

    in_specs = [pl.BlockSpec((M, E), lambda g: (g, 0))]
    in_specs += [full_spec(a) for a in weights]

    kern = functools.partial(gpt_kernel, bb=BB, tp=Tp)

    logits_p, xf_p = pl.pallas_call(
        kern,
        grid=(G,),
        out_shape=(jax.ShapeDtypeStruct((B_pad * Tp, VOCAB_PAD), jnp.float32),
                   jax.ShapeDtypeStruct((B_pad * Tp, E), jnp.float32)),
        in_specs=in_specs,
        out_specs=(pl.BlockSpec((M, VOCAB_PAD), lambda g: (g, 0)),
                   pl.BlockSpec((M, E), lambda g: (g, 0))),
        scratch_shapes=[pltpu.VMEM((M, E), jnp.float32)],
        compiler_params=pltpu.CompilerParams(
            dimension_semantics=("parallel",)),
    )(x, *weights)

    logits = logits_p.reshape(B_pad, Tp, VOCAB_PAD)[:B, :T, :VOCAB_SIZE]
    x_out = xf_p.reshape(B_pad, Tp, E)[:B, :T, :]
    # TODO(synk): targets / F.cross_entropy loss path not exercised (targets=None).
    loss = None
    return logits, loss, x_out


if __name__ == "__main__":
    key = jax.random.PRNGKey(0)
    pkey, ikey = jax.random.split(key)
    params = init_params(pkey)
    prep = prepare_params(params)        # one-time weight prep (hoisted out of forward)

    B, T = 2, 8
    idx = jax.random.randint(ikey, (B, T), 0, VOCAB_SIZE, dtype=jnp.int32)

    logits, loss, x_out = gpt_forward(idx, prep)
    jax.block_until_ready((logits, x_out))

    assert logits.shape == (B, T, VOCAB_SIZE)
    assert x_out.shape == (B, T, N_EMBD)
    assert bool(jnp.all(jnp.isfinite(logits)))
    print("KERNEL_OK")
</pallas_src>

<mosaic_0001>
module attributes {stable_mosaic.version = 11 : i64} {
  func.func @gpt_kernel(%arg0: i32, %arg1: memref<16x64xf32, #tpu.memory_space<vmem>>, %arg2: memref<2x1x64xf32, #tpu.memory_space<vmem>>, %arg3: memref<2x1x64xf32, #tpu.memory_space<vmem>>, %arg4: memref<2x192x64xbf16, #tpu.memory_space<vmem>>, %arg5: memref<2x1x192xf32, #tpu.memory_space<vmem>>, %arg6: memref<2x64x64xbf16, #tpu.memory_space<vmem>>, %arg7: memref<2x1x64xf32, #tpu.memory_space<vmem>>, %arg8: memref<2x1x64xf32, #tpu.memory_space<vmem>>, %arg9: memref<2x1x64xf32, #tpu.memory_space<vmem>>, %arg10: memref<2x256x64xbf16, #tpu.memory_space<vmem>>, %arg11: memref<2x1x256xf32, #tpu.memory_space<vmem>>, %arg12: memref<2x64x256xbf16, #tpu.memory_space<vmem>>, %arg13: memref<2x1x64xf32, #tpu.memory_space<vmem>>, %arg14: memref<1x64xf32, #tpu.memory_space<vmem>>, %arg15: memref<1x64xf32, #tpu.memory_space<vmem>>, %arg16: memref<128x64xbf16, #tpu.memory_space<vmem>>, %arg17: memref<1x128xf32, #tpu.memory_space<vmem>>, %arg18: memref<16x128xf32, #tpu.memory_space<vmem>>, %arg19: memref<16x64xf32, #tpu.memory_space<vmem>>, %arg20: memref<16x64xf32, #tpu.memory_space<vmem>>) attributes {dimension_semantics = [#tpu.dimension_semantics<parallel>], iteration_bounds = array<i64: 1>, scalar_prefetch = 0 : i64, scratch_operands = 1 : i64, tpu.core_type = #tpu.core_type<tc>, window_params = [{transform_indices = @transform_0, window_bounds = array<i64: 16, 64>}, {pipeline_mode = #tpu.pipeline_mode<synchronous>, transform_indices = @transform_1, window_bounds = array<i64: 2, 1, 64>}, {pipeline_mode = #tpu.pipeline_mode<synchronous>, transform_indices = @transform_2, window_bounds = array<i64: 2, 1, 64>}, {pipeline_mode = #tpu.pipeline_mode<synchronous>, transform_indices = @transform_3, window_bounds = array<i64: 2, 192, 64>}, {pipeline_mode = #tpu.pipeline_mode<synchronous>, transform_indices = @transform_4, window_bounds = array<i64: 2, 1, 192>}, {pipeline_mode = #tpu.pipeline_mode<synchronous>, transform_indices = @transform_5, window_bounds = array<i64: 2, 64, 64>}, {pipeline_mode = #tpu.pipeline_mode<synchronous>, transform_indices = @transform_6, window_bounds = array<i64: 2, 1, 64>}, {pipeline_mode = #tpu.pipeline_mode<synchronous>, transform_indices = @transform_7, window_bounds = array<i64: 2, 1, 64>}, {pipeline_mode = #tpu.pipeline_mode<synchronous>, transform_indices = @transform_8, window_bounds = array<i64: 2, 1, 64>}, {pipeline_mode = #tpu.pipeline_mode<synchronous>, transform_indices = @transform_9, window_bounds = array<i64: 2, 256, 64>}, {pipeline_mode = #tpu.pipeline_mode<synchronous>, transform_indices = @transform_10, window_bounds = array<i64: 2, 1, 256>}, {pipeline_mode = #tpu.pipeline_mode<synchronous>, transform_indices = @transform_11, window_bounds = array<i64: 2, 64, 256>}, {pipeline_mode = #tpu.pipeline_mode<synchronous>, transform_indices = @transform_12, window_bounds = array<i64: 2, 1, 64>}, {pipeline_mode = #tpu.pipeline_mode<synchronous>, transform_indices = @transform_13, window_bounds = array<i64: 1, 64>}, {pipeline_mode = #tpu.pipeline_mode<synchronous>, transform_indices = @transform_14, window_bounds = array<i64: 1, 64>}, {pipeline_mode = #tpu.pipeline_mode<synchronous>, transform_indices = @transform_15, window_bounds = array<i64: 128, 64>}, {pipeline_mode = #tpu.pipeline_mode<synchronous>, transform_indices = @transform_16, window_bounds = array<i64: 1, 128>}, {transform_indices = @transform_17, window_bounds = array<i64: 16, 128>}, {transform_indices = @transform_18, window_bounds = array<i64: 16, 64>}]} {
    %0 = tpu.iota {dimensions = array<i32: 0>} : vector<8x64xi32>
    %1 = tpu.iota {dimensions = array<i32: 1>} : vector<8x64xi32>
    %c1_i32 = arith.constant 1 : i32
    %2 = vector.broadcast %c1_i32 : i32 to vector<8x64xi32>
    %3 = arith.addi %0, %2 : vector<8x64xi32>
    %c8_i32 = arith.constant 8 : i32
    %4 = vector.broadcast %c8_i32 : i32 to vector<8x64xi32>
    %5 = arith.muli %3, %4 : vector<8x64xi32>
    %6 = arith.cmpi slt, %1, %5 : vector<8x64xi32>
    %cst = arith.constant 0.000000e+00 : f32
    %cst_0 = arith.constant -1.000000e+30 : f32
    %7 = vector.broadcast %cst : f32 to vector<8x64xf32>
    %8 = vector.broadcast %cst_0 : f32 to vector<8x64xf32>
    %9 = arith.select %6, %7, %8 : vector<8x64xi1>, vector<8x64xf32>
    %10 = tpu.iota {dimensions = array<i32: 0>} : vector<8x64xi32>
    %11 = tpu.iota {dimensions = array<i32: 1>} : vector<8x64xi32>
    %c8_i32_1 = arith.constant 8 : i32
    %12 = vector.broadcast %c8_i32_1 : i32 to vector<8x64xi32>
    %13 = arith.muli %10, %12 : vector<8x64xi32>
    %14 = arith.cmpi sge, %11, %13 : vector<8x64xi32>
    %c8_i32_2 = arith.constant 8 : i32
    %15 = vector.broadcast %c8_i32_2 : i32 to vector<8x64xi32>
    %16 = arith.muli %10, %15 : vector<8x64xi32>
    %c8_i32_3 = arith.constant 8 : i32
    %17 = vector.broadcast %c8_i32_3 : i32 to vector<8x64xi32>
    %18 = arith.addi %16, %17 : vector<8x64xi32>
    %19 = arith.cmpi slt, %11, %18 : vector<8x64xi32>
    %20 = arith.andi %14, %19 : vector<8x64xi1>
    %cst_4 = arith.constant 1.000000e+00 : f32
    %cst_5 = arith.constant 0.000000e+00 : f32
    %21 = vector.broadcast %cst_4 : f32 to vector<8x64xf32>
    %22 = vector.broadcast %cst_5 : f32 to vector<8x64xf32>
    %23 = arith.select %20, %21, %22 : vector<8x64xi1>, vector<8x64xf32>
    %24 = vector.shape_cast %23 : vector<8x64xf32> to vector<1x8x64xf32>
    %25 = vector.shape_cast %24 : vector<1x8x64xf32> to vector<1x8x64xf32>
    %26 = vector.broadcast %25 : vector<1x8x64xf32> to vector<8x8x64xf32>
    %27 = vector.shape_cast %26 : vector<8x8x64xf32> to vector<64x64xf32>
    %28 = arith.truncf %27 : vector<64x64xf32> to vector<64x64xbf16>
    %c0 = arith.constant 0 : index
    %c0_6 = arith.constant 0 : index
    %29 = vector.load %arg1[%c0, %c0_6] : memref<16x64xf32, #tpu.memory_space<vmem>>, vector<16x64xf32>
    %c0_7 = arith.constant 0 : index
    %c0_8 = arith.constant 0 : index
    %c0_9 = arith.constant 0 : index
    %30 = vector.load %arg2[%c0_7, %c0_8, %c0_9] : memref<2x1x64xf32, #tpu.memory_space<vmem>>, vector<1x1x64xf32>
    %31 = vector.shape_cast %30 : vector<1x1x64xf32> to vector<1x64xf32>
    %c0_10 = arith.constant 0 : index
    %c0_11 = arith.constant 0 : index
    %c0_12 = arith.constant 0 : index
    %32 = vector.load %arg3[%c0_10, %c0_11, %c0_12] : memref<2x1x64xf32, #tpu.memory_space<vmem>>, vector<1x1x64xf32>
    %33 = vector.shape_cast %32 : vector<1x1x64xf32> to vector<1x64xf32>
    %cst_13 = arith.constant dense<0.000000e+00> : vector<16xf32>
    %34 = vector.multi_reduction <add>, %29, %cst_13 [1] : vector<16x64xf32> to vector<16xf32>
    %35 = vector.shape_cast %34 : vector<16xf32> to vector<16x1xf32>
    %cst_14 = arith.constant 6.400000e+01 : f32
    %36 = vector.broadcast %cst_14 : f32 to vector<16x1xf32>
    %37 = arith.divf %35, %36 : vector<16x1xf32>
    %38 = vector.broadcast %37 : vector<16x1xf32> to vector<16x64xf32>
    %39 = arith.subf %29, %38 : vector<16x64xf32>
    %40 = arith.mulf %39, %39 : vector<16x64xf32>
    %cst_15 = arith.constant dense<0.000000e+00> : vector<16xf32>
    %41 = vector.multi_reduction <add>, %40, %cst_15 [1] : vector<16x64xf32> to vector<16xf32>
    %42 = vector.shape_cast %41 : vector<16xf32> to vector<16x1xf32>
    %cst_16 = arith.constant 6.400000e+01 : f32
    %43 = vector.broadcast %cst_16 : f32 to vector<16x1xf32>
    %44 = arith.divf %42, %43 : vector<16x1xf32>
    %45 = vector.broadcast %37 : vector<16x1xf32> to vector<16x64xf32>
    %46 = arith.subf %29, %45 : vector<16x64xf32>
    %cst_17 = arith.constant 9.99999974E-6 : f32
    %47 = vector.broadcast %cst_17 : f32 to vector<16x1xf32>
    %48 = arith.addf %44, %47 : vector<16x1xf32>
    %49 = math.rsqrt %48 : vector<16x1xf32>
    %50 = vector.broadcast %49 : vector<16x1xf32> to vector<16x64xf32>
    %51 = arith.mulf %46, %50 : vector<16x64xf32>
    %52 = vector.broadcast %31 : vector<1x64xf32> to vector<16x64xf32>
    %53 = arith.mulf %51, %52 : vector<16x64xf32>
    %54 = vector.broadcast %33 : vector<1x64xf32> to vector<16x64xf32>
    %55 = arith.addf %53, %54 : vector<16x64xf32>
    %56 = arith.truncf %55 : vector<16x64xf32> to vector<16x64xbf16>
    %c0_18 = arith.constant 0 : index
    %c0_19 = arith.constant 0 : index
    %c0_20 = arith.constant 0 : index
    %57 = vector.load %arg4[%c0_18, %c0_19, %c0_20] : memref<2x192x64xbf16, #tpu.memory_space<vmem>>, vector<1x192x64xbf16>
    %58 = vector.shape_cast %57 : vector<1x192x64xbf16> to vector<192x64xbf16>
    %c0_21 = arith.constant 0 : index
    %c0_22 = arith.constant 0 : index
    %c0_23 = arith.constant 0 : index
    %59 = vector.load %arg5[%c0_21, %c0_22, %c0_23] : memref<2x1x192xf32, #tpu.memory_space<vmem>>, vector<1x1x192xf32>
    %60 = vector.shape_cast %59 : vector<1x1x192xf32> to vector<1x192xf32>
    %cst_24 = arith.constant dense<0.000000e+00> : vector<16x192xf32>
    %61 = tpu.matmul %56, %58, %cst_24 {dimension_numbers = #tpu.dot_dimension_numbers<[1], [1], [0], [0], [0, 0, 1, 0], [], []>} : vector<16x64xbf16>, vector<192x64xbf16>, vector<16x192xf32> -> vector<16x192xf32>
    %62 = vector.broadcast %60 : vector<1x192xf32> to vector<16x192xf32>
    %63 = arith.addf %61, %62 : vector<16x192xf32>
    %64 = vector.extract_strided_slice %63 {offsets = [0, 0], sizes = [16, 64], strides = [1, 1]} : vector<16x192xf32> to vector<16x64xf32>
    %cst_25 = arith.constant 0.353553385 : f32
    %65 = vector.broadcast %cst_25 : f32 to vector<16x64xf32>
    %66 = arith.mulf %64, %65 : vector<16x64xf32>
    %67 = vector.extract_strided_slice %63 {offsets = [0, 64], sizes = [16, 64], strides = [1, 1]} : vector<16x192xf32> to vector<16x64xf32>
    %68 = vector.extract_strided_slice %63 {offsets = [0, 128], sizes = [16, 64], strides = [1, 1]} : vector<16x192xf32> to vector<16x64xf32>
    %69 = vector.extract_strided_slice %66 {offsets = [0, 0], sizes = [8, 64], strides = [1, 1]} : vector<16x64xf32> to vector<8x64xf32>
    %70 = arith.truncf %69 : vector<8x64xf32> to vector<8x64xbf16>
    %71 = vector.extract_strided_slice %67 {offsets = [0, 0], sizes = [8, 64], strides = [1, 1]} : vector<16x64xf32> to vector<8x64xf32>
    %72 = vector.extract_strided_slice %68 {offsets = [0, 0], sizes = [8, 64], strides = [1, 1]} : vector<16x64xf32> to vector<8x64xf32>
    %73 = vector.shape_cast %71 : vector<8x64xf32> to vector<8x1x64xf32>
    %74 = vector.shape_cast %73 : vector<8x1x64xf32> to vector<8x1x64xf32>
    %75 = vector.broadcast %74 : vector<8x1x64xf32> to vector<8x8x64xf32>
    %76 = vector.shape_cast %75 : vector<8x8x64xf32> to vector<64x64xf32>
    %77 = arith.truncf %76 : vector<64x64xf32> to vector<64x64xbf16>
    %78 = arith.mulf %77, %28 : vector<64x64xbf16>
    %79 = vector.shape_cast %72 : vector<8x64xf32> to vector<8x1x64xf32>
    %80 = vector.shape_cast %79 : vector<8x1x64xf32> to vector<8x1x64xf32>
    %81 = vector.broadcast %80 : vector<8x1x64xf32> to vector<8x8x64xf32>
    %82 = vector.shape_cast %81 : vector<8x8x64xf32> to vector<64x64xf32>
    %83 = arith.truncf %82 : vector<64x64xf32> to vector<64x64xbf16>
    %84 = arith.mulf %83, %28 : vector<64x64xbf16>
    %cst_26 = arith.constant dense<0.000000e+00> : vector<8x64xf32>
    %85 = tpu.matmul %70, %78, %cst_26 {dimension_numbers = #tpu.dot_dimension_numbers<[1], [1], [0], [0], [0, 0, 1, 0], [], []>} : vector<8x64xbf16>, vector<64x64xbf16>, vector<8x64xf32> -> vector<8x64xf32>
    %86 = arith.addf %85, %9 : vector<8x64xf32>
    %cst_27 = arith.constant dense<0xFF800000> : vector<8xf32>
    %87 = vector.multi_reduction <maximumf>, %86, %cst_27 [1] : vector<8x64xf32> to vector<8xf32>
    %88 = vector.shape_cast %87 : vector<8xf32> to vector<8x1xf32>
    %89 = vector.broadcast %88 : vector<8x1xf32> to vector<8x64xf32>
    %90 = arith.subf %86, %89 : vector<8x64xf32>
    %91 = math.exp %90 : vector<8x64xf32>
    %92 = arith.truncf %91 : vector<8x64xf32> to vector<8x64xbf16>
    %cst_28 = arith.constant dense<0.000000e+00> : vector<8x64xf32>
    %93 = tpu.matmul %92, %84, %cst_28 {dimension_numbers = #tpu.dot_dimension_numbers<[1], [0], [0], [1], [0, 0, 1, 1], [], []>} : vector<8x64xbf16>, vector<64x64xbf16>, vector<8x64xf32> -> vector<8x64xf32>
    %cst_29 = arith.constant dense<0.000000e+00> : vector<8x64xf32>
    %94 = tpu.matmul %92, %28, %cst_29 {dimension_numbers = #tpu.dot_dimension_numbers<[1], [0], [0], [1], [0, 0, 1, 1], [], []>} : vector<8x64xbf16>, vector<64x64xbf16>, vector<8x64xf32> -> vector<8x64xf32>
    %95 = tpu.reciprocal %94 {approx = true} : vector<8x64xf32> -> vector<8x64xf32>
    %96 = arith.mulf %93, %95 : vector<8x64xf32>
    %c0_30 = arith.constant 0 : index
    %c0_31 = arith.constant 0 : index
    %97 = vector.load %arg20[%c0_30, %c0_31] : memref<16x64xf32, #tpu.memory_space<vmem>>, vector<8x64xf32>
    tpu.vector_store %arg20[%c0_30, %c0_31], %96 {strides = array<i32>} : memref<16x64xf32, #tpu.memory_space<vmem>>, vector<8x64xf32>,
    %98 = vector.extract_strided_slice %66 {offsets = [8, 0], sizes = [8, 64], strides = [1, 1]} : vector<16x64xf32> to vector<8x64xf32>
    %99 = arith.truncf %98 : vector<8x64xf32> to vector<8x64xbf16>
    %100 = vector.extract_strided_slice %67 {offsets = [8, 0], sizes = [8, 64], strides = [1, 1]} : vector<16x64xf32> to vector<8x64xf32>
    %101 = vector.extract_strided_slice %68 {offsets = [8, 0], sizes = [8, 64], strides = [1, 1]} : vector<16x64xf32> to vector<8x64xf32>
    %102 = vector.shape_cast %100 : vector<8x64xf32> to vector<8x1x64xf32>
    %103 = vector.shape_cast %102 : vector<8x1x64xf32> to vector<8x1x64xf32>
    %104 = vector.broadcast %103 : vector<8x1x64xf32> to vector<8x8x64xf32>
    %105 = vector.shape_cast %104 : vector<8x8x64xf32> to vector<64x64xf32>
    %106 = arith.truncf %105 : vector<64x64xf32> to vector<64x64xbf16>
    %107 = arith.mulf %106, %28 : vector<64x64xbf16>
    %108 = vector.shape_cast %101 : vector<8x64xf32> to vector<8x1x64xf32>
    %109 = vector.shape_cast %108 : vector<8x1x64xf32> to vector<8x1x64xf32>
    %110 = vector.broadcast %109 : vector<8x1x64xf32> to vector<8x8x64xf32>
    %111 = vector.shape_cast %110 : vector<8x8x64xf32> to vector<64x64xf32>
    %112 = arith.truncf %111 : vector<64x64xf32> to vector<64x64xbf16>
    %113 = arith.mulf %112, %28 : vector<64x64xbf16>
    %cst_32 = arith.constant dense<0.000000e+00> : vector<8x64xf32>
    %114 = tpu.matmul %99, %107, %cst_32 {dimension_numbers = #tpu.dot_dimension_numbers<[1], [1], [0], [0], [0, 0, 1, 0], [], []>} : vector<8x64xbf16>, vector<64x64xbf16>, vector<8x64xf32> -> vector<8x64xf32>
    %115 = arith.addf %114, %9 : vector<8x64xf32>
    %cst_33 = arith.constant dense<0xFF800000> : vector<8xf32>
    %116 = vector.multi_reduction <maximumf>, %115, %cst_33 [1] : vector<8x64xf32> to vector<8xf32>
    %117 = vector.shape_cast %116 : vector<8xf32> to vector<8x1xf32>
    %118 = vector.broadcast %117 : vector<8x1xf32> to vector<8x64xf32>
    %119 = arith.subf %115, %118 : vector<8x64xf32>
    %120 = math.exp %119 : vector<8x64xf32>
    %121 = arith.truncf %120 : vector<8x64xf32> to vector<8x64xbf16>
    %cst_34 = arith.constant dense<0.000000e+00> : vector<8x64xf32>
    %122 = tpu.matmul %121, %113, %cst_34 {dimension_numbers = #tpu.dot_dimension_numbers<[1], [0], [0], [1], [0, 0, 1, 1], [], []>} : vector<8x64xbf16>, vector<64x64xbf16>, vector<8x64xf32> -> vector<8x64xf32>
    %cst_35 = arith.constant dense<0.000000e+00> : vector<8x64xf32>
    %123 = tpu.matmul %121, %28, %cst_35 {dimension_numbers = #tpu.dot_dimension_numbers<[1], [0], [0], [1], [0, 0, 1, 1], [], []>} : vector<8x64xbf16>, vector<64x64xbf16>, vector<8x64xf32> -> vector<8x64xf32>
    %124 = tpu.reciprocal %123 {approx = true} : vector<8x64xf32> -> vector<8x64xf32>
    %125 = arith.mulf %122, %124 : vector<8x64xf32>
    %c8 = arith.constant 8 : index
    %c0_36 = arith.constant 0 : index
    %126 = vector.load %arg20[%c8, %c0_36] : memref<16x64xf32, #tpu.memory_space<vmem>>, vector<8x64xf32>
    tpu.vector_store %arg20[%c8, %c0_36], %125 {strides = array<i32>} : memref<16x64xf32, #tpu.memory_space<vmem>>, vector<8x64xf32>,
    %c0_37 = arith.constant 0 : index
    %c0_38 = arith.constant 0 : index
    %127 = vector.load %arg20[%c0_37, %c0_38] : memref<16x64xf32, #tpu.memory_space<vmem>>, vector<16x64xf32>
    %128 = arith.truncf %127 : vector<16x64xf32> to vector<16x64xbf16>
    %c0_39 = arith.constant 0 : index
    %c0_40 = arith.constant 0 : index
    %c0_41 = arith.constant 0 : index
    %129 = vector.load %arg6[%c0_39, %c0_40, %c0_41] : memref<2x64x64xbf16, #tpu.memory_space<vmem>>, vector<1x64x64xbf16>
    %130 = vector.shape_cast %129 : vector<1x64x64xbf16> to vector<64x64xbf16>
    %c0_42 = arith.constant 0 : index
    %c0_43 = arith.constant 0 : index
    %c0_44 = arith.constant 0 : index
    %131 = vector.load %arg7[%c0_42, %c0_43, %c0_44] : memref<2x1x64xf32, #tpu.memory_space<vmem>>, vector<1x1x64xf32>
    %132 = vector.shape_cast %131 : vector<1x1x64xf32> to vector<1x64xf32>
    %cst_45 = arith.constant dense<0.000000e+00> : vector<16x64xf32>
    %133 = tpu.matmul %128, %130, %cst_45 {dimension_numbers = #tpu.dot_dimension_numbers<[1], [1], [0], [0], [0, 0, 1, 0], [], []>} : vector<16x64xbf16>, vector<64x64xbf16>, vector<16x64xf32> -> vector<16x64xf32>
    %134 = vector.broadcast %132 : vector<1x64xf32> to vector<16x64xf32>
    %135 = arith.addf %133, %134 : vector<16x64xf32>
    %136 = arith.addf %29, %135 : vector<16x64xf32>
    %c0_46 = arith.constant 0 : index
    %c0_47 = arith.constant 0 : index
    %c0_48 = arith.constant 0 : index
    %137 = vector.load %arg8[%c0_46, %c0_47, %c0_48] : memref<2x1x64xf32, #tpu.memory_space<vmem>>, vector<1x1x64xf32>
    %138 = vector.shape_cast %137 : vector<1x1x64xf32> to vector<1x64xf32>
    %c0_49 = arith.constant 0 : index
    %c0_50 = arith.constant 0 : index
    %c0_51 = arith.constant 0 : index
    %139 = vector.load %arg9[%c0_49, %c0_50, %c0_51] : memref<2x1x64xf32, #tpu.memory_space<vmem>>, vector<1x1x64xf32>
    %140 = vector.shape_cast %139 : vector<1x1x64xf32> to vector<1x64xf32>
    %cst_52 = arith.constant dense<0.000000e+00> : vector<16xf32>
    %141 = vector.multi_reduction <add>, %136, %cst_52 [1] : vector<16x64xf32> to vector<16xf32>
    %142 = vector.shape_cast %141 : vector<16xf32> to vector<16x1xf32>
    %cst_53 = arith.constant 6.400000e+01 : f32
    %143 = vector.broadcast %cst_53 : f32 to vector<16x1xf32>
    %144 = arith.divf %142, %143 : vector<16x1xf32>
    %145 = vector.broadcast %144 : vector<16x1xf32> to vector<16x64xf32>
    %146 = arith.subf %136, %145 : vector<16x64xf32>
    %147 = arith.mulf %146, %146 : vector<16x64xf32>
    %cst_54 = arith.constant dense<0.000000e+00> : vector<16xf32>
    %148 = vector.multi_reduction <add>, %147, %cst_54 [1] : vector<16x64xf32> to vector<16xf32>
    %149 = vector.shape_cast %148 : vector<16xf32> to vector<16x1xf32>
    %cst_55 = arith.constant 6.400000e+01 : f32
    %150 = vector.broadcast %cst_55 : f32 to vector<16x1xf32>
    %151 = arith.divf %149, %150 : vector<16x1xf32>
    %152 = vector.broadcast %144 : vector<16x1xf32> to vector<16x64xf32>
    %153 = arith.subf %136, %152 : vector<16x64xf32>
    %cst_56 = arith.constant 9.99999974E-6 : f32
    %154 = vector.broadcast %cst_56 : f32 to vector<16x1xf32>
    %155 = arith.addf %151, %154 : vector<16x1xf32>
    %156 = math.rsqrt %155 : vector<16x1xf32>
    %157 = vector.broadcast %156 : vector<16x1xf32> to vector<16x64xf32>
    %158 = arith.mulf %153, %157 : vector<16x64xf32>
    %159 = vector.broadcast %138 : vector<1x64xf32> to vector<16x64xf32>
    %160 = arith.mulf %158, %159 : vector<16x64xf32>
    %161 = vector.broadcast %140 : vector<1x64xf32> to vector<16x64xf32>
    %162 = arith.addf %160, %161 : vector<16x64xf32>
    %163 = arith.truncf %162 : vector<16x64xf32> to vector<16x64xbf16>
    %c0_57 = arith.constant 0 : index
    %c0_58 = arith.constant 0 : index
    %c0_59 = arith.constant 0 : index
    %164 = vector.load %arg10[%c0_57, %c0_58, %c0_59] : memref<2x256x64xbf16, #tpu.memory_space<vmem>>, vector<1x256x64xbf16>
    %165 = vector.shape_cast %164 : vector<1x256x64xbf16> to vector<256x64xbf16>
    %c0_60 = arith.constant 0 : index
    %c0_61 = arith.constant 0 : index
    %c0_62 = arith.constant 0 : index
    %166 = vector.load %arg11[%c0_60, %c0_61, %c0_62] : memref<2x1x256xf32, #tpu.memory_space<vmem>>, vector<1x1x256xf32>
    %167 = vector.shape_cast %166 : vector<1x1x256xf32> to vector<1x256xf32>
    %cst_63 = arith.constant dense<0.000000e+00> : vector<16x256xf32>
    %168 = tpu.matmul %163, %165, %cst_63 {dimension_numbers = #tpu.dot_dimension_numbers<[1], [1], [0], [0], [0, 0, 1, 0], [], []>} : vector<16x64xbf16>, vector<256x64xbf16>, vector<16x256xf32> -> vector<16x256xf32>
    %169 = vector.broadcast %167 : vector<1x256xf32> to vector<16x256xf32>
    %170 = arith.addf %168, %169 : vector<16x256xf32>
    %cst_64 = arith.constant 0.000000e+00 : f32
    %171 = vector.broadcast %cst_64 : f32 to vector<16x256xf32>
    %172 = arith.maximumf %170, %171 : vector<16x256xf32>
    %173 = arith.truncf %172 : vector<16x256xf32> to vector<16x256xbf16>
    %c0_65 = arith.constant 0 : index
    %c0_66 = arith.constant 0 : index
    %c0_67 = arith.constant 0 : index
    %174 = vector.load %arg12[%c0_65, %c0_66, %c0_67] : memref<2x64x256xbf16, #tpu.memory_space<vmem>>, vector<1x64x256xbf16>
    %175 = vector.shape_cast %174 : vector<1x64x256xbf16> to vector<64x256xbf16>
    %c0_68 = arith.constant 0 : index
    %c0_69 = arith.constant 0 : index
    %c0_70 = arith.constant 0 : index
    %176 = vector.load %arg13[%c0_68, %c0_69, %c0_70] : memref<2x1x64xf32, #tpu.memory_space<vmem>>, vector<1x1x64xf32>
    %177 = vector.shape_cast %176 : vector<1x1x64xf32> to vector<1x64xf32>
    %cst_71 = arith.constant dense<0.000000e+00> : vector<16x64xf32>
    %178 = tpu.matmul %173, %175, %cst_71 {dimension_numbers = #tpu.dot_dimension_numbers<[1], [1], [0], [0], [0, 0, 1, 0], [], []>} : vector<16x256xbf16>, vector<64x256xbf16>, vector<16x64xf32> -> vector<16x64xf32>
    %179 = vector.broadcast %177 : vector<1x64xf32> to vector<16x64xf32>
    %180 = arith.addf %178, %179 : vector<16x64xf32>
    %181 = arith.addf %136, %180 : vector<16x64xf32>
    %c1 = arith.constant 1 : index
    %c0_72 = arith.constant 0 : index
    %c0_73 = arith.constant 0 : index
    %182 = vector.load %arg2[%c1, %c0_72, %c0_73] : memref<2x1x64xf32, #tpu.memory_space<vmem>>, vector<1x1x64xf32>
    %183 = vector.shape_cast %182 : vector<1x1x64xf32> to vector<1x64xf32>
    %c1_74 = arith.constant 1 : index
    %c0_75 = arith.constant 0 : index
    %c0_76 = arith.constant 0 : index
    %184 = vector.load %arg3[%c1_74, %c0_75, %c0_76] : memref<2x1x64xf32, #tpu.memory_space<vmem>>, vector<1x1x64xf32>
    %185 = vector.shape_cast %184 : vector<1x1x64xf32> to vector<1x64xf32>
    %cst_77 = arith.constant dense<0.000000e+00> : vector<16xf32>
    %186 = vector.multi_reduction <add>, %181, %cst_77 [1] : vector<16x64xf32> to vector<16xf32>
    %187 = vector.shape_cast %186 : vector<16xf32> to vector<16x1xf32>
    %cst_78 = arith.constant 6.400000e+01 : f32
    %188 = vector.broadcast %cst_78 : f32 to vector<16x1xf32>
    %189 = arith.divf %187, %188 : vector<16x1xf32>
    %190 = vector.broadcast %189 : vector<16x1xf32> to vector<16x64xf32>
    %191 = arith.subf %181, %190 : vector<16x64xf32>
    %192 = arith.mulf %191, %191 : vector<16x64xf32>
    %cst_79 = arith.constant dense<0.000000e+00> : vector<16xf32>
    %193 = vector.multi_reduction <add>, %192, %cst_79 [1] : vector<16x64xf32> to vector<16xf32>
    %194 = vector.shape_cast %193 : vector<16xf32> to vector<16x1xf32>
    %cst_80 = arith.constant 6.400000e+01 : f32
    %195 = vector.broadcast %cst_80 : f32 to vector<16x1xf32>
    %196 = arith.divf %194, %195 : vector<16x1xf32>
    %197 = vector.broadcast %189 : vector<16x1xf32> to vector<16x64xf32>
    %198 = arith.subf %181, %197 : vector<16x64xf32>
    %cst_81 = arith.constant 9.99999974E-6 : f32
    %199 = vector.broadcast %cst_81 : f32 to vector<16x1xf32>
    %200 = arith.addf %196, %199 : vector<16x1xf32>
    %201 = math.rsqrt %200 : vector<16x1xf32>
    %202 = vector.broadcast %201 : vector<16x1xf32> to vector<16x64xf32>
    %203 = arith.mulf %198, %202 : vector<16x64xf32>
    %204 = vector.broadcast %183 : vector<1x64xf32> to vector<16x64xf32>
    %205 = arith.mulf %203, %204 : vector<16x64xf32>
    %206 = vector.broadcast %185 : vector<1x64xf32> to vector<16x64xf32>
    %207 = arith.addf %205, %206 : vector<16x64xf32>
    %208 = arith.truncf %207 : vector<16x64xf32> to vector<16x64xbf16>
    %c1_82 = arith.constant 1 : index
    %c0_83 = arith.constant 0 : index
    %c0_84 = arith.constant 0 : index
    %209 = vector.load %arg4[%c1_82, %c0_83, %c0_84] : memref<2x192x64xbf16, #tpu.memory_space<vmem>>, vector<1x192x64xbf16>
    %210 = vector.shape_cast %209 : vector<1x192x64xbf16> to vector<192x64xbf16>
    %c1_85 = arith.constant 1 : index
    %c0_86 = arith.constant 0 : index
    %c0_87 = arith.constant 0 : index
    %211 = vector.load %arg5[%c1_85, %c0_86, %c0_87] : memref<2x1x192xf32, #tpu.memory_space<vmem>>, vector<1x1x192xf32>
    %212 = vector.shape_cast %211 : vector<1x1x192xf32> to vector<1x192xf32>
    %cst_88 = arith.constant dense<0.000000e+00> : vector<16x192xf32>
    %213 = tpu.matmul %208, %210, %cst_88 {dimension_numbers = #tpu.dot_dimension_numbers<[1], [1], [0], [0], [0, 0, 1, 0], [], []>} : vector<16x64xbf16>, vector<192x64xbf16>, vector<16x192xf32> -> vector<16x192xf32>
    %214 = vector.broadcast %212 : vector<1x192xf32> to vector<16x192xf32>
    %215 = arith.addf %213, %214 : vector<16x192xf32>
    %216 = vector.extract_strided_slice %215 {offsets = [0, 0], sizes = [16, 64], strides = [1, 1]} : vector<16x192xf32> to vector<16x64xf32>
    %cst_89 = arith.constant 0.353553385 : f32
    %217 = vector.broadcast %cst_89 : f32 to vector<16x64xf32>
    %218 = arith.mulf %216, %217 : vector<16x64xf32>
    %219 = vector.extract_strided_slice %215 {offsets = [0, 64], sizes = [16, 64], strides = [1, 1]} : vector<16x192xf32> to vector<16x64xf32>
    %220 = vector.extract_strided_slice %215 {offsets = [0, 128], sizes = [16, 64], strides = [1, 1]} : vector<16x192xf32> to vector<16x64xf32>
    %221 = vector.extract_strided_slice %218 {offsets = [0, 0], sizes = [8, 64], strides = [1, 1]} : vector<16x64xf32> to vector<8x64xf32>
    %222 = arith.truncf %221 : vector<8x64xf32> to vector<8x64xbf16>
    %223 = vector.extract_strided_slice %219 {offsets = [0, 0], sizes = [8, 64], strides = [1, 1]} : vector<16x64xf32> to vector<8x64xf32>
    %224 = vector.extract_strided_slice %220 {offsets = [0, 0], sizes = [8, 64], strides = [1, 1]} : vector<16x64xf32> to vector<8x64xf32>
    %225 = vector.shape_cast %223 : vector<8x64xf32> to vector<8x1x64xf32>
    %226 = vector.shape_cast %225 : vector<8x1x64xf32> to vector<8x1x64xf32>
    %227 = vector.broadcast %226 : vector<8x1x64xf32> to vector<8x8x64xf32>
    %228 = vector.shape_cast %227 : vector<8x8x64xf32> to vector<64x64xf32>
    %229 = arith.truncf %228 : vector<64x64xf32> to vector<64x64xbf16>
    %230 = arith.mulf %229, %28 : vector<64x64xbf16>
    %231 = vector.shape_cast %224 : vector<8x64xf32> to vector<8x1x64xf32>
    %232 = vector.shape_cast %231 : vector<8x1x64xf32> to vector<8x1x64xf32>
    %233 = vector.broadcast %232 : vector<8x1x64xf32> to vector<8x8x64xf32>
    %234 = vector.shape_cast %233 : vector<8x8x64xf32> to vector<64x64xf32>
    %235 = arith.truncf %234 : vector<64x64xf32> to vector<64x64xbf16>
    %236 = arith.mulf %235, %28 : vector<64x64xbf16>
    %cst_90 = arith.constant dense<0.000000e+00> : vector<8x64xf32>
    %237 = tpu.matmul %222, %230, %cst_90 {dimension_numbers = #tpu.dot_dimension_numbers<[1], [1], [0], [0], [0, 0, 1, 0], [], []>} : vector<8x64xbf16>, vector<64x64xbf16>, vector<8x64xf32> -> vector<8x64xf32>
    %238 = arith.addf %237, %9 : vector<8x64xf32>
    %cst_91 = arith.constant dense<0xFF800000> : vector<8xf32>
    %239 = vector.multi_reduction <maximumf>, %238, %cst_91 [1] : vector<8x64xf32> to vector<8xf32>
    %240 = vector.shape_cast %239 : vector<8xf32> to vector<8x1xf32>
    %241 = vector.broadcast %240 : vector<8x1xf32> to vector<8x64xf32>
    %242 = arith.subf %238, %241 : vector<8x64xf32>
    %243 = math.exp %242 : vector<8x64xf32>
    %244 = arith.truncf %243 : vector<8x64xf32> to vector<8x64xbf16>
    %cst_92 = arith.constant dense<0.000000e+00> : vector<8x64xf32>
    %245 = tpu.matmul %244, %236, %cst_92 {dimension_numbers = #tpu.dot_dimension_numbers<[1], [0], [0], [1], [0, 0, 1, 1], [], []>} : vector<8x64xbf16>, vector<64x64xbf16>, vector<8x64xf32> -> vector<8x64xf32>
    %cst_93 = arith.constant dense<0.000000e+00> : vector<8x64xf32>
    %246 = tpu.matmul %244, %28, %cst_93 {dimension_numbers = #tpu.dot_dimension_numbers<[1], [0], [0], [1], [0, 0, 1, 1], [], []>} : vector<8x64xbf16>, vector<64x64xbf16>, vector<8x64xf32> -> vector<8x64xf32>
    %247 = tpu.reciprocal %246 {approx = true} : vector<8x64xf32> -> vector<8x64xf32>
    %248 = arith.mulf %245, %247 : vector<8x64xf32>
    %c0_94 = arith.constant 0 : index
    %c0_95 = arith.constant 0 : index
    %249 = vector.load %arg20[%c0_94, %c0_95] : memref<16x64xf32, #tpu.memory_space<vmem>>, vector<8x64xf32>
    tpu.vector_store %arg20[%c0_94, %c0_95], %248 {strides = array<i32>} : memref<16x64xf32, #tpu.memory_space<vmem>>, vector<8x64xf32>,
    %250 = vector.extract_strided_slice %218 {offsets = [8, 0], sizes = [8, 64], strides = [1, 1]} : vector<16x64xf32> to vector<8x64xf32>
    %251 = arith.truncf %250 : vector<8x64xf32> to vector<8x64xbf16>
    %252 = vector.extract_strided_slice %219 {offsets = [8, 0], sizes = [8, 64], strides = [1, 1]} : vector<16x64xf32> to vector<8x64xf32>
    %253 = vector.extract_strided_slice %220 {offsets = [8, 0], sizes = [8, 64], strides = [1, 1]} : vector<16x64xf32> to vector<8x64xf32>
    %254 = vector.shape_cast %252 : vector<8x64xf32> to vector<8x1x64xf32>
    %255 = vector.shape_cast %254 : vector<8x1x64xf32> to vector<8x1x64xf32>
    %256 = vector.broadcast %255 : vector<8x1x64xf32> to vector<8x8x64xf32>
    %257 = vector.shape_cast %256 : vector<8x8x64xf32> to vector<64x64xf32>
    %258 = arith.truncf %257 : vector<64x64xf32> to vector<64x64xbf16>
    %259 = arith.mulf %258, %28 : vector<64x64xbf16>
    %260 = vector.shape_cast %253 : vector<8x64xf32> to vector<8x1x64xf32>
    %261 = vector.shape_cast %260 : vector<8x1x64xf32> to vector<8x1x64xf32>
    %262 = vector.broadcast %261 : vector<8x1x64xf32> to vector<8x8x64xf32>
    %263 = vector.shape_cast %262 : vector<8x8x64xf32> to vector<64x64xf32>
    %264 = arith.truncf %263 : vector<64x64xf32> to vector<64x64xbf16>
    %265 = arith.mulf %264, %28 : vector<64x64xbf16>
    %cst_96 = arith.constant dense<0.000000e+00> : vector<8x64xf32>
    %266 = tpu.matmul %251, %259, %cst_96 {dimension_numbers = #tpu.dot_dimension_numbers<[1], [1], [0], [0], [0, 0, 1, 0], [], []>} : vector<8x64xbf16>, vector<64x64xbf16>, vector<8x64xf32> -> vector<8x64xf32>
    %267 = arith.addf %266, %9 : vector<8x64xf32>
    %cst_97 = arith.constant dense<0xFF800000> : vector<8xf32>
    %268 = vector.multi_reduction <maximumf>, %267, %cst_97 [1] : vector<8x64xf32> to vector<8xf32>
    %269 = vector.shape_cast %268 : vector<8xf32> to vector<8x1xf32>
    %270 = vector.broadcast %269 : vector<8x1xf32> to vector<8x64xf32>
    %271 = arith.subf %267, %270 : vector<8x64xf32>
    %272 = math.exp %271 : vector<8x64xf32>
    %273 = arith.truncf %272 : vector<8x64xf32> to vector<8x64xbf16>
    %cst_98 = arith.constant dense<0.000000e+00> : vector<8x64xf32>
    %274 = tpu.matmul %273, %265, %cst_98 {dimension_numbers = #tpu.dot_dimension_numbers<[1], [0], [0], [1], [0, 0, 1, 1], [], []>} : vector<8x64xbf16>, vector<64x64xbf16>, vector<8x64xf32> -> vector<8x64xf32>
    %cst_99 = arith.constant dense<0.000000e+00> : vector<8x64xf32>
    %275 = tpu.matmul %273, %28, %cst_99 {dimension_numbers = #tpu.dot_dimension_numbers<[1], [0], [0], [1], [0, 0, 1, 1], [], []>} : vector<8x64xbf16>, vector<64x64xbf16>, vector<8x64xf32> -> vector<8x64xf32>
    %276 = tpu.reciprocal %275 {approx = true} : vector<8x64xf32> -> vector<8x64xf32>
    %277 = arith.mulf %274, %276 : vector<8x64xf32>
    %c8_100 = arith.constant 8 : index
    %c0_101 = arith.constant 0 : index
    %278 = vector.load %arg20[%c8_100, %c0_101] : memref<16x64xf32, #tpu.memory_space<vmem>>, vector<8x64xf32>
    tpu.vector_store %arg20[%c8_100, %c0_101], %277 {strides = array<i32>} : memref<16x64xf32, #tpu.memory_space<vmem>>, vector<8x64xf32>,
    %c0_102 = arith.constant 0 : index
    %c0_103 = arith.constant 0 : index
    %279 = vector.load %arg20[%c0_102, %c0_103] : memref<16x64xf32, #tpu.memory_space<vmem>>, vector<16x64xf32>
    %280 = arith.truncf %279 : vector<16x64xf32> to vector<16x64xbf16>
    %c1_104 = arith.constant 1 : index
    %c0_105 = arith.constant 0 : index
    %c0_106 = arith.constant 0 : index
    %281 = vector.load %arg6[%c1_104, %c0_105, %c0_106] : memref<2x64x64xbf16, #tpu.memory_space<vmem>>, vector<1x64x64xbf16>
    %282 = vector.shape_cast %281 : vector<1x64x64xbf16> to vector<64x64xbf16>
    %c1_107 = arith.constant 1 : index
    %c0_108 = arith.constant 0 : index
    %c0_109 = arith.constant 0 : index
    %283 = vector.load %arg7[%c1_107, %c0_108, %c0_109] : memref<2x1x64xf32, #tpu.memory_space<vmem>>, vector<1x1x64xf32>
    %284 = vector.shape_cast %283 : vector<1x1x64xf32> to vector<1x64xf32>
    %cst_110 = arith.constant dense<0.000000e+00> : vector<16x64xf32>
    %285 = tpu.matmul %280, %282, %cst_110 {dimension_numbers = #tpu.dot_dimension_numbers<[1], [1], [0], [0], [0, 0, 1, 0], [], []>} : vector<16x64xbf16>, vector<64x64xbf16>, vector<16x64xf32> -> vector<16x64xf32>
    %286 = vector.broadcast %284 : vector<1x64xf32> to vector<16x64xf32>
    %287 = arith.addf %285, %286 : vector<16x64xf32>
    %288 = arith.addf %181, %287 : vector<16x64xf32>
    %c1_111 = arith.constant 1 : index
    %c0_112 = arith.constant 0 : index
    %c0_113 = arith.constant 0 : index
    %289 = vector.load %arg8[%c1_111, %c0_112, %c0_113] : memref<2x1x64xf32, #tpu.memory_space<vmem>>, vector<1x1x64xf32>
    %290 = vector.shape_cast %289 : vector<1x1x64xf32> to vector<1x64xf32>
    %c1_114 = arith.constant 1 : index
    %c0_115 = arith.constant 0 : index
    %c0_116 = arith.constant 0 : index
    %291 = vector.load %arg9[%c1_114, %c0_115, %c0_116] : memref<2x1x64xf32, #tpu.memory_space<vmem>>, vector<1x1x64xf32>
    %292 = vector.shape_cast %291 : vector<1x1x64xf32> to vector<1x64xf32>
    %cst_117 = arith.constant dense<0.000000e+00> : vector<16xf32>
    %293 = vector.multi_reduction <add>, %288, %cst_117 [1] : vector<16x64xf32> to vector<16xf32>
    %294 = vector.shape_cast %293 : vector<16xf32> to vector<16x1xf32>
    %cst_118 = arith.constant 6.400000e+01 : f32
    %295 = vector.broadcast %cst_118 : f32 to vector<16x1xf32>
    %296 = arith.divf %294, %295 : vector<16x1xf32>
    %297 = vector.broadcast %296 : vector<16x1xf32> to vector<16x64xf32>
    %298 = arith.subf %288, %297 : vector<16x64xf32>
    %299 = arith.mulf %298, %298 : vector<16x64xf32>
    %cst_119 = arith.constant dense<0.000000e+00> : vector<16xf32>
    %300 = vector.multi_reduction <add>, %299, %cst_119 [1] : vector<16x64xf32> to vector<16xf32>
    %301 = vector.shape_cast %300 : vector<16xf32> to vector<16x1xf32>
    %cst_120 = arith.constant 6.400000e+01 : f32
    %302 = vector.broadcast %cst_120 : f32 to vector<16x1xf32>
    %303 = arith.divf %301, %302 : vector<16x1xf32>
    %304 = vector.broadcast %296 : vector<16x1xf32> to vector<16x64xf32>
    %305 = arith.subf %288, %304 : vector<16x64xf32>
    %cst_121 = arith.constant 9.99999974E-6 : f32
    %306 = vector.broadcast %cst_121 : f32 to vector<16x1xf32>
    %307 = arith.addf %303, %306 : vector<16x1xf32>
    %308 = math.rsqrt %307 : vector<16x1xf32>
    %309 = vector.broadcast %308 : vector<16x1xf32> to vector<16x64xf32>
    %310 = arith.mulf %305, %309 : vector<16x64xf32>
    %311 = vector.broadcast %290 : vector<1x64xf32> to vector<16x64xf32>
    %312 = arith.mulf %310, %311 : vector<16x64xf32>
    %313 = vector.broadcast %292 : vector<1x64xf32> to vector<16x64xf32>
    %314 = arith.addf %312, %313 : vector<16x64xf32>
    %315 = arith.truncf %314 : vector<16x64xf32> to vector<16x64xbf16>
    %c1_122 = arith.constant 1 : index
    %c0_123 = arith.constant 0 : index
    %c0_124 = arith.constant 0 : index
    %316 = vector.load %arg10[%c1_122, %c0_123, %c0_124] : memref<2x256x64xbf16, #tpu.memory_space<vmem>>, vector<1x256x64xbf16>
    %317 = vector.shape_cast %316 : vector<1x256x64xbf16> to vector<256x64xbf16>
    %c1_125 = arith.constant 1 : index
    %c0_126 = arith.constant 0 : index
    %c0_127 = arith.constant 0 : index
    %318 = vector.load %arg11[%c1_125, %c0_126, %c0_127] : memref<2x1x256xf32, #tpu.memory_space<vmem>>, vector<1x1x256xf32>
    %319 = vector.shape_cast %318 : vector<1x1x256xf32> to vector<1x256xf32>
    %cst_128 = arith.constant dense<0.000000e+00> : vector<16x256xf32>
    %320 = tpu.matmul %315, %317, %cst_128 {dimension_numbers = #tpu.dot_dimension_numbers<[1], [1], [0], [0], [0, 0, 1, 0], [], []>} : vector<16x64xbf16>, vector<256x64xbf16>, vector<16x256xf32> -> vector<16x256xf32>
    %321 = vector.broadcast %319 : vector<1x256xf32> to vector<16x256xf32>
    %322 = arith.addf %320, %321 : vector<16x256xf32>
    %cst_129 = arith.constant 0.000000e+00 : f32
    %323 = vector.broadcast %cst_129 : f32 to vector<16x256xf32>
    %324 = arith.maximumf %322, %323 : vector<16x256xf32>
    %325 = arith.truncf %324 : vector<16x256xf32> to vector<16x256xbf16>
    %c1_130 = arith.constant 1 : index
    %c0_131 = arith.constant 0 : index
    %c0_132 = arith.constant 0 : index
    %326 = vector.load %arg12[%c1_130, %c0_131, %c0_132] : memref<2x64x256xbf16, #tpu.memory_space<vmem>>, vector<1x64x256xbf16>
    %327 = vector.shape_cast %326 : vector<1x64x256xbf16> to vector<64x256xbf16>
    %c1_133 = arith.constant 1 : index
    %c0_134 = arith.constant 0 : index
    %c0_135 = arith.constant 0 : index
    %328 = vector.load %arg13[%c1_133, %c0_134, %c0_135] : memref<2x1x64xf32, #tpu.memory_space<vmem>>, vector<1x1x64xf32>
    %329 = vector.shape_cast %328 : vector<1x1x64xf32> to vector<1x64xf32>
    %cst_136 = arith.constant dense<0.000000e+00> : vector<16x64xf32>
    %330 = tpu.matmul %325, %327, %cst_136 {dimension_numbers = #tpu.dot_dimension_numbers<[1], [1], [0], [0], [0, 0, 1, 0], [], []>} : vector<16x256xbf16>, vector<64x256xbf16>, vector<16x64xf32> -> vector<16x64xf32>
    %331 = vector.broadcast %329 : vector<1x64xf32> to vector<16x64xf32>
    %332 = arith.addf %330, %331 : vector<16x64xf32>
    %333 = arith.addf %288, %332 : vector<16x64xf32>
    %c0_137 = arith.constant 0 : index
    %c0_138 = arith.constant 0 : index
    %334 = vector.load %arg14[%c0_137, %c0_138] : memref<1x64xf32, #tpu.memory_space<vmem>>, vector<1x64xf32>
    %c0_139 = arith.constant 0 : index
    %c0_140 = arith.constant 0 : index
    %335 = vector.load %arg15[%c0_139, %c0_140] : memref<1x64xf32, #tpu.memory_space<vmem>>, vector<1x64xf32>
    %cst_141 = arith.constant dense<0.000000e+00> : vector<16xf32>
    %336 = vector.multi_reduction <add>, %333, %cst_141 [1] : vector<16x64xf32> to vector<16xf32>
    %337 = vector.shape_cast %336 : vector<16xf32> to vector<16x1xf32>
    %cst_142 = arith.constant 6.400000e+01 : f32
    %338 = vector.broadcast %cst_142 : f32 to vector<16x1xf32>
    %339 = arith.divf %337, %338 : vector<16x1xf32>
    %340 = vector.broadcast %339 : vector<16x1xf32> to vector<16x64xf32>
    %341 = arith.subf %333, %340 : vector<16x64xf32>
    %342 = arith.mulf %341, %341 : vector<16x64xf32>
    %cst_143 = arith.constant dense<0.000000e+00> : vector<16xf32>
    %343 = vector.multi_reduction <add>, %342, %cst_143 [1] : vector<16x64xf32> to vector<16xf32>
    %344 = vector.shape_cast %343 : vector<16xf32> to vector<16x1xf32>
    %cst_144 = arith.constant 6.400000e+01 : f32
    %345 = vector.broadcast %cst_144 : f32 to vector<16x1xf32>
    %346 = arith.divf %344, %345 : vector<16x1xf32>
    %347 = vector.broadcast %339 : vector<16x1xf32> to vector<16x64xf32>
    %348 = arith.subf %333, %347 : vector<16x64xf32>
    %cst_145 = arith.constant 9.99999974E-6 : f32
    %349 = vector.broadcast %cst_145 : f32 to vector<16x1xf32>
    %350 = arith.addf %346, %349 : vector<16x1xf32>
    %351 = math.rsqrt %350 : vector<16x1xf32>
    %352 = vector.broadcast %351 : vector<16x1xf32> to vector<16x64xf32>
    %353 = arith.mulf %348, %352 : vector<16x64xf32>
    %354 = vector.broadcast %334 : vector<1x64xf32> to vector<16x64xf32>
    %355 = arith.mulf %353, %354 : vector<16x64xf32>
    %356 = vector.broadcast %335 : vector<1x64xf32> to vector<16x64xf32>
    %357 = arith.addf %355, %356 : vector<16x64xf32>
    %c0_146 = arith.constant 0 : index
    %c0_147 = arith.constant 0 : index
    %358 = vector.load %arg19[%c0_146, %c0_147] : memref<16x64xf32, #tpu.memory_space<vmem>>, vector<16x64xf32>
    tpu.vector_store %arg19[%c0_146, %c0_147], %357 {strides = array<i32>} : memref<16x64xf32, #tpu.memory_space<vmem>>, vector<16x64xf32>,
    %359 = arith.truncf %357 : vector<16x64xf32> to vector<16x64xbf16>
    %c0_148 = arith.constant 0 : index
    %c0_149 = arith.constant 0 : index
    %360 = vector.load %arg16[%c0_148, %c0_149] : memref<128x64xbf16, #tpu.memory_space<vmem>>, vector<128x64xbf16>
    %c0_150 = arith.constant 0 : index
    %c0_151 = arith.constant 0 : index
    %361 = vector.load %arg17[%c0_150, %c0_151] : memref<1x128xf32, #tpu.memory_space<vmem>>, vector<1x128xf32>
    %cst_152 = arith.constant dense<0.000000e+00> : vector<16x128xf32>
    %362 = tpu.matmul %359, %360, %cst_152 {dimension_numbers = #tpu.dot_dimension_numbers<[1], [1], [0], [0], [0, 0, 1, 0], [], []>} : vector<16x64xbf16>, vector<128x64xbf16>, vector<16x128xf32> -> vector<16x128xf32>
    %363 = vector.broadcast %361 : vector<1x128xf32> to vector<16x128xf32>
    %364 = arith.addf %362, %363 : vector<16x128xf32>
    %c0_153 = arith.constant 0 : index
    %c0_154 = arith.constant 0 : index
    %365 = vector.load %arg18[%c0_153, %c0_154] : memref<16x128xf32, #tpu.memory_space<vmem>>, vector<16x128xf32>
    tpu.vector_store %arg18[%c0_153, %c0_154], %364 {strides = array<i32>} : memref<16x128xf32, #tpu.memory_space<vmem>>, vector<16x128xf32>,
    return
  }
  func.func @transform_0(%arg0: i32) -> (i32, i32) {
    %c0_i32 = arith.constant 0 : i32
    %c0_i32_0 = arith.constant 0 : i32
    return %arg0, %c0_i32 : i32, i32
  }
  func.func @transform_1(%arg0: i32) -> (i32, i32, i32) {
    %c0_i32 = arith.constant 0 : i32
    %c0_i32_0 = arith.constant 0 : i32
    %c0_i32_1 = arith.constant 0 : i32
    %c0_i32_2 = arith.constant 0 : i32
    return %c0_i32, %c0_i32_0, %c0_i32_1 : i32, i32, i32
  }
  func.func @transform_2(%arg0: i32) -> (i32, i32, i32) {
    %c0_i32 = arith.constant 0 : i32
    %c0_i32_0 = arith.constant 0 : i32
    %c0_i32_1 = arith.constant 0 : i32
    %c0_i32_2 = arith.constant 0 : i32
    return %c0_i32, %c0_i32_0, %c0_i32_1 : i32, i32, i32
  }
  func.func @transform_3(%arg0: i32) -> (i32, i32, i32) {
    %c0_i32 = arith.constant 0 : i32
    %c0_i32_0 = arith.constant 0 : i32
    %c0_i32_1 = arith.constant 0 : i32
    %c0_i32_2 = arith.constant 0 : i32
    return %c0_i32, %c0_i32_0, %c0_i32_1 : i32, i32, i32
  }
  func.func @transform_4(%arg0: i32) -> (i32, i32, i32) {
    %c0_i32 = arith.constant 0 : i32
    %c0_i32_0 = arith.constant 0 : i32
    %c0_i32_1 = arith.constant 0 : i32
    %c0_i32_2 = arith.constant 0 : i32
    return %c0_i32, %c0_i32_0, %c0_i32_1 : i32, i32, i32
  }
  func.func @transform_5(%arg0: i32) -> (i32, i32, i32) {
    %c0_i32 = arith.constant 0 : i32
    %c0_i32_0 = arith.constant 0 : i32
    %c0_i32_1 = arith.constant 0 : i32
    %c0_i32_2 = arith.constant 0 : i32
    return %c0_i32, %c0_i32_0, %c0_i32_1 : i32, i32, i32
  }
  func.func @transform_6(%arg0: i32) -> (i32, i32, i32) {
    %c0_i32 = arith.constant 0 : i32
    %c0_i32_0 = arith.constant 0 : i32
    %c0_i32_1 = arith.constant 0 : i32
    %c0_i32_2 = arith.constant 0 : i32
    return %c0_i32, %c0_i32_0, %c0_i32_1 : i32, i32, i32
  }
  func.func @transform_7(%arg0: i32) -> (i32, i32, i32) {
    %c0_i32 = arith.constant 0 : i32
    %c0_i32_0 = arith.constant 0 : i32
    %c0_i32_1 = arith.constant 0 : i32
    %c0_i32_2 = arith.constant 0 : i32
    return %c0_i32, %c0_i32_0, %c0_i32_1 : i32, i32, i32
  }
  func.func @transform_8(%arg0: i32) -> (i32, i32, i32) {
    %c0_i32 = arith.constant 0 : i32
    %c0_i32_0 = arith.constant 0 : i32
    %c0_i32_1 = arith.constant 0 : i32
    %c0_i32_2 = arith.constant 0 : i32
    return %c0_i32, %c0_i32_0, %c0_i32_1 : i32, i32, i32
  }
  func.func @transform_9(%arg0: i32) -> (i32, i32, i32) {
    %c0_i32 = arith.constant 0 : i32
    %c0_i32_0 = arith.constant 0 : i32
    %c0_i32_1 = arith.constant 0 : i32
    %c0_i32_2 = arith.constant 0 : i32
    return %c0_i32, %c0_i32_0, %c0_i32_1 : i32, i32, i32
  }
  func.func @transform_10(%arg0: i32) -> (i32, i32, i32) {
    %c0_i32 = arith.constant 0 : i32
    %c0_i32_0 = arith.constant 0 : i32
    %c0_i32_1 = arith.constant 0 : i32
    %c0_i32_2 = arith.constant 0 : i32
    return %c0_i32, %c0_i32_0, %c0_i32_1 : i32, i32, i32
  }
  func.func @transform_11(%arg0: i32) -> (i32, i32, i32) {
    %c0_i32 = arith.constant 0 : i32
    %c0_i32_0 = arith.constant 0 : i32
    %c0_i32_1 = arith.constant 0 : i32
    %c0_i32_2 = arith.constant 0 : i32
    return %c0_i32, %c0_i32_0, %c0_i32_1 : i32, i32, i32
  }
  func.func @transform_12(%arg0: i32) -> (i32, i32, i32) {
    %c0_i32 = arith.constant 0 : i32
    %c0_i32_0 = arith.constant 0 : i32
    %c0_i32_1 = arith.constant 0 : i32
    %c0_i32_2 = arith.constant 0 : i32
    return %c0_i32, %c0_i32_0, %c0_i32_1 : i32, i32, i32
  }
  func.func @transform_13(%arg0: i32) -> (i32, i32) {
    %c0_i32 = arith.constant 0 : i32
    %c0_i32_0 = arith.constant 0 : i32
    %c0_i32_1 = arith.constant 0 : i32
    return %c0_i32, %c0_i32_0 : i32, i32
  }
  func.func @transform_14(%arg0: i32) -> (i32, i32) {
    %c0_i32 = arith.constant 0 : i32
    %c0_i32_0 = arith.constant 0 : i32
    %c0_i32_1 = arith.constant 0 : i32
    return %c0_i32, %c0_i32_0 : i32, i32
  }
  func.func @transform_15(%arg0: i32) -> (i32, i32) {
    %c0_i32 = arith.constant 0 : i32
    %c0_i32_0 = arith.constant 0 : i32
    %c0_i32_1 = arith.constant 0 : i32
    return %c0_i32, %c0_i32_0 : i32, i32
  }
  func.func @transform_16(%arg0: i32) -> (i32, i32) {
    %c0_i32 = arith.constant 0 : i32
    %c0_i32_0 = arith.constant 0 : i32
    %c0_i32_1 = arith.constant 0 : i32
    return %c0_i32, %c0_i32_0 : i32, i32
  }
  func.func @transform_17(%arg0: i32) -> (i32, i32) {
    %c0_i32 = arith.constant 0 : i32
    %c0_i32_0 = arith.constant 0 : i32
    return %arg0, %c0_i32 : i32, i32
  }
  func.func @transform_18(%arg0: i32) -> (i32, i32) {
    %c0_i32 = arith.constant 0 : i32
    %c0_i32_0 = arith.constant 0 : i32
    return %arg0, %c0_i32 : i32, i32
  }
}

</mosaic_0001>

<llo_original>
// kernel: tpu_custom_call.1
$region0: #{tpu_custom_call.1}
  #allocation0 [shape = 'u32[]', space=smem, size = 0x4, offset = 0x4, fixed_abs, tag = 'smem constant byte address 0x4 - core index']
  #allocation1 [shape = 'u32[144,128]{1,0:T(1,128)}', space=vmem, size = 0x12000, scoped, tag = 'internal scratch']
  #allocation2 [shape = 'f32[16,64]{1,0:T(8,128)}', space=vmem, size = 0x2000, scoped, tag = 'scratch operand']
  %s0 = inlined_call_operand.vmem [shape: f32[16,64], index: 0, kind: input, shape index: {}]
  %s1 = inlined_call_operand.vmem [shape: f32[2,1,64], index: 1, kind: input, shape index: {}]
  %s2 = inlined_call_operand.vmem [shape: f32[2,1,64], index: 2, kind: input, shape index: {}]
  %s3 = inlined_call_operand.vmem [shape: bf16[2,192,64], index: 3, kind: input, shape index: {}]
  %s4 = inlined_call_operand.vmem [shape: f32[2,1,192], index: 4, kind: input, shape index: {}]
  %s5 = inlined_call_operand.vmem [shape: bf16[2,64,64], index: 5, kind: input, shape index: {}]
  %s6 = inlined_call_operand.vmem [shape: f32[2,1,64], index: 6, kind: input, shape index: {}]
  %s7 = inlined_call_operand.vmem [shape: f32[2,1,64], index: 7, kind: input, shape index: {}]
  %s8 = inlined_call_operand.vmem [shape: f32[2,1,64], index: 8, kind: input, shape index: {}]
  %s9 = inlined_call_operand.vmem [shape: bf16[2,256,64], index: 9, kind: input, shape index: {}]
  %s10 = inlined_call_operand.vmem [shape: f32[2,1,256], index: 10, kind: input, shape index: {}]
  %s11 = inlined_call_operand.vmem [shape: bf16[2,64,256], index: 11, kind: input, shape index: {}]
  %s12 = inlined_call_operand.vmem [shape: f32[2,1,64], index: 12, kind: input, shape index: {}]
  %s13 = inlined_call_operand.vmem [shape: f32[1,64], index: 13, kind: input, shape index: {}]
  %s14 = inlined_call_operand.vmem [shape: f32[1,64], index: 14, kind: input, shape index: {}]
  %s15 = inlined_call_operand.vmem [shape: bf16[128,64], index: 15, kind: input, shape index: {}]
  %s16 = inlined_call_operand.vmem [shape: f32[1,128], index: 16, kind: input, shape index: {}]
  %s17 = inlined_call_operand.hbm [shape: f32[16,128], index: 17, kind: output, shape index: {0}]
  %s18 = inlined_call_operand.hbm [shape: f32[16,64], index: 18, kind: output, shape index: {1}]
  %19 = xla_tuple %s17, %s18
  %s20 = sld [smem:[#allocation0]]
  $region86: #{tpu_custom_call.1} parent=0
    _
  %s22 = ssub.s32 1, %s20
  %s23 = scalar_select 0, %s22, %s20
  $region1: #{tpu_custom_call.1} parent=0
    #allocation3 [shape = 'u8[8192]{0}', space=vmem, size = 0x2000, scoped, tag = 'output window, operand 0, single buffered']
    #allocation4 [shape = 's32[1]{0}', space=sflag, size = 0x4, scoped, tag = 'scoped memory for tpu_custom_call.1']
    #allocation5 [shape = 'u8[8192]{0}', space=vmem, size = 0x2000, scoped, tag = 'output window, operand 1, single buffered']
    #allocation6 [shape = 's32[1]{0}', space=sflag, size = 0x4, scoped, tag = 'scoped memory for tpu_custom_call.1']
    %24 = vsyncpa [#allocation4], 0
    %25 = vsyncpa [#allocation6], 0
    // Predicated region
    $region2: #{tpu_custom_call.1} parent=1 // pred_check
      _
    $region3: #{tpu_custom_call.1} parent=1 // pred_check_branch
      %27 = sbr.rel (0) target = $region5
    $region4: #{tpu_custom_call.1} parent=1 // pred_region
      _
    $region5: #{tpu_custom_call.1} parent=1 // pred_fallthru
      _
    // Predicated region
    $region6: #{tpu_custom_call.1} parent=1 // pred_check
      _
    $region7: #{tpu_custom_call.1} parent=1 // pred_check_branch
      %29 = sbr.rel (0) target = $region9
    $region8: #{tpu_custom_call.1} parent=1 // pred_region
      _
    $region9: #{tpu_custom_call.1} parent=1 // pred_fallthru
      _
    // Predicated region
    $region10: #{tpu_custom_call.1} parent=1 // pred_check
      _
    $region11: #{tpu_custom_call.1} parent=1 // pred_check_branch
      %31 = sbr.rel (0) target = $region13
    $region12: #{tpu_custom_call.1} parent=1 // pred_region
      _
    $region13: #{tpu_custom_call.1} parent=1 // pred_fallthru
      _
    // Predicated region
    $region14: #{tpu_custom_call.1} parent=1 // pred_check
      _
    $region15: #{tpu_custom_call.1} parent=1 // pred_check_branch
      %33 = sbr.rel (0) target = $region17
    $region16: #{tpu_custom_call.1} parent=1 // pred_region
      _
    $region17: #{tpu_custom_call.1} parent=1 // pred_fallthru
      _
    // Predicated region
    $region18: #{tpu_custom_call.1} parent=1 // pred_check
      _
    $region19: #{tpu_custom_call.1} parent=1 // pred_check_branch
      %35 = sbr.rel (0) target = $region21
    $region20: #{tpu_custom_call.1} parent=1 // pred_region
      _
    $region21: #{tpu_custom_call.1} parent=1 // pred_fallthru
      _
    // Predicated region
    $region22: #{tpu_custom_call.1} parent=1 // pred_check
      _
    $region23: #{tpu_custom_call.1} parent=1 // pred_check_branch
      %37 = sbr.rel (0) target = $region25
    $region24: #{tpu_custom_call.1} parent=1 // pred_region
      _
    $region25: #{tpu_custom_call.1} parent=1 // pred_fallthru
      _
    // Predicated region
    $region26: #{tpu_custom_call.1} parent=1 // pred_check
      _
    $region27: #{tpu_custom_call.1} parent=1 // pred_check_branch
      %39 = sbr.rel (0) target = $region29
    $region28: #{tpu_custom_call.1} parent=1 // pred_region
      _
    $region29: #{tpu_custom_call.1} parent=1 // pred_fallthru
      _
    // Predicated region
    $region30: #{tpu_custom_call.1} parent=1 // pred_check
      _
    $region31: #{tpu_custom_call.1} parent=1 // pred_check_branch
      %41 = sbr.rel (0) target = $region33
    $region32: #{tpu_custom_call.1} parent=1 // pred_region
      _
    $region33: #{tpu_custom_call.1} parent=1 // pred_fallthru
      _
    // Predicated region
    $region34: #{tpu_custom_call.1} parent=1 // pred_check
      _
    $region35: #{tpu_custom_call.1} parent=1 // pred_check_branch
      %43 = sbr.rel (0) target = $region37
    $region36: #{tpu_custom_call.1} parent=1 // pred_region
      _
    $region37: #{tpu_custom_call.1} parent=1 // pred_fallthru
      _
    // Predicated region
    $region38: #{tpu_custom_call.1} parent=1 // pred_check
      _
    $region39: #{tpu_custom_call.1} parent=1 // pred_check_branch
      %45 = sbr.rel (0) target = $region41
    $region40: #{tpu_custom_call.1} parent=1 // pred_region
      _
    $region41: #{tpu_custom_call.1} parent=1 // pred_fallthru
      _
    // Predicated region
    $region42: #{tpu_custom_call.1} parent=1 // pred_check
      _
    $region43: #{tpu_custom_call.1} parent=1 // pred_check_branch
      %47 = sbr.rel (0) target = $region45
    $region44: #{tpu_custom_call.1} parent=1 // pred_region
      _
    $region45: #{tpu_custom_call.1} parent=1 // pred_fallthru
      _
    // Predicated region
    $region46: #{tpu_custom_call.1} parent=1 // pred_check
      _
    $region47: #{tpu_custom_call.1} parent=1 // pred_check_branch
      %49 = sbr.rel (0) target = $region49
    $region48: #{tpu_custom_call.1} parent=1 // pred_region
      _
    $region49: #{tpu_custom_call.1} parent=1 // pred_fallthru
      _
    // Predicated region
    $region50: #{tpu_custom_call.1} parent=1 // pred_check
      _
    $region51: #{tpu_custom_call.1} parent=1 // pred_check_branch
      %51 = sbr.rel (0) target = $region53
    $region52: #{tpu_custom_call.1} parent=1 // pred_region
      _
    $region53: #{tpu_custom_call.1} parent=1 // pred_fallthru
      _
    // Predicated region
    $region54: #{tpu_custom_call.1} parent=1 // pred_check
      _
    $region55: #{tpu_custom_call.1} parent=1 // pred_check_branch
      %53 = sbr.rel (0) target = $region57
    $region56: #{tpu_custom_call.1} parent=1 // pred_region
      _
    $region57: #{tpu_custom_call.1} parent=1 // pred_fallthru
      _
    // Predicated region
    $region58: #{tpu_custom_call.1} parent=1 // pred_check
      _
    $region59: #{tpu_custom_call.1} parent=1 // pred_check_branch
      %55 = sbr.rel (0) target = $region61
    $region60: #{tpu_custom_call.1} parent=1 // pred_region
      _
    $region61: #{tpu_custom_call.1} parent=1 // pred_fallthru
      _
    // Predicated region
    $region62: #{tpu_custom_call.1} parent=1 // pred_check
      _
    $region63: #{tpu_custom_call.1} parent=1 // pred_check_branch
      %57 = sbr.rel (0) target = $region65
    $region64: #{tpu_custom_call.1} parent=1 // pred_region
      _
    $region65: #{tpu_custom_call.1} parent=1 // pred_fallthru
      _
    // Predicated region
    $region66: #{tpu_custom_call.1} parent=1 // pred_check
      _
    $region67: #{tpu_custom_call.1} parent=1 // pred_check_branch
      %59 = sbr.rel (0) target = $region69
    $region68: #{tpu_custom_call.1} parent=1 // pred_region
      _
    $region69: #{tpu_custom_call.1} parent=1 // pred_fallthru
      _
    %v61 = vlaneseq
    %v62 = vshrl.u32 %v61, 7
    %v63 = vlaneseq
    %v64 = vand.u32 %v63, 127
    %v65 = vadd.s32 %v62, 1
    %v66 = vmul.u32 %v65, 8
    %vm67 = vcmp.lt.s32.totalorder %v64, %v66
    %v68 = vsel %vm67, 0.0, -1e+30
    %v69 = vmul.u32 %v62, 8
    %vm70 = vcmp.ge.s32.totalorder %v64, %v69
    %v71 = vadd.s32 %v69, 8
    %vm72 = vcmp.lt.s32.totalorder %v64, %v71
    %vm73 = vmand %vm70, %vm72
    %v74 = vsel %vm73, 1.0, 0.0
    %v75 = vpack.c.bf16 %v74, %v74
    %v76 = vld [vmem:[%s0] sm:$0xff]
    %v77 = vld [vmem:[%s0 + $0x8] sm:$0xff]
    %v78 = vld [vmem:[%s1] sm:$0x1]
    %v79 = vld [vmem:[%s2] sm:$0x1]
    %vm80 = vcmask 523264
    %v81 = vsel %vm80, %v76, 0.0
    %82 = vadd.xlane.f32.xlu0 %v81
    %v83 = vpop.xlane.xlu0 %82
    %v84 = vsel %vm80, %v77, 0.0
    %85 = vadd.xlane.f32.xlu0 %v84
    %v86 = vpop.xlane.xlu0 %85
    %v87 = vrcp.pop 64.0
    %v88 = vmul.f32 %v83, %v87
    %v89 = vmul.f32 %v86, %v87
    %v90 = vsub.f32 %v76, %v88
    %v91 = vsub.f32 %v77, %v89
    %v92 = vmul.f32 %v90, %v90
    %v93 = vmul.f32 %v91, %v91
    %v94 = vsel %vm80, %v92, 0.0
    %95 = vadd.xlane.f32.xlu0 %v94
    %v96 = vpop.xlane.xlu0 %95
    %v97 = vsel %vm80, %v93, 0.0
    %98 = vadd.xlane.f32.xlu0 %v97
    %v99 = vpop.xlane.xlu0 %98
    %v100 = vmul.f32 %v96, %v87
    %v101 = vmul.f32 %v99, %v87
    %v102 = vadd.f32 %v100, 1e-05
    %v103 = vadd.f32 %v101, 1e-05
    %v104 = vrsqrt.pop %v102
    %v105 = vrsqrt.pop %v103
    %v106 = vmul.f32 %v90, %v104
    %v107 = vmul.f32 %v91, %v105
    %v109 = vlaneseq
    %v110 = vshrl.u32 %v109, 7
    %v111 = vsub.s32 0, %v110
    %v112 = vrot.slane %v78, %v111
    %v114 = vmul.f32 %v106, %v112
    %v115 = vmul.f32 %v107, %v112
    %v117 = vlaneseq
    %v118 = vshrl.u32 %v117, 7
    %v119 = vsub.s32 0, %v118
    %v120 = vrot.slane %v79, %v119
    %v122 = vadd.f32 %v114, %v120
    %v123 = vadd.f32 %v115, %v120
    %v124 = vpack.c.bf16 %v123, %v122
    %v125 = vld [vmem:[%s3] sm:$0xf]
    %v126 = vld [vmem:[%s3 + $0x4] sm:$0xf]
    %v127 = vld [vmem:[%s3 + $0x8] sm:$0xf]
    %v128 = vld [vmem:[%s3 + $0xc] sm:$0xf]
    %v129 = vld [vmem:[%s3 + $0x10] sm:$0xf]
    %v130 = vld [vmem:[%s3 + $0x14] sm:$0xf]
    %v131 = vld [vmem:[%s3 + $0x18] sm:$0xf]
    %v132 = vld [vmem:[%s3 + $0x1c] sm:$0xf]
    %v133 = vld [vmem:[%s3 + $0x20] sm:$0xf]
    %v134 = vld [vmem:[%s3 + $0x24] sm:$0xf]
    %v135 = vld [vmem:[%s3 + $0x28] sm:$0xf]
    %v136 = vld [vmem:[%s3 + $0x2c] sm:$0xf]
    %v137 = vld [vmem:[%s3 + $0x30] sm:$0xf]
    %v138 = vld [vmem:[%s3 + $0x34] sm:$0xf]
    %v139 = vld [vmem:[%s3 + $0x38] sm:$0xf]
    %v140 = vld [vmem:[%s3 + $0x3c] sm:$0xf]
    %v141 = vld [vmem:[%s3 + $0x40] sm:$0xf]
    %v142 = vld [vmem:[%s3 + $0x44] sm:$0xf]
    %v143 = vld [vmem:[%s3 + $0x48] sm:$0xf]
    %v144 = vld [vmem:[%s3 + $0x4c] sm:$0xf]
    %v145 = vld [vmem:[%s3 + $0x50] sm:$0xf]
    %v146 = vld [vmem:[%s3 + $0x54] sm:$0xf]
    %v147 = vld [vmem:[%s3 + $0x58] sm:$0xf]
    %v148 = vld [vmem:[%s3 + $0x5c] sm:$0xf]
    %v149 = vld [vmem:[%s4] sm:$0x3]
    %v151 = vlaneseq
    %v152 = vshrl.u32 %v151, 7
    %v153 = vsub.s32 0, %v152
    %v154 = vrot.slane %v149, %v153
    %v155 = vlaneseq
    %v156 = vshrl.u32 %v155, 7
    %v157 = vsub.s32 1, %v156
    %v158 = vrot.slane %v149, %v157
    %v185 = vunpack.c.l.b16 %v125
    %v186 = vunpack.c.l.b16 %v126
    %v187 = vunpack.c.l.b16 %v127
    %v188 = vunpack.c.l.b16 %v128
    %v189 = vunpack.c.l.b16 %v129
    %v190 = vunpack.c.l.b16 %v130
    %v191 = vunpack.c.l.b16 %v131
    %v192 = vunpack.c.l.b16 %v132
    %v193 = vunpack.c.l.b16 %v133
    %v194 = vunpack.c.l.b16 %v134
    %v195 = vunpack.c.l.b16 %v135
    %v196 = vunpack.c.l.b16 %v136
    %v197 = vunpack.c.l.b16 %v137
    %v198 = vunpack.c.l.b16 %v138
    %v199 = vunpack.c.l.b16 %v139
    %v200 = vunpack.c.l.b16 %v140
    %v201 = vunpack.c.l.b16 %v141
    %v202 = vunpack.c.l.b16 %v142
    %v203 = vunpack.c.l.b16 %v143
    %v204 = vunpack.c.l.b16 %v144
    %v205 = vunpack.c.l.b16 %v145
    %v206 = vunpack.c.l.b16 %v146
    %v207 = vunpack.c.l.b16 %v147
    %v208 = vunpack.c.l.b16 %v148
    %v209 = vpack.c.b16 %v186, %v185
    %v210 = vpack.c.b16 %v188, %v187
    %v211 = vpack.c.b16 %v190, %v189
    %v212 = vpack.c.b16 %v192, %v191
    %v213 = vpack.c.b16 %v194, %v193
    %v214 = vpack.c.b16 %v196, %v195
    %v215 = vpack.c.b16 %v198, %v197
    %v216 = vpack.c.b16 %v200, %v199
    %v217 = vpack.c.b16 %v202, %v201
    %v218 = vpack.c.b16 %v204, %v203
    %v219 = vpack.c.b16 %v206, %v205
    %v220 = vpack.c.b16 %v208, %v207
    %v222 = vsel %vm80, %v124, 0
    %v225 = vsel %vm80, %v209, 0
    %v228 = vsel %vm80, %v210, 0
    %v231 = vsel %vm80, %v211, 0
    %v234 = vsel %vm80, %v212, 0
    %v237 = vsel %vm80, %v213, 0
    %v240 = vsel %vm80, %v214, 0
    %v243 = vsel %vm80, %v215, 0
    %v246 = vsel %vm80, %v216, 0
    %v249 = vsel %vm80, %v217, 0
    %v252 = vsel %vm80, %v218, 0
    %v255 = vsel %vm80, %v219, 0
    %v258 = vsel %vm80, %v220, 0
    %260 = vmatprep.subr.bf16.mxu0 0
    %261 = vmatpush1.bf16.xpose.msra.mxu0 %v225
    %262 = vmatprep.subr.bf16.mxu0 0
    %263 = vmatpush1.bf16.xpose.msra.mxu0 %v228
    %264 = vmatprep.subr.bf16.mxu0 0
    %265 = vmatpush1.bf16.xpose.msra.mxu0 %v231
    %266 = vmatprep.subr.bf16.mxu0 0
    %267 = vmatpush1.bf16.xpose.msra.mxu0 %v234
    %268 = vmatprep.subr.bf16.mxu0 0
    %269 = vmatpush1.bf16.xpose.msra.mxu0 %v237
    %270 = vmatprep.subr.bf16.mxu0 0
    %271 = vmatpush1.bf16.xpose.msra.mxu0 %v240
    %272 = vmatprep.subr.bf16.mxu0 0
    %273 = vmatpush1.bf16.xpose.msra.mxu0 %v243
    %274 = vmatprep.subr.bf16.mxu0 0
    %275 = vmatpush1.bf16.xpose.msra.mxu0 %v246
    %276 = vmatprep.subr.bf16.mxu0 0
    %277 = vmatpush1.bf16.xpose.msra.mxu0 %v249
    %278 = vmatprep.subr.bf16.mxu0 0
    %279 = vmatpush1.bf16.xpose.msra.mxu0 %v252
    %280 = vmatprep.subr.bf16.mxu0 0
    %281 = vmatpush1.bf16.xpose.msra.mxu0 %v255
    %282 = vmatprep.subr.bf16.mxu0 0
    %283 = vmatpush1.bf16.xpose.msra.mxu0 %v258
    %284 = vmatprep.subr.bf16.mxu0 0
    %285 = vmatpush1.bf16.xpose.msra.mxu0 0
    %286 = vmatprep.subr.bf16.mxu0 0
    %287 = vmatpush1.bf16.xpose.msra.mxu0 0
    %288 = vmatprep.subr.bf16.mxu0 0
    %289 = vmatpush1.bf16.xpose.msra.mxu0 0
    %290 = vmatprep.subr.bf16.mxu0 0
    %291 = vmatpush1.bf16.xpose.msra.mxu0 0
    %292 = vmatprep.mubr.bf16.mxu0 0
    %293 = vmatmul.mubr.bf16.gmra.mrb[0].mxu0 %v222
    %v294 = vpop.f32.mrb[0].mxu0
    %v295 = vadd.f32 %v154, %v294
    %v296 = vpop.f32.mrb[0].mxu0
    %v297 = vadd.f32 %v158, %v296
    %v298 = vpop.f32.mrb[0].mxu0
    %v299 = vadd.f32 %v154, %v298
    %v300 = vpop.f32.mrb[0].mxu0
    %v301 = vadd.f32 %v158, %v300
    %302 = vdwg.mxu0
    %v303 = vmul.f32 %v295, 0.35355338
    %v304 = vmul.f32 %v299, 0.35355338
    %v305 = vpack.c.bf16 %v303, %v303
    %v307 = vcombine.high %v295, %v295
    %v309 = vunpack.c.l.s4 1966171168
    %v310 = vunpack.c.0.s8 %v309
    %v311 = vlaneseq
    %v312 = vshrl.u32 %v311, 7
    %v313 = vsub.s32 %v310, %v312
    %v314 = vrot.slane %v295, %v313
    %v316 = vunpack.c.l.s4 1966171168
    %v317 = vunpack.c.0.s8 %v316
    %v318 = vlaneseq
    %v319 = vshrl.u32 %v318, 7
    %v320 = vsub.s32 %v317, %v319
    %v321 = vrot.slane %v307, %v320
    %v322 = vcombine.high %v314, %v314
    %v323 = vcombine.high %v321, %v321
    %v325 = vunpack.c.l.s4 1966171168
    %v326 = vunpack.c.0.s8 %v325
    %v327 = vlaneseq
    %v328 = vshrl.u32 %v327, 7
    %v329 = vsub.s32 %v326, %v328
    %v330 = vrot.slane %v314, %v329
    %v332 = vunpack.c.l.s4 1966171168
    %v333 = vunpack.c.0.s8 %v332
    %v334 = vlaneseq
    %v335 = vshrl.u32 %v334, 7
    %v336 = vsub.s32 %v333, %v335
    %v337 = vrot.slane %v321, %v336
    %v339 = vunpack.c.l.s4 1966171168
    %v340 = vunpack.c.0.s8 %v339
    %v341 = vlaneseq
    %v342 = vshrl.u32 %v341, 7
    %v343 = vsub.s32 %v340, %v342
    %v344 = vrot.slane %v322, %v343
    %v346 = vunpack.c.l.s4 1966171168
    %v347 = vunpack.c.0.s8 %v346
    %v348 = vlaneseq
    %v349 = vshrl.u32 %v348, 7
    %v350 = vsub.s32 %v347, %v349
    %v351 = vrot.slane %v323, %v350
    %v352 = vcombine.high %v330, %v330
    %v353 = vcombine.high %v337, %v337
    %v354 = vcombine.high %v344, %v344
    %v355 = vcombine.high %v351, %v351
    %v356 = vlaneseq
    %v357 = vshrl.u32 %v356, 7
    %v358 = vsub.s32 0, %v357
    %v359 = vrot.slane %v330, %v358
    %v360 = vlaneseq
    %v361 = vshrl.u32 %v360, 7
    %v362 = vsub.s32 0, %v361
    %v363 = vrot.slane %v344, %v362
    %v364 = vlaneseq
    %v365 = vshrl.u32 %v364, 7
    %v366 = vsub.s32 0, %v365
    %v367 = vrot.slane %v352, %v366
    %v368 = vlaneseq
    %v369 = vshrl.u32 %v368, 7
    %v370 = vsub.s32 0, %v369
    %v371 = vrot.slane %v354, %v370
    %v372 = vlaneseq
    %v373 = vshrl.u32 %v372, 7
    %v374 = vsub.s32 0, %v373
    %v375 = vrot.slane %v337, %v374
    %v376 = vlaneseq
    %v377 = vshrl.u32 %v376, 7
    %v378 = vsub.s32 0, %v377
    %v379 = vrot.slane %v351, %v378
    %v380 = vlaneseq
    %v381 = vshrl.u32 %v380, 7
    %v382 = vsub.s32 0, %v381
    %v383 = vrot.slane %v353, %v382
    %v384 = vlaneseq
    %v385 = vshrl.u32 %v384, 7
    %v386 = vsub.s32 0, %v385
    %v387 = vrot.slane %v355, %v386
    %v396 = vpack.c.bf16 %v363, %v359
    %v397 = vpack.c.bf16 %v371, %v367
    %v398 = vpack.c.bf16 %v379, %v375
    %v399 = vpack.c.bf16 %v387, %v383
    %401 = vrot.lane.b32.xlu0 %v75, 64
    %v402 = vpop.permute.xlu0 %401
    %v404 = vmul.bf16 %v396, %v402
    %v405 = vmul.bf16 %v397, %v402
    %v406 = vmul.bf16 %v398, %v402
    %v407 = vmul.bf16 %v399, %v402
    %v409 = vcombine.high %v297, %v297
    %v411 = vunpack.c.l.s4 1966171168
    %v412 = vunpack.c.0.s8 %v411
    %v413 = vlaneseq
    %v414 = vshrl.u32 %v413, 7
    %v415 = vsub.s32 %v412, %v414
    %v416 = vrot.slane %v297, %v415
    %v418 = vunpack.c.l.s4 1966171168
    %v419 = vunpack.c.0.s8 %v418
    %v420 = vlaneseq
    %v421 = vshrl.u32 %v420, 7
    %v422 = vsub.s32 %v419, %v421
    %v423 = vrot.slane %v409, %v422
    %v424 = vcombine.high %v416, %v416
    %v425 = vcombine.high %v423, %v423
    %v427 = vunpack.c.l.s4 1966171168
    %v428 = vunpack.c.0.s8 %v427
    %v429 = vlaneseq
    %v430 = vshrl.u32 %v429, 7
    %v431 = vsub.s32 %v428, %v430
    %v432 = vrot.slane %v416, %v431
    %v434 = vunpack.c.l.s4 1966171168
    %v435 = vunpack.c.0.s8 %v434
    %v436 = vlaneseq
    %v437 = vshrl.u32 %v436, 7
    %v438 = vsub.s32 %v435, %v437
    %v439 = vrot.slane %v423, %v438
    %v441 = vunpack.c.l.s4 1966171168
    %v442 = vunpack.c.0.s8 %v441
    %v443 = vlaneseq
    %v444 = vshrl.u32 %v443, 7
    %v445 = vsub.s32 %v442, %v444
    %v446 = vrot.slane %v424, %v445
    %v448 = vunpack.c.l.s4 1966171168
    %v449 = vunpack.c.0.s8 %v448
    %v450 = vlaneseq
    %v451 = vshrl.u32 %v450, 7
    %v452 = vsub.s32 %v449, %v451
    %v453 = vrot.slane %v425, %v452
    %v454 = vcombine.high %v432, %v432
    %v455 = vcombine.high %v439, %v439
    %v456 = vcombine.high %v446, %v446
    %v457 = vcombine.high %v453, %v453
    %v458 = vlaneseq
    %v459 = vshrl.u32 %v458, 7
    %v460 = vsub.s32 0, %v459
    %v461 = vrot.slane %v432, %v460
    %v462 = vlaneseq
    %v463 = vshrl.u32 %v462, 7
    %v464 = vsub.s32 0, %v463
    %v465 = vrot.slane %v446, %v464
    %v466 = vlaneseq
    %v467 = vshrl.u32 %v466, 7
    %v468 = vsub.s32 0, %v467
    %v469 = vrot.slane %v454, %v468
    %v470 = vlaneseq
    %v471 = vshrl.u32 %v470, 7
    %v472 = vsub.s32 0, %v471
    %v473 = vrot.slane %v456, %v472
    %v474 = vlaneseq
    %v475 = vshrl.u32 %v474, 7
    %v476 = vsub.s32 0, %v475
    %v477 = vrot.slane %v439, %v476
    %v478 = vlaneseq
    %v479 = vshrl.u32 %v478, 7
    %v480 = vsub.s32 0, %v479
    %v481 = vrot.slane %v453, %v480
    %v482 = vlaneseq
    %v483 = vshrl.u32 %v482, 7
    %v484 = vsub.s32 0, %v483
    %v485 = vrot.slane %v455, %v484
    %v486 = vlaneseq
    %v487 = vshrl.u32 %v486, 7
    %v488 = vsub.s32 0, %v487
    %v489 = vrot.slane %v457, %v488
    %v498 = vpack.c.bf16 %v465, %v461
    %v499 = vpack.c.bf16 %v473, %v469
    %v500 = vpack.c.bf16 %v481, %v477
    %v501 = vpack.c.bf16 %v489, %v485
    %v502 = vmul.bf16 %v498, %v75
    %v503 = vmul.bf16 %v499, %v75
    %v504 = vmul.bf16 %v500, %v75
    %v505 = vmul.bf16 %v501, %v75
    %510 = vrot.lane.b32.xlu0 %v404, 64
    %v511 = vpop.permute.xlu0 %510
    %512 = vrot.lane.b32.xlu0 %v405, 64
    %v513 = vpop.permute.xlu0 %512
    %514 = vrot.lane.b32.xlu0 %v406, 64
    %v515 = vpop.permute.xlu0 %514
    %516 = vrot.lane.b32.xlu0 %v407, 64
    %v517 = vpop.permute.xlu0 %516
    %v519 = vsel %vm80, %v305, 0
    %v522 = vsel %vm80, %v511, 0
    %v525 = vsel %vm80, %v513, 0
    %v528 = vsel %vm80, %v515, 0
    %v531 = vsel %vm80, %v517, 0
    %533 = vmatprep.subr.bf16.mxu0 0
    %534 = vmatpush1.bf16.xpose.msra.mxu0 %v522
    %535 = vmatprep.subr.bf16.mxu0 0
    %536 = vmatpush1.bf16.xpose.msra.mxu0 %v525
    %537 = vmatprep.subr.bf16.mxu0 0
    %538 = vmatpush1.bf16.xpose.msra.mxu0 %v528
    %539 = vmatprep.subr.bf16.mxu0 0
    %540 = vmatpush1.bf16.xpose.msra.mxu0 %v531
    %541 = vmatprep.subr.bf16.mxu0 0
    %542 = vmatpush1.bf16.xpose.msra.mxu0 0
    %543 = vmatprep.subr.bf16.mxu0 0
    %544 = vmatpush1.bf16.xpose.msra.mxu0 0
    %545 = vmatprep.subr.bf16.mxu0 0
    %546 = vmatpush1.bf16.xpose.msra.mxu0 0
    %547 = vmatprep.subr.bf16.mxu0 0
    %548 = vmatpush1.bf16.xpose.msra.mxu0 0
    %549 = vmatprep.subr.bf16.mxu0 0
    %550 = vmatpush1.bf16.xpose.msra.mxu0 0
    %551 = vmatprep.subr.bf16.mxu0 0
    %552 = vmatpush1.bf16.xpose.msra.mxu0 0
    %553 = vmatprep.subr.bf16.mxu0 0
    %554 = vmatpush1.bf16.xpose.msra.mxu0 0
    %555 = vmatprep.subr.bf16.mxu0 0
    %556 = vmatpush1.bf16.xpose.msra.mxu0 0
    %557 = vmatprep.subr.bf16.mxu0 0
    %558 = vmatpush1.bf16.xpose.msra.mxu0 0
    %559 = vmatprep.subr.bf16.mxu0 0
    %560 = vmatpush1.bf16.xpose.msra.mxu0 0
    %561 = vmatprep.subr.bf16.mxu0 0
    %562 = vmatpush1.bf16.xpose.msra.mxu0 0
    %563 = vmatprep.subr.bf16.mxu0 0
    %564 = vmatpush1.bf16.xpose.msra.mxu0 0
    %565 = vmatprep.mubr.bf16.mxu0 0
    %566 = vmatmul.mubr.bf16.gmra.mrb[0].mxu0 %v519
    %v567 = vpop.f32.mrb[0].mxu0
    %v568 = vadd.f32 %v68, %v567
    %v569 = vpop.f32.mrb[0].mxu0
    %v570 = vpop.f32.mrb[0].mxu0
    %v571 = vpop.f32.mrb[0].mxu0
    %572 = vdwg.mxu0
    %v573 = vsel %vm80, %v568, -inf
    %574 = vmax.xlane.f32.xlu0 %v573
    %v575 = vpop.xlane.xlu0 %574
    %v576 = vsub.f32 %v568, %v575
    %v577 = vmul.f32 %v576, 1.442695
    %v578 = vpow.pop %v577
    %v579 = vpack.c.bf16 %v578, %v578
    %v581 = vsel %vm80, %v579, 0
    %583 = vmatprep.subr.bf16.mxu0 0
    %584 = vmatpush1.bf16.msra.mxu0 %v502
    %585 = vmatprep.subr.bf16.mxu0 0
    %586 = vmatpush1.bf16.msra.mxu0 %v503
    %587 = vmatprep.subr.bf16.mxu0 0
    %588 = vmatpush1.bf16.msra.mxu0 %v504
    %589 = vmatprep.subr.bf16.mxu0 0
    %590 = vmatpush1.bf16.msra.mxu0 %v505
    %591 = vmatprep.subr.bf16.mxu0 0
    %592 = vmatpush1.bf16.msra.mxu0 0
    %593 = vmatprep.subr.bf16.mxu0 0
    %594 = vmatpush1.bf16.msra.mxu0 0
    %595 = vmatprep.subr.bf16.mxu0 0
    %596 = vmatpush1.bf16.msra.mxu0 0
    %597 = vmatprep.subr.bf16.mxu0 0
    %598 = vmatpush1.bf16.msra.mxu0 0
    %599 = vmatprep.subr.bf16.mxu0 0
    %600 = vmatpush1.bf16.msra.mxu0 0
    %601 = vmatprep.subr.bf16.mxu0 0
    %602 = vmatpush1.bf16.msra.mxu0 0
    %603 = vmatprep.subr.bf16.mxu0 0
    %604 = vmatpush1.bf16.msra.mxu0 0
    %605 = vmatprep.subr.bf16.mxu0 0
    %606 = vmatpush1.bf16.msra.mxu0 0
    %607 = vmatprep.subr.bf16.mxu0 0
    %608 = vmatpush1.bf16.msra.mxu0 0
    %609 = vmatprep.subr.bf16.mxu0 0
    %610 = vmatpush1.bf16.msra.mxu0 0
    %611 = vmatprep.subr.bf16.mxu0 0
    %612 = vmatpush1.bf16.msra.mxu0 0
    %613 = vmatprep.subr.bf16.mxu0 0
    %614 = vmatpush1.bf16.msra.mxu0 0
    %615 = vmatprep.mubr.bf16.mxu0 0
    %616 = vmatmul.mubr.bf16.gmra.mrb[0].mxu0 %v581
    %v617 = vpop.f32.mrb[0].mxu0
    %v618 = vadd.f32 0.0, %v617
    %v619 = vpop.f32.mrb[0].mxu0
    %v620 = vpop.f32.mrb[0].mxu0
    %v621 = vpop.f32.mrb[0].mxu0
    %622 = vdwg.mxu0
    %623 = vmatprep.subr.bf16.mxu0 0
    %624 = vmatpush1.bf16.msra.mxu0 %v75
    %625 = vmatprep.subr.bf16.mxu0 0
    %626 = vmatpush1.bf16.msra.mxu0 %v75
    %627 = vmatprep.subr.bf16.mxu0 0
    %628 = vmatpush1.bf16.msra.mxu0 %v75
    %629 = vmatprep.subr.bf16.mxu0 0
    %630 = vmatpush1.bf16.msra.mxu0 %v75
    %631 = vmatprep.subr.bf16.mxu0 0
    %632 = vmatpush1.bf16.msra.mxu0 0
    %633 = vmatprep.subr.bf16.mxu0 0
    %634 = vmatpush1.bf16.msra.mxu0 0
    %635 = vmatprep.subr.bf16.mxu0 0
    %636 = vmatpush1.bf16.msra.mxu0 0
    %637 = vmatprep.subr.bf16.mxu0 0
    %638 = vmatpush1.bf16.msra.mxu0 0
    %639 = vmatprep.subr.bf16.mxu0 0
    %640 = vmatpush1.bf16.msra.mxu0 0
    %641 = vmatprep.subr.bf16.mxu0 0
    %642 = vmatpush1.bf16.msra.mxu0 0
    %643 = vmatprep.subr.bf16.mxu0 0
    %644 = vmatpush1.bf16.msra.mxu0 0
    %645 = vmatprep.subr.bf16.mxu0 0
    %646 = vmatpush1.bf16.msra.mxu0 0
    %647 = vmatprep.subr.bf16.mxu0 0
    %648 = vmatpush1.bf16.msra.mxu0 0
    %649 = vmatprep.subr.bf16.mxu0 0
    %650 = vmatpush1.bf16.msra.mxu0 0
    %651 = vmatprep.subr.bf16.mxu0 0
    %652 = vmatpush1.bf16.msra.mxu0 0
    %653 = vmatprep.subr.bf16.mxu0 0
    %654 = vmatpush1.bf16.msra.mxu0 0
    %655 = vmatprep.mubr.bf16.mxu0 0
    %656 = vmatmul.mubr.bf16.gmra.mrb[0].mxu0 %v581
    %v657 = vpop.f32.mrb[0].mxu0
    %v658 = vadd.f32 0.0, %v657
    %v659 = vpop.f32.mrb[0].mxu0
    %v660 = vpop.f32.mrb[0].mxu0
    %v661 = vpop.f32.mrb[0].mxu0
    %662 = vdwg.mxu0
    %v663 = vrcp.pop %v658
    %v664 = vmul.f32 %v618, %v663
    %665 = vst.msk [vmem:[#allocation2] sm:$0xff] %vm80, %v664
    %v666 = vpack.c.bf16 %v304, %v304
    %v668 = vcombine.high %v299, %v299
    %v670 = vunpack.c.l.s4 1966171168
    %v671 = vunpack.c.0.s8 %v670
    %v672 = vlaneseq
    %v673 = vshrl.u32 %v672, 7
    %v674 = vsub.s32 %v671, %v673
    %v675 = vrot.slane %v299, %v674
    %v677 = vunpack.c.l.s4 1966171168
    %v678 = vunpack.c.0.s8 %v677
    %v679 = vlaneseq
    %v680 = vshrl.u32 %v679, 7
    %v681 = vsub.s32 %v678, %v680
    %v682 = vrot.slane %v668, %v681
    %v683 = vcombine.high %v675, %v675
    %v684 = vcombine.high %v682, %v682
    %v686 = vunpack.c.l.s4 1966171168
    %v687 = vunpack.c.0.s8 %v686
    %v688 = vlaneseq
    %v689 = vshrl.u32 %v688, 7
    %v690 = vsub.s32 %v687, %v689
    %v691 = vrot.slane %v675, %v690
    %v693 = vunpack.c.l.s4 1966171168
    %v694 = vunpack.c.0.s8 %v693
    %v695 = vlaneseq
    %v696 = vshrl.u32 %v695, 7
    %v697 = vsub.s32 %v694, %v696
    %v698 = vrot.slane %v682, %v697
    %v700 = vunpack.c.l.s4 1966171168
    %v701 = vunpack.c.0.s8 %v700
    %v702 = vlaneseq
    %v703 = vshrl.u32 %v702, 7
    %v704 = vsub.s32 %v701, %v703
    %v705 = vrot.slane %v683, %v704
    %v707 = vunpack.c.l.s4 1966171168
    %v708 = vunpack.c.0.s8 %v707
    %v709 = vlaneseq
    %v710 = vshrl.u32 %v709, 7
    %v711 = vsub.s32 %v708, %v710
    %v712 = vrot.slane %v684, %v711
    %v713 = vcombine.high %v691, %v691
    %v714 = vcombine.high %v698, %v698
    %v715 = vcombine.high %v705, %v705
    %v716 = vcombine.high %v712, %v712
    %v717 = vlaneseq
    %v718 = vshrl.u32 %v717, 7
    %v719 = vsub.s32 0, %v718
    %v720 = vrot.slane %v691, %v719
    %v721 = vlaneseq
    %v722 = vshrl.u32 %v721, 7
    %v723 = vsub.s32 0, %v722
    %v724 = vrot.slane %v705, %v723
    %v725 = vlaneseq
    %v726 = vshrl.u32 %v725, 7
    %v727 = vsub.s32 0, %v726
    %v728 = vrot.slane %v713, %v727
    %v729 = vlaneseq
    %v730 = vshrl.u32 %v729, 7
    %v731 = vsub.s32 0, %v730
    %v732 = vrot.slane %v715, %v731
    %v733 = vlaneseq
    %v734 = vshrl.u32 %v733, 7
    %v735 = vsub.s32 0, %v734
    %v736 = vrot.slane %v698, %v735
    %v737 = vlaneseq
    %v738 = vshrl.u32 %v737, 7
    %v739 = vsub.s32 0, %v738
    %v740 = vrot.slane %v712, %v739
    %v741 = vlaneseq
    %v742 = vshrl.u32 %v741, 7
    %v743 = vsub.s32 0, %v742
    %v744 = vrot.slane %v714, %v743
    %v745 = vlaneseq
    %v746 = vshrl.u32 %v745, 7
    %v747 = vsub.s32 0, %v746
    %v748 = vrot.slane %v716, %v747
    %v757 = vpack.c.bf16 %v724, %v720
    %v758 = vpack.c.bf16 %v732, %v728
    %v759 = vpack.c.bf16 %v740, %v736
    %v760 = vpack.c.bf16 %v748, %v744
    %v761 = vmul.bf16 %v757, %v402
    %v762 = vmul.bf16 %v758, %v402
    %v763 = vmul.bf16 %v759, %v402
    %v764 = vmul.bf16 %v760, %v402
    %v766 = vcombine.high %v301, %v301
    %v768 = vunpack.c.l.s4 1966171168
    %v769 = vunpack.c.0.s8 %v768
    %v770 = vlaneseq
    %v771 = vshrl.u32 %v770, 7
    %v772 = vsub.s32 %v769, %v771
    %v773 = vrot.slane %v301, %v772
    %v775 = vunpack.c.l.s4 1966171168
    %v776 = vunpack.c.0.s8 %v775
    %v777 = vlaneseq
    %v778 = vshrl.u32 %v777, 7
    %v779 = vsub.s32 %v776, %v778
    %v780 = vrot.slane %v766, %v779
    %v781 = vcombine.high %v773, %v773
    %v782 = vcombine.high %v780, %v780
    %v784 = vunpack.c.l.s4 1966171168
    %v785 = vunpack.c.0.s8 %v784
    %v786 = vlaneseq
    %v787 = vshrl.u32 %v786, 7
    %v788 = vsub.s32 %v785, %v787
    %v789 = vrot.slane %v773, %v788
    %v791 = vunpack.c.l.s4 1966171168
    %v792 = vunpack.c.0.s8 %v791
    %v793 = vlaneseq
    %v794 = vshrl.u32 %v793, 7
    %v795 = vsub.s32 %v792, %v794
    %v796 = vrot.slane %v780, %v795
    %v798 = vunpack.c.l.s4 1966171168
    %v799 = vunpack.c.0.s8 %v798
    %v800 = vlaneseq
    %v801 = vshrl.u32 %v800, 7
    %v802 = vsub.s32 %v799, %v801
    %v803 = vrot.slane %v781, %v802
    %v805 = vunpack.c.l.s4 1966171168
    %v806 = vunpack.c.0.s8 %v805
    %v807 = vlaneseq
    %v808 = vshrl.u32 %v807, 7
    %v809 = vsub.s32 %v806, %v808
    %v810 = vrot.slane %v782, %v809
    %v811 = vcombine.high %v789, %v789
    %v812 = vcombine.high %v796, %v796
    %v813 = vcombine.high %v803, %v803
    %v814 = vcombine.high %v810, %v810
    %v815 = vlaneseq
    %v816 = vshrl.u32 %v815, 7
    %v817 = vsub.s32 0, %v816
    %v818 = vrot.slane %v789, %v817
    %v819 = vlaneseq
    %v820 = vshrl.u32 %v819, 7
    %v821 = vsub.s32 0, %v820
    %v822 = vrot.slane %v803, %v821
    %v823 = vlaneseq
    %v824 = vshrl.u32 %v823, 7
    %v825 = vsub.s32 0, %v824
    %v826 = vrot.slane %v811, %v825
    %v827 = vlaneseq
    %v828 = vshrl.u32 %v827, 7
    %v829 = vsub.s32 0, %v828
    %v830 = vrot.slane %v813, %v829
    %v831 = vlaneseq
    %v832 = vshrl.u32 %v831, 7
    %v833 = vsub.s32 0, %v832
    %v834 = vrot.slane %v796, %v833
    %v835 = vlaneseq
    %v836 = vshrl.u32 %v835, 7
    %v837 = vsub.s32 0, %v836
    %v838 = vrot.slane %v810, %v837
    %v839 = vlaneseq
    %v840 = vshrl.u32 %v839, 7
    %v841 = vsub.s32 0, %v840
    %v842 = vrot.slane %v812, %v841
    %v843 = vlaneseq
    %v844 = vshrl.u32 %v843, 7
    %v845 = vsub.s32 0, %v844
    %v846 = vrot.slane %v814, %v845
    %v855 = vpack.c.bf16 %v822, %v818
    %v856 = vpack.c.bf16 %v830, %v826
    %v857 = vpack.c.bf16 %v838, %v834
    %v858 = vpack.c.bf16 %v846, %v842
    %v859 = vmul.bf16 %v855, %v75
    %v860 = vmul.bf16 %v856, %v75
    %v861 = vmul.bf16 %v857, %v75
    %v862 = vmul.bf16 %v858, %v75
    %867 = vrot.lane.b32.xlu0 %v761, 64
    %v868 = vpop.permute.xlu0 %867
    %869 = vrot.lane.b32.xlu0 %v762, 64
    %v870 = vpop.permute.xlu0 %869
    %871 = vrot.lane.b32.xlu0 %v763, 64
    %v872 = vpop.permute.xlu0 %871
    %873 = vrot.lane.b32.xlu0 %v764, 64
    %v874 = vpop.permute.xlu0 %873
    %v876 = vsel %vm80, %v666, 0
    %v879 = vsel %vm80, %v868, 0
    %v882 = vsel %vm80, %v870, 0
    %v885 = vsel %vm80, %v872, 0
    %v888 = vsel %vm80, %v874, 0
    %890 = vmatprep.subr.bf16.mxu0 0
    %891 = vmatpush1.bf16.xpose.msra.mxu0 %v879
    %892 = vmatprep.subr.bf16.mxu0 0
    %893 = vmatpush1.bf16.xpose.msra.mxu0 %v882
    %894 = vmatprep.subr.bf16.mxu0 0
    %895 = vmatpush1.bf16.xpose.msra.mxu0 %v885
    %896 = vmatprep.subr.bf16.mxu0 0
    %897 = vmatpush1.bf16.xpose.msra.mxu0 %v888
    %898 = vmatprep.subr.bf16.mxu0 0
    %899 = vmatpush1.bf16.xpose.msra.mxu0 0
    %900 = vmatprep.subr.bf16.mxu0 0
    %901 = vmatpush1.bf16.xpose.msra.mxu0 0
    %902 = vmatprep.subr.bf16.mxu0 0
    %903 = vmatpush1.bf16.xpose.msra.mxu0 0
    %904 = vmatprep.subr.bf16.mxu0 0
    %905 = vmatpush1.bf16.xpose.msra.mxu0 0
    %906 = vmatprep.subr.bf16.mxu0 0
    %907 = vmatpush1.bf16.xpose.msra.mxu0 0
    %908 = vmatprep.subr.bf16.mxu0 0
    %909 = vmatpush1.bf16.xpose.msra.mxu0 0
    %910 = vmatprep.subr.bf16.mxu0 0
    %911 = vmatpush1.bf16.xpose.msra.mxu0 0
    %912 = vmatprep.subr.bf16.mxu0 0
    %913 = vmatpush1.bf16.xpose.msra.mxu0 0
    %914 = vmatprep.subr.bf16.mxu0 0
    %915 = vmatpush1.bf16.xpose.msra.mxu0 0
    %916 = vmatprep.subr.bf16.mxu0 0
    %917 = vmatpush1.bf16.xpose.msra.mxu0 0
    %918 = vmatprep.subr.bf16.mxu0 0
    %919 = vmatpush1.bf16.xpose.msra.mxu0 0
    %920 = vmatprep.subr.bf16.mxu0 0
    %921 = vmatpush1.bf16.xpose.msra.mxu0 0
    %922 = vmatprep.mubr.bf16.mxu0 0
    %923 = vmatmul.mubr.bf16.gmra.mrb[0].mxu0 %v876
    %v924 = vpop.f32.mrb[0].mxu0
    %v925 = vadd.f32 %v68, %v924
    %v926 = vpop.f32.mrb[0].mxu0
    %v927 = vpop.f32.mrb[0].mxu0
    %v928 = vpop.f32.mrb[0].mxu0
    %929 = vdwg.mxu0
    %v930 = vsel %vm80, %v925, -inf
    %931 = vmax.xlane.f32.xlu0 %v930
    %v932 = vpop.xlane.xlu0 %931
    %v933 = vsub.f32 %v925, %v932
    %v934 = vmul.f32 %v933, 1.442695
    %v935 = vpow.pop %v934
    %v936 = vpack.c.bf16 %v935, %v935
    %v938 = vsel %vm80, %v936, 0
    %940 = vmatprep.subr.bf16.mxu0 0
    %941 = vmatpush1.bf16.msra.mxu0 %v859
    %942 = vmatprep.subr.bf16.mxu0 0
    %943 = vmatpush1.bf16.msra.mxu0 %v860
    %944 = vmatprep.subr.bf16.mxu0 0
    %945 = vmatpush1.bf16.msra.mxu0 %v861
    %946 = vmatprep.subr.bf16.mxu0 0
    %947 = vmatpush1.bf16.msra.mxu0 %v862
    %948 = vmatprep.subr.bf16.mxu0 0
    %949 = vmatpush1.bf16.msra.mxu0 0
    %950 = vmatprep.subr.bf16.mxu0 0
    %951 = vmatpush1.bf16.msra.mxu0 0
    %952 = vmatprep.subr.bf16.mxu0 0
    %953 = vmatpush1.bf16.msra.mxu0 0
    %954 = vmatprep.subr.bf16.mxu0 0
    %955 = vmatpush1.bf16.msra.mxu0 0
    %956 = vmatprep.subr.bf16.mxu0 0
    %957 = vmatpush1.bf16.msra.mxu0 0
    %958 = vmatprep.subr.bf16.mxu0 0
    %959 = vmatpush1.bf16.msra.mxu0 0
    %960 = vmatprep.subr.bf16.mxu0 0
    %961 = vmatpush1.bf16.msra.mxu0 0
    %962 = vmatprep.subr.bf16.mxu0 0
    %963 = vmatpush1.bf16.msra.mxu0 0
    %964 = vmatprep.subr.bf16.mxu0 0
    %965 = vmatpush1.bf16.msra.mxu0 0
    %966 = vmatprep.subr.bf16.mxu0 0
    %967 = vmatpush1.bf16.msra.mxu0 0
    %968 = vmatprep.subr.bf16.mxu0 0
    %969 = vmatpush1.bf16.msra.mxu0 0
    %970 = vmatprep.subr.bf16.mxu0 0
    %971 = vmatpush1.bf16.msra.mxu0 0
    %972 = vmatprep.mubr.bf16.mxu0 0
    %973 = vmatmul.mubr.bf16.gmra.mrb[0].mxu0 %v938
    %v974 = vpop.f32.mrb[0].mxu0
    %v975 = vadd.f32 0.0, %v974
    %v976 = vpop.f32.mrb[0].mxu0
    %v977 = vpop.f32.mrb[0].mxu0
    %v978 = vpop.f32.mrb[0].mxu0
    %979 = vdwg.mxu0
    %980 = vmatprep.subr.bf16.mxu0 0
    %981 = vmatpush1.bf16.msra.mxu0 %v75
    %982 = vmatprep.subr.bf16.mxu0 0
    %983 = vmatpush1.bf16.msra.mxu0 %v75
    %984 = vmatprep.subr.bf16.mxu0 0
    %985 = vmatpush1.bf16.msra.mxu0 %v75
    %986 = vmatprep.subr.bf16.mxu0 0
    %987 = vmatpush1.bf16.msra.mxu0 %v75
    %988 = vmatprep.subr.bf16.mxu0 0
    %989 = vmatpush1.bf16.msra.mxu0 0
    %990 = vmatprep.subr.bf16.mxu0 0
    %991 = vmatpush1.bf16.msra.mxu0 0
    %992 = vmatprep.subr.bf16.mxu0 0
    %993 = vmatpush1.bf16.msra.mxu0 0
    %994 = vmatprep.subr.bf16.mxu0 0
    %995 = vmatpush1.bf16.msra.mxu0 0
    %996 = vmatprep.subr.bf16.mxu0 0
    %997 = vmatpush1.bf16.msra.mxu0 0
    %998 = vmatprep.subr.bf16.mxu0 0
    %999 = vmatpush1.bf16.msra.mxu0 0
    %1000 = vmatprep.subr.bf16.mxu0 0
    %1001 = vmatpush1.bf16.msra.mxu0 0
    %1002 = vmatprep.subr.bf16.mxu0 0
    %1003 = vmatpush1.bf16.msra.mxu0 0
    %1004 = vmatprep.subr.bf16.mxu0 0
    %1005 = vmatpush1.bf16.msra.mxu0 0
    %1006 = vmatprep.subr.bf16.mxu0 0
    %1007 = vmatpush1.bf16.msra.mxu0 0
    %1008 = vmatprep.subr.bf16.mxu0 0
    %1009 = vmatpush1.bf16.msra.mxu0 0
    %1010 = vmatprep.subr.bf16.mxu0 0
    %1011 = vmatpush1.bf16.msra.mxu0 0
    %1012 = vmatprep.mubr.bf16.mxu0 0
    %1013 = vmatmul.mubr.bf16.gmra.mrb[0].mxu0 %v938
    %v1014 = vpop.f32.mrb[0].mxu0
    %v1015 = vadd.f32 0.0, %v1014
    %v1016 = vpop.f32.mrb[0].mxu0
    %v1017 = vpop.f32.mrb[0].mxu0
    %v1018 = vpop.f32.mrb[0].mxu0
    %1019 = vdwg.mxu0
    %v1020 = vrcp.pop %v1015
    %v1021 = vmul.f32 %v975, %v1020
    %1022 = vst.msk [vmem:[#allocation2 + $0x8] sm:$0xff] %vm80, %v1021
    %v1023 = vld [vmem:[#allocation2] sm:$0xff]
    %v1024 = vld [vmem:[#allocation2 + $0x8] sm:$0xff]
    %v1025 = vpack.c.bf16 %v1024, %v1023
    %v1026 = vld [vmem:[%s5] sm:$0xf]
    %v1027 = vld [vmem:[%s5 + $0x4] sm:$0xf]
    %v1028 = vld [vmem:[%s5 + $0x8] sm:$0xf]
    %v1029 = vld [vmem:[%s5 + $0xc] sm:$0xf]
    %v1030 = vld [vmem:[%s5 + $0x10] sm:$0xf]
    %v1031 = vld [vmem:[%s5 + $0x14] sm:$0xf]
    %v1032 = vld [vmem:[%s5 + $0x18] sm:$0xf]
    %v1033 = vld [vmem:[%s5 + $0x1c] sm:$0xf]
    %v1034 = vld [vmem:[%s6] sm:$0x1]
    %v1036 = vlaneseq
    %v1037 = vshrl.u32 %v1036, 7
    %v1038 = vsub.s32 0, %v1037
    %v1039 = vrot.slane %v1034, %v1038
    %v1049 = vunpack.c.l.b16 %v1026
    %v1050 = vunpack.c.l.b16 %v1027
    %v1051 = vunpack.c.l.b16 %v1028
    %v1052 = vunpack.c.l.b16 %v1029
    %v1053 = vunpack.c.l.b16 %v1030
    %v1054 = vunpack.c.l.b16 %v1031
    %v1055 = vunpack.c.l.b16 %v1032
    %v1056 = vunpack.c.l.b16 %v1033
    %v1057 = vpack.c.b16 %v1050, %v1049
    %v1058 = vpack.c.b16 %v1052, %v1051
    %v1059 = vpack.c.b16 %v1054, %v1053
    %v1060 = vpack.c.b16 %v1056, %v1055
    %v1062 = vsel %vm80, %v1025, 0
    %v1065 = vsel %vm80, %v1057, 0
    %v1068 = vsel %vm80, %v1058, 0
    %v1071 = vsel %vm80, %v1059, 0
    %v1074 = vsel %vm80, %v1060, 0
    %1076 = vmatprep.subr.bf16.mxu0 0
    %1077 = vmatpush1.bf16.xpose.msra.mxu0 %v1065
    %1078 = vmatprep.subr.bf16.mxu0 0
    %1079 = vmatpush1.bf16.xpose.msra.mxu0 %v1068
    %1080 = vmatprep.subr.bf16.mxu0 0
    %1081 = vmatpush1.bf16.xpose.msra.mxu0 %v1071
    %1082 = vmatprep.subr.bf16.mxu0 0
    %1083 = vmatpush1.bf16.xpose.msra.mxu0 %v1074
    %1084 = vmatprep.subr.bf16.mxu0 0
    %1085 = vmatpush1.bf16.xpose.msra.mxu0 0
    %1086 = vmatprep.subr.bf16.mxu0 0
    %1087 = vmatpush1.bf16.xpose.msra.mxu0 0
    %1088 = vmatprep.subr.bf16.mxu0 0
    %1089 = vmatpush1.bf16.xpose.msra.mxu0 0
    %1090 = vmatprep.subr.bf16.mxu0 0
    %1091 = vmatpush1.bf16.xpose.msra.mxu0 0
    %1092 = vmatprep.subr.bf16.mxu0 0
    %1093 = vmatpush1.bf16.xpose.msra.mxu0 0
    %1094 = vmatprep.subr.bf16.mxu0 0
    %1095 = vmatpush1.bf16.xpose.msra.mxu0 0
    %1096 = vmatprep.subr.bf16.mxu0 0
    %1097 = vmatpush1.bf16.xpose.msra.mxu0 0
    %1098 = vmatprep.subr.bf16.mxu0 0
    %1099 = vmatpush1.bf16.xpose.msra.mxu0 0
    %1100 = vmatprep.subr.bf16.mxu0 0
    %1101 = vmatpush1.bf16.xpose.msra.mxu0 0
    %1102 = vmatprep.subr.bf16.mxu0 0
    %1103 = vmatpush1.bf16.xpose.msra.mxu0 0
    %1104 = vmatprep.subr.bf16.mxu0 0
    %1105 = vmatpush1.bf16.xpose.msra.mxu0 0
    %1106 = vmatprep.subr.bf16.mxu0 0
    %1107 = vmatpush1.bf16.xpose.msra.mxu0 0
    %1108 = vmatprep.mubr.bf16.mxu0 0
    %1109 = vmatmul.mubr.bf16.gmra.mrb[0].mxu0 %v1062
    %v1110 = vpop.f32.mrb[0].mxu0
    %v1111 = vadd.f32 %v1039, %v1110
    %v1112 = vpop.f32.mrb[0].mxu0
    %v1113 = vpop.f32.mrb[0].mxu0
    %v1114 = vadd.f32 %v1039, %v1113
    %v1115 = vpop.f32.mrb[0].mxu0
    %1116 = vdwg.mxu0
    %v1117 = vadd.f32 %v76, %v1111
    %v1118 = vadd.f32 %v77, %v1114
    %v1119 = vld [vmem:[%s7] sm:$0x1]
    %v1120 = vld [vmem:[%s8] sm:$0x1]
    %v1121 = vsel %vm80, %v1117, 0.0
    %1122 = vadd.xlane.f32.xlu0 %v1121
    %v1123 = vpop.xlane.xlu0 %1122
    %v1124 = vsel %vm80, %v1118, 0.0
    %1125 = vadd.xlane.f32.xlu0 %v1124
    %v1126 = vpop.xlane.xlu0 %1125
    %v1127 = vmul.f32 %v1123, %v87
    %v1128 = vmul.f32 %v1126, %v87
    %v1129 = vsub.f32 %v1117, %v1127
    %v1130 = vsub.f32 %v1118, %v1128
    %v1131 = vmul.f32 %v1129, %v1129
    %v1132 = vmul.f32 %v1130, %v1130
    %v1133 = vsel %vm80, %v1131, 0.0
    %1134 = vadd.xlane.f32.xlu0 %v1133
    %v1135 = vpop.xlane.xlu0 %1134
    %v1136 = vsel %vm80, %v1132, 0.0
    %1137 = vadd.xlane.f32.xlu0 %v1136
    %v1138 = vpop.xlane.xlu0 %1137
    %v1139 = vmul.f32 %v1135, %v87
    %v1140 = vmul.f32 %v1138, %v87
    %v1141 = vadd.f32 %v1139, 1e-05
    %v1142 = vadd.f32 %v1140, 1e-05
    %v1143 = vrsqrt.pop %v1141
    %v1144 = vrsqrt.pop %v1142
    %v1145 = vmul.f32 %v1129, %v1143
    %v1146 = vmul.f32 %v1130, %v1144
    %v1148 = vlaneseq
    %v1149 = vshrl.u32 %v1148, 7
    %v1150 = vsub.s32 0, %v1149
    %v1151 = vrot.slane %v1119, %v1150
    %v1153 = vmul.f32 %v1145, %v1151
    %v1154 = vmul.f32 %v1146, %v1151
    %v1156 = vlaneseq
    %v1157 = vshrl.u32 %v1156, 7
    %v1158 = vsub.s32 0, %v1157
    %v1159 = vrot.slane %v1120, %v1158
    %v1161 = vadd.f32 %v1153, %v1159
    %v1162 = vadd.f32 %v1154, %v1159
    %v1163 = vpack.c.bf16 %v1162, %v1161
    %v1164 = vld [vmem:[%s9] sm:$0xf]
    %v1165 = vld [vmem:[%s9 + $0x4] sm:$0xf]
    %v1166 = vld [vmem:[%s9 + $0x8] sm:$0xf]
    %v1167 = vld [vmem:[%s9 + $0xc] sm:$0xf]
    %v1168 = vld [vmem:[%s9 + $0x10] sm:$0xf]
    %v1169 = vld [vmem:[%s9 + $0x14] sm:$0xf]
    %v1170 = vld [vmem:[%s9 + $0x18] sm:$0xf]
    %v1171 = vld [vmem:[%s9 + $0x1c] sm:$0xf]
    %v1172 = vld [vmem:[%s9 + $0x20] sm:$0xf]
    %v1173 = vld [vmem:[%s9 + $0x24] sm:$0xf]
    %v1174 = vld [vmem:[%s9 + $0x28] sm:$0xf]
    %v1175 = vld [vmem:[%s9 + $0x2c] sm:$0xf]
    %v1176 = vld [vmem:[%s9 + $0x30] sm:$0xf]
    %v1177 = vld [vmem:[%s9 + $0x34] sm:$0xf]
    %v1178 = vld [vmem:[%s9 + $0x38] sm:$0xf]
    %v1179 = vld [vmem:[%s9 + $0x3c] sm:$0xf]
    %v1180 = vld [vmem:[%s9 + $0x40] sm:$0xf]
    %v1181 = vld [vmem:[%s9 + $0x44] sm:$0xf]
    %v1182 = vld [vmem:[%s9 + $0x48] sm:$0xf]
    %v1183 = vld [vmem:[%s9 + $0x4c] sm:$0xf]
    %v1184 = vld [vmem:[%s9 + $0x50] sm:$0xf]
    %v1185 = vld [vmem:[%s9 + $0x54] sm:$0xf]
    %v1186 = vld [vmem:[%s9 + $0x58] sm:$0xf]
    %v1187 = vld [vmem:[%s9 + $0x5c] sm:$0xf]
    %v1188 = vld [vmem:[%s9 + $0x60] sm:$0xf]
    %v1189 = vld [vmem:[%s9 + $0x64] sm:$0xf]
    %v1190 = vld [vmem:[%s9 + $0x68] sm:$0xf]
    %v1191 = vld [vmem:[%s9 + $0x6c] sm:$0xf]
    %v1192 = vld [vmem:[%s9 + $0x70] sm:$0xf]
    %v1193 = vld [vmem:[%s9 + $0x74] sm:$0xf]
    %v1194 = vld [vmem:[%s9 + $0x78] sm:$0xf]
    %v1195 = vld [vmem:[%s9 + $0x7c] sm:$0xf]
    %v1196 = vld [vmem:[%s10] sm:$0x3]
    %v1198 = vlaneseq
    %v1199 = vshrl.u32 %v1198, 7
    %v1200 = vsub.s32 0, %v1199
    %v1201 = vrot.slane %v1196, %v1200
    %v1202 = vlaneseq
    %v1203 = vshrl.u32 %v1202, 7
    %v1204 = vsub.s32 1, %v1203
    %v1205 = vrot.slane %v1196, %v1204
    %v1240 = vunpack.c.l.b16 %v1164
    %v1241 = vunpack.c.l.b16 %v1165
    %v1242 = vunpack.c.l.b16 %v1166
    %v1243 = vunpack.c.l.b16 %v1167
    %v1244 = vunpack.c.l.b16 %v1168
    %v1245 = vunpack.c.l.b16 %v1169
    %v1246 = vunpack.c.l.b16 %v1170
    %v1247 = vunpack.c.l.b16 %v1171
    %v1248 = vunpack.c.l.b16 %v1172
    %v1249 = vunpack.c.l.b16 %v1173
    %v1250 = vunpack.c.l.b16 %v1174
    %v1251 = vunpack.c.l.b16 %v1175
    %v1252 = vunpack.c.l.b16 %v1176
    %v1253 = vunpack.c.l.b16 %v1177
    %v1254 = vunpack.c.l.b16 %v1178
    %v1255 = vunpack.c.l.b16 %v1179
    %v1256 = vunpack.c.l.b16 %v1180
    %v1257 = vunpack.c.l.b16 %v1181
    %v1258 = vunpack.c.l.b16 %v1182
    %v1259 = vunpack.c.l.b16 %v1183
    %v1260 = vunpack.c.l.b16 %v1184
    %v1261 = vunpack.c.l.b16 %v1185
    %v1262 = vunpack.c.l.b16 %v1186
    %v1263 = vunpack.c.l.b16 %v1187
    %v1264 = vunpack.c.l.b16 %v1188
    %v1265 = vunpack.c.l.b16 %v1189
    %v1266 = vunpack.c.l.b16 %v1190
    %v1267 = vunpack.c.l.b16 %v1191
    %v1268 = vunpack.c.l.b16 %v1192
    %v1269 = vunpack.c.l.b16 %v1193
    %v1270 = vunpack.c.l.b16 %v1194
    %v1271 = vunpack.c.l.b16 %v1195
    %v1272 = vpack.c.b16 %v1241, %v1240
    %v1273 = vpack.c.b16 %v1243, %v1242
    %v1274 = vpack.c.b16 %v1245, %v1244
    %v1275 = vpack.c.b16 %v1247, %v1246
    %v1276 = vpack.c.b16 %v1249, %v1248
    %v1277 = vpack.c.b16 %v1251, %v1250
    %v1278 = vpack.c.b16 %v1253, %v1252
    %v1279 = vpack.c.b16 %v1255, %v1254
    %v1280 = vpack.c.b16 %v1257, %v1256
    %v1281 = vpack.c.b16 %v1259, %v1258
    %v1282 = vpack.c.b16 %v1261, %v1260
    %v1283 = vpack.c.b16 %v1263, %v1262
    %v1284 = vpack.c.b16 %v1265, %v1264
    %v1285 = vpack.c.b16 %v1267, %v1266
    %v1286 = vpack.c.b16 %v1269, %v1268
    %v1287 = vpack.c.b16 %v1271, %v1270
    %v1289 = vsel %vm80, %v1163, 0
    %v1292 = vsel %vm80, %v1272, 0
    %v1295 = vsel %vm80, %v1273, 0
    %v1298 = vsel %vm80, %v1274, 0
    %v1301 = vsel %vm80, %v1275, 0
    %v1304 = vsel %vm80, %v1276, 0
    %v1307 = vsel %vm80, %v1277, 0
    %v1310 = vsel %vm80, %v1278, 0
    %v1313 = vsel %vm80, %v1279, 0
    %v1316 = vsel %vm80, %v1280, 0
    %v1319 = vsel %vm80, %v1281, 0
    %v1322 = vsel %vm80, %v1282, 0
    %v1325 = vsel %vm80, %v1283, 0
    %v1328 = vsel %vm80, %v1284, 0
    %v1331 = vsel %vm80, %v1285, 0
    %v1334 = vsel %vm80, %v1286, 0
    %v1337 = vsel %vm80, %v1287, 0
    %1339 = vmatprep.subr.bf16.mxu0 0
    %1340 = vmatpush1.bf16.xpose.msra.mxu0 %v1292
    %1341 = vmatprep.subr.bf16.mxu0 0
    %1342 = vmatpush1.bf16.xpose.msra.mxu0 %v1295
    %1343 = vmatprep.subr.bf16.mxu0 0
    %1344 = vmatpush1.bf16.xpose.msra.mxu0 %v1298
    %1345 = vmatprep.subr.bf16.mxu0 0
    %1346 = vmatpush1.bf16.xpose.msra.mxu0 %v1301
    %1347 = vmatprep.subr.bf16.mxu0 0
    %1348 = vmatpush1.bf16.xpose.msra.mxu0 %v1304
    %1349 = vmatprep.subr.bf16.mxu0 0
    %1350 = vmatpush1.bf16.xpose.msra.mxu0 %v1307
    %1351 = vmatprep.subr.bf16.mxu0 0
    %1352 = vmatpush1.bf16.xpose.msra.mxu0 %v1310
    %1353 = vmatprep.subr.bf16.mxu0 0
    %1354 = vmatpush1.bf16.xpose.msra.mxu0 %v1313
    %1355 = vmatprep.subr.bf16.mxu0 0
    %1356 = vmatpush1.bf16.xpose.msra.mxu0 %v1316
    %1357 = vmatprep.subr.bf16.mxu0 0
    %1358 = vmatpush1.bf16.xpose.msra.mxu0 %v1319
    %1359 = vmatprep.subr.bf16.mxu0 0
    %1360 = vmatpush1.bf16.xpose.msra.mxu0 %v1322
    %1361 = vmatprep.subr.bf16.mxu0 0
    %1362 = vmatpush1.bf16.xpose.msra.mxu0 %v1325
    %1363 = vmatprep.subr.bf16.mxu0 0
    %1364 = vmatpush1.bf16.xpose.msra.mxu0 %v1328
    %1365 = vmatprep.subr.bf16.mxu0 0
    %1366 = vmatpush1.bf16.xpose.msra.mxu0 %v1331
    %1367 = vmatprep.subr.bf16.mxu0 0
    %1368 = vmatpush1.bf16.xpose.msra.mxu0 %v1334
    %1369 = vmatprep.subr.bf16.mxu0 0
    %1370 = vmatpush1.bf16.xpose.msra.mxu0 %v1337
    %1371 = vmatprep.mubr.bf16.mxu0 0
    %1372 = vmatmul.mubr.bf16.gmra.mrb[0].mxu0 %v1289
    %v1373 = vpop.f32.mrb[0].mxu0
    %v1374 = vadd.f32 %v1201, %v1373
    %v1375 = vpop.f32.mrb[0].mxu0
    %v1376 = vadd.f32 %v1205, %v1375
    %v1377 = vpop.f32.mrb[0].mxu0
    %v1378 = vadd.f32 %v1201, %v1377
    %v1379 = vpop.f32.mrb[0].mxu0
    %v1380 = vadd.f32 %v1205, %v1379
    %1381 = vdwg.mxu0
    %v1382 = vmax.f32 %v1374, 0.0
    %v1383 = vmax.f32 %v1376, 0.0
    %v1384 = vmax.f32 %v1378, 0.0
    %v1385 = vmax.f32 %v1380, 0.0
    %v1386 = vpack.c.bf16 %v1384, %v1382
    %v1387 = vpack.c.bf16 %v1385, %v1383
    %v1388 = vld [vmem:[%s11] sm:$0xff]
    %v1389 = vld [vmem:[%s11 + $0x8] sm:$0xff]
    %v1390 = vld [vmem:[%s11 + $0x10] sm:$0xff]
    %v1391 = vld [vmem:[%s11 + $0x18] sm:$0xff]
    %v1392 = vld [vmem:[%s11 + $0x20] sm:$0xff]
    %v1393 = vld [vmem:[%s11 + $0x28] sm:$0xff]
    %v1394 = vld [vmem:[%s11 + $0x30] sm:$0xff]
    %v1395 = vld [vmem:[%s11 + $0x38] sm:$0xff]
    %v1396 = vld [vmem:[%s12] sm:$0x1]
    %v1398 = vlaneseq
    %v1399 = vshrl.u32 %v1398, 7
    %v1400 = vsub.s32 0, %v1399
    %v1401 = vrot.slane %v1396, %v1400
    %v1411 = vunpack.c.l.b16 %v1388
    %v1412 = vunpack.c.h.b16 %v1388
    %v1413 = vunpack.c.l.b16 %v1389
    %v1414 = vunpack.c.h.b16 %v1389
    %v1415 = vunpack.c.l.b16 %v1390
    %v1416 = vunpack.c.h.b16 %v1390
    %v1417 = vunpack.c.l.b16 %v1391
    %v1418 = vunpack.c.h.b16 %v1391
    %v1419 = vunpack.c.l.b16 %v1392
    %v1420 = vunpack.c.h.b16 %v1392
    %v1421 = vunpack.c.l.b16 %v1393
    %v1422 = vunpack.c.h.b16 %v1393
    %v1423 = vunpack.c.l.b16 %v1394
    %v1424 = vunpack.c.h.b16 %v1394
    %v1425 = vunpack.c.l.b16 %v1395
    %v1426 = vunpack.c.h.b16 %v1395
    %v1427 = vpack.c.b16 %v1413, %v1411
    %v1428 = vpack.c.b16 %v1414, %v1412
    %v1429 = vpack.c.b16 %v1417, %v1415
    %v1430 = vpack.c.b16 %v1418, %v1416
    %v1431 = vpack.c.b16 %v1421, %v1419
    %v1432 = vpack.c.b16 %v1422, %v1420
    %v1433 = vpack.c.b16 %v1425, %v1423
    %v1434 = vpack.c.b16 %v1426, %v1424
    %1443 = vmatprep.subr.bf16.mxu0 %v1428
    %1444 = vmatpush1.bf16.xpose.msra.mxu0 %v1427
    %1445 = vmatprep.subr.bf16.mxu0 %v1430
    %1446 = vmatpush1.bf16.xpose.msra.mxu0 %v1429
    %1447 = vmatprep.subr.bf16.mxu0 %v1432
    %1448 = vmatpush1.bf16.xpose.msra.mxu0 %v1431
    %1449 = vmatprep.subr.bf16.mxu0 %v1434
    %1450 = vmatpush1.bf16.xpose.msra.mxu0 %v1433
    %1451 = vmatprep.subr.bf16.mxu0 0
    %1452 = vmatpush1.bf16.xpose.msra.mxu0 0
    %1453 = vmatprep.subr.bf16.mxu0 0
    %1454 = vmatpush1.bf16.xpose.msra.mxu0 0
    %1455 = vmatprep.subr.bf16.mxu0 0
    %1456 = vmatpush1.bf16.xpose.msra.mxu0 0
    %1457 = vmatprep.subr.bf16.mxu0 0
    %1458 = vmatpush1.bf16.xpose.msra.mxu0 0
    %1459 = vmatprep.subr.bf16.mxu0 0
    %1460 = vmatpush1.bf16.xpose.msra.mxu0 0
    %1461 = vmatprep.subr.bf16.mxu0 0
    %1462 = vmatpush1.bf16.xpose.msra.mxu0 0
    %1463 = vmatprep.subr.bf16.mxu0 0
    %1464 = vmatpush1.bf16.xpose.msra.mxu0 0
    %1465 = vmatprep.subr.bf16.mxu0 0
    %1466 = vmatpush1.bf16.xpose.msra.mxu0 0
    %1467 = vmatprep.subr.bf16.mxu0 0
    %1468 = vmatpush1.bf16.xpose.msra.mxu0 0
    %1469 = vmatprep.subr.bf16.mxu0 0
    %1470 = vmatpush1.bf16.xpose.msra.mxu0 0
    %1471 = vmatprep.subr.bf16.mxu0 0
    %1472 = vmatpush1.bf16.xpose.msra.mxu0 0
    %1473 = vmatprep.subr.bf16.mxu0 0
    %1474 = vmatpush1.bf16.xpose.msra.mxu0 0
    %1475 = vmatprep.mubr.bf16.mxu0 %v1387
    %1476 = vmatmul.mubr.bf16.gmra.mrb[0].mxu0 %v1386
    %v1477 = vpop.f32.mrb[0].mxu0
    %v1478 = vadd.f32 %v1401, %v1477
    %v1479 = vpop.f32.mrb[0].mxu0
    %v1480 = vpop.f32.mrb[0].mxu0
    %v1481 = vadd.f32 %v1401, %v1480
    %v1482 = vpop.f32.mrb[0].mxu0
    %1483 = vdwg.mxu0
    %v1484 = vadd.f32 %v1117, %v1478
    %v1485 = vadd.f32 %v1118, %v1481
    %s1486 = scalar_lea.vmem %s1, 1
    %v1487 = vld [vmem:[%s1486] sm:$0x1]
    %s1488 = scalar_lea.vmem %s2, 1
    %v1489 = vld [vmem:[%s1488] sm:$0x1]
    %v1490 = vsel %vm80, %v1484, 0.0
    %1491 = vadd.xlane.f32.xlu0 %v1490
    %v1492 = vpop.xlane.xlu0 %1491
    %v1493 = vsel %vm80, %v1485, 0.0
    %1494 = vadd.xlane.f32.xlu0 %v1493
    %v1495 = vpop.xlane.xlu0 %1494
    %v1496 = vmul.f32 %v1492, %v87
    %v1497 = vmul.f32 %v1495, %v87
    %v1498 = vsub.f32 %v1484, %v1496
    %v1499 = vsub.f32 %v1485, %v1497
    %v1500 = vmul.f32 %v1498, %v1498
    %v1501 = vmul.f32 %v1499, %v1499
    %v1502 = vsel %vm80, %v1500, 0.0
    %1503 = vadd.xlane.f32.xlu0 %v1502
    %v1504 = vpop.xlane.xlu0 %1503
    %v1505 = vsel %vm80, %v1501, 0.0
    %1506 = vadd.xlane.f32.xlu0 %v1505
    %v1507 = vpop.xlane.xlu0 %1506
    %v1508 = vmul.f32 %v1504, %v87
    %v1509 = vmul.f32 %v1507, %v87
    %v1510 = vadd.f32 %v1508, 1e-05
    %v1511 = vadd.f32 %v1509, 1e-05
    %v1512 = vrsqrt.pop %v1510
    %v1513 = vrsqrt.pop %v1511
    %v1514 = vmul.f32 %v1498, %v1512
    %v1515 = vmul.f32 %v1499, %v1513
    %v1517 = vlaneseq
    %v1518 = vshrl.u32 %v1517, 7
    %v1519 = vsub.s32 0, %v1518
    %v1520 = vrot.slane %v1487, %v1519
    %v1522 = vmul.f32 %v1514, %v1520
    %v1523 = vmul.f32 %v1515, %v1520
    %v1525 = vlaneseq
    %v1526 = vshrl.u32 %v1525, 7
    %v1527 = vsub.s32 0, %v1526
    %v1528 = vrot.slane %v1489, %v1527
    %v1530 = vadd.f32 %v1522, %v1528
    %v1531 = vadd.f32 %v1523, %v1528
    %v1532 = vpack.c.bf16 %v1531, %v1530
    %s1533 = scalar_lea.vmem %s3, 96
    %v1534 = vld [vmem:[%s1533] sm:$0xf]
    %v1535 = vld [vmem:[%s1533 + $0x4] sm:$0xf]
    %v1536 = vld [vmem:[%s1533 + $0x8] sm:$0xf]
    %v1537 = vld [vmem:[%s1533 + $0xc] sm:$0xf]
    %v1538 = vld [vmem:[%s1533 + $0x10] sm:$0xf]
    %v1539 = vld [vmem:[%s1533 + $0x14] sm:$0xf]
    %v1540 = vld [vmem:[%s1533 + $0x18] sm:$0xf]
    %v1541 = vld [vmem:[%s1533 + $0x1c] sm:$0xf]
    %v1542 = vld [vmem:[%s1533 + $0x20] sm:$0xf]
    %v1543 = vld [vmem:[%s1533 + $0x24] sm:$0xf]
    %v1544 = vld [vmem:[%s1533 + $0x28] sm:$0xf]
    %v1545 = vld [vmem:[%s1533 + $0x2c] sm:$0xf]
    %v1546 = vld [vmem:[%s1533 + $0x30] sm:$0xf]
    %v1547 = vld [vmem:[%s1533 + $0x34] sm:$0xf]
    %v1548 = vld [vmem:[%s1533 + $0x38] sm:$0xf]
    %v1549 = vld [vmem:[%s1533 + $0x3c] sm:$0xf]
    %v1550 = vld [vmem:[%s1533 + $0x40] sm:$0xf]
    %v1551 = vld [vmem:[%s1533 + $0x44] sm:$0xf]
    %v1552 = vld [vmem:[%s1533 + $0x48] sm:$0xf]
    %v1553 = vld [vmem:[%s1533 + $0x4c] sm:$0xf]
    %v1554 = vld [vmem:[%s1533 + $0x50] sm:$0xf]
    %v1555 = vld [vmem:[%s1533 + $0x54] sm:$0xf]
    %v1556 = vld [vmem:[%s1533 + $0x58] sm:$0xf]
    %v1557 = vld [vmem:[%s1533 + $0x5c] sm:$0xf]
    %s1558 = scalar_lea.vmem %s4, 2
    %v1559 = vld [vmem:[%s1558] sm:$0x3]
    %v1561 = vlaneseq
    %v1562 = vshrl.u32 %v1561, 7
    %v1563 = vsub.s32 0, %v1562
    %v1564 = vrot.slane %v1559, %v1563
    %v1565 = vlaneseq
    %v1566 = vshrl.u32 %v1565, 7
    %v1567 = vsub.s32 1, %v1566
    %v1568 = vrot.slane %v1559, %v1567
    %v1595 = vunpack.c.l.b16 %v1534
    %v1596 = vunpack.c.l.b16 %v1535
    %v1597 = vunpack.c.l.b16 %v1536
    %v1598 = vunpack.c.l.b16 %v1537
    %v1599 = vunpack.c.l.b16 %v1538
    %v1600 = vunpack.c.l.b16 %v1539
    %v1601 = vunpack.c.l.b16 %v1540
    %v1602 = vunpack.c.l.b16 %v1541
    %v1603 = vunpack.c.l.b16 %v1542
    %v1604 = vunpack.c.l.b16 %v1543
    %v1605 = vunpack.c.l.b16 %v1544
    %v1606 = vunpack.c.l.b16 %v1545
    %v1607 = vunpack.c.l.b16 %v1546
    %v1608 = vunpack.c.l.b16 %v1547
    %v1609 = vunpack.c.l.b16 %v1548
    %v1610 = vunpack.c.l.b16 %v1549
    %v1611 = vunpack.c.l.b16 %v1550
    %v1612 = vunpack.c.l.b16 %v1551
    %v1613 = vunpack.c.l.b16 %v1552
    %v1614 = vunpack.c.l.b16 %v1553
    %v1615 = vunpack.c.l.b16 %v1554
    %v1616 = vunpack.c.l.b16 %v1555
    %v1617 = vunpack.c.l.b16 %v1556
    %v1618 = vunpack.c.l.b16 %v1557
    %v1619 = vpack.c.b16 %v1596, %v1595
    %v1620 = vpack.c.b16 %v1598, %v1597
    %v1621 = vpack.c.b16 %v1600, %v1599
    %v1622 = vpack.c.b16 %v1602, %v1601
    %v1623 = vpack.c.b16 %v1604, %v1603
    %v1624 = vpack.c.b16 %v1606, %v1605
    %v1625 = vpack.c.b16 %v1608, %v1607
    %v1626 = vpack.c.b16 %v1610, %v1609
    %v1627 = vpack.c.b16 %v1612, %v1611
    %v1628 = vpack.c.b16 %v1614, %v1613
    %v1629 = vpack.c.b16 %v1616, %v1615
    %v1630 = vpack.c.b16 %v1618, %v1617
    %v1632 = vsel %vm80, %v1532, 0
    %v1635 = vsel %vm80, %v1619, 0
    %v1638 = vsel %vm80, %v1620, 0
    %v1641 = vsel %vm80, %v1621, 0
    %v1644 = vsel %vm80, %v1622, 0
    %v1647 = vsel %vm80, %v1623, 0
    %v1650 = vsel %vm80, %v1624, 0
    %v1653 = vsel %vm80, %v1625, 0
    %v1656 = vsel %vm80, %v1626, 0
    %v1659 = vsel %vm80, %v1627, 0
    %v1662 = vsel %vm80, %v1628, 0
    %v1665 = vsel %vm80, %v1629, 0
    %v1668 = vsel %vm80, %v1630, 0
    %1670 = vmatprep.subr.bf16.mxu0 0
    %1671 = vmatpush1.bf16.xpose.msra.mxu0 %v1635
    %1672 = vmatprep.subr.bf16.mxu0 0
    %1673 = vmatpush1.bf16.xpose.msra.mxu0 %v1638
    %1674 = vmatprep.subr.bf16.mxu0 0
    %1675 = vmatpush1.bf16.xpose.msra.mxu0 %v1641
    %1676 = vmatprep.subr.bf16.mxu0 0
    %1677 = vmatpush1.bf16.xpose.msra.mxu0 %v1644
    %1678 = vmatprep.subr.bf16.mxu0 0
    %1679 = vmatpush1.bf16.xpose.msra.mxu0 %v1647
    %1680 = vmatprep.subr.bf16.mxu0 0
    %1681 = vmatpush1.bf16.xpose.msra.mxu0 %v1650
    %1682 = vmatprep.subr.bf16.mxu0 0
    %1683 = vmatpush1.bf16.xpose.msra.mxu0 %v1653
    %1684 = vmatprep.subr.bf16.mxu0 0
    %1685 = vmatpush1.bf16.xpose.msra.mxu0 %v1656
    %1686 = vmatprep.subr.bf16.mxu0 0
    %1687 = vmatpush1.bf16.xpose.msra.mxu0 %v1659
    %1688 = vmatprep.subr.bf16.mxu0 0
    %1689 = vmatpush1.bf16.xpose.msra.mxu0 %v1662
    %1690 = vmatprep.subr.bf16.mxu0 0
    %1691 = vmatpush1.bf16.xpose.msra.mxu0 %v1665
    %1692 = vmatprep.subr.bf16.mxu0 0
    %1693 = vmatpush1.bf16.xpose.msra.mxu0 %v1668
    %1694 = vmatprep.subr.bf16.mxu0 0
    %1695 = vmatpush1.bf16.xpose.msra.mxu0 0
    %1696 = vmatprep.subr.bf16.mxu0 0
    %1697 = vmatpush1.bf16.xpose.msra.mxu0 0
    %1698 = vmatprep.subr.bf16.mxu0 0
    %1699 = vmatpush1.bf16.xpose.msra.mxu0 0
    %1700 = vmatprep.subr.bf16.mxu0 0
    %1701 = vmatpush1.bf16.xpose.msra.mxu0 0
    %1702 = vmatprep.mubr.bf16.mxu0 0
    %1703 = vmatmul.mubr.bf16.gmra.mrb[0].mxu0 %v1632
    %v1704 = vpop.f32.mrb[0].mxu0
    %v1705 = vadd.f32 %v1564, %v1704
    %v1706 = vpop.f32.mrb[0].mxu0
    %v1707 = vadd.f32 %v1568, %v1706
    %v1708 = vpop.f32.mrb[0].mxu0
    %v1709 = vadd.f32 %v1564, %v1708
    %v1710 = vpop.f32.mrb[0].mxu0
    %v1711 = vadd.f32 %v1568, %v1710
    %1712 = vdwg.mxu0
    %v1713 = vmul.f32 %v1705, 0.35355338
    %v1714 = vmul.f32 %v1709, 0.35355338
    %v1715 = vpack.c.bf16 %v1713, %v1713
    %v1717 = vcombine.high %v1705, %v1705
    %v1719 = vunpack.c.l.s4 1966171168
    %v1720 = vunpack.c.0.s8 %v1719
    %v1721 = vlaneseq
    %v1722 = vshrl.u32 %v1721, 7
    %v1723 = vsub.s32 %v1720, %v1722
    %v1724 = vrot.slane %v1705, %v1723
    %v1726 = vunpack.c.l.s4 1966171168
    %v1727 = vunpack.c.0.s8 %v1726
    %v1728 = vlaneseq
    %v1729 = vshrl.u32 %v1728, 7
    %v1730 = vsub.s32 %v1727, %v1729
    %v1731 = vrot.slane %v1717, %v1730
    %v1732 = vcombine.high %v1724, %v1724
    %v1733 = vcombine.high %v1731, %v1731
    %v1735 = vunpack.c.l.s4 1966171168
    %v1736 = vunpack.c.0.s8 %v1735
    %v1737 = vlaneseq
    %v1738 = vshrl.u32 %v1737, 7
    %v1739 = vsub.s32 %v1736, %v1738
    %v1740 = vrot.slane %v1724, %v1739
    %v1742 = vunpack.c.l.s4 1966171168
    %v1743 = vunpack.c.0.s8 %v1742
    %v1744 = vlaneseq
    %v1745 = vshrl.u32 %v1744, 7
    %v1746 = vsub.s32 %v1743, %v1745
    %v1747 = vrot.slane %v1731, %v1746
    %v1749 = vunpack.c.l.s4 1966171168
    %v1750 = vunpack.c.0.s8 %v1749
    %v1751 = vlaneseq
    %v1752 = vshrl.u32 %v1751, 7
    %v1753 = vsub.s32 %v1750, %v1752
    %v1754 = vrot.slane %v1732, %v1753
    %v1756 = vunpack.c.l.s4 1966171168
    %v1757 = vunpack.c.0.s8 %v1756
    %v1758 = vlaneseq
    %v1759 = vshrl.u32 %v1758, 7
    %v1760 = vsub.s32 %v1757, %v1759
    %v1761 = vrot.slane %v1733, %v1760
    %v1762 = vcombine.high %v1740, %v1740
    %v1763 = vcombine.high %v1747, %v1747
    %v1764 = vcombine.high %v1754, %v1754
    %v1765 = vcombine.high %v1761, %v1761
    %v1766 = vlaneseq
    %v1767 = vshrl.u32 %v1766, 7
    %v1768 = vsub.s32 0, %v1767
    %v1769 = vrot.slane %v1740, %v1768
    %v1770 = vlaneseq
    %v1771 = vshrl.u32 %v1770, 7
    %v1772 = vsub.s32 0, %v1771
    %v1773 = vrot.slane %v1754, %v1772
    %v1774 = vlaneseq
    %v1775 = vshrl.u32 %v1774, 7
    %v1776 = vsub.s32 0, %v1775
    %v1777 = vrot.slane %v1762, %v1776
    %v1778 = vlaneseq
    %v1779 = vshrl.u32 %v1778, 7
    %v1780 = vsub.s32 0, %v1779
    %v1781 = vrot.slane %v1764, %v1780
    %v1782 = vlaneseq
    %v1783 = vshrl.u32 %v1782, 7
    %v1784 = vsub.s32 0, %v1783
    %v1785 = vrot.slane %v1747, %v1784
    %v1786 = vlaneseq
    %v1787 = vshrl.u32 %v1786, 7
    %v1788 = vsub.s32 0, %v1787
    %v1789 = vrot.slane %v1761, %v1788
    %v1790 = vlaneseq
    %v1791 = vshrl.u32 %v1790, 7
    %v1792 = vsub.s32 0, %v1791
    %v1793 = vrot.slane %v1763, %v1792
    %v1794 = vlaneseq
    %v1795 = vshrl.u32 %v1794, 7
    %v1796 = vsub.s32 0, %v1795
    %v1797 = vrot.slane %v1765, %v1796
    %v1806 = vpack.c.bf16 %v1773, %v1769
    %v1807 = vpack.c.bf16 %v1781, %v1777
    %v1808 = vpack.c.bf16 %v1789, %v1785
    %v1809 = vpack.c.bf16 %v1797, %v1793
    %v1810 = vmul.bf16 %v1806, %v402
    %v1811 = vmul.bf16 %v1807, %v402
    %v1812 = vmul.bf16 %v1808, %v402
    %v1813 = vmul.bf16 %v1809, %v402
    %v1815 = vcombine.high %v1707, %v1707
    %v1817 = vunpack.c.l.s4 1966171168
    %v1818 = vunpack.c.0.s8 %v1817
    %v1819 = vlaneseq
    %v1820 = vshrl.u32 %v1819, 7
    %v1821 = vsub.s32 %v1818, %v1820
    %v1822 = vrot.slane %v1707, %v1821
    %v1824 = vunpack.c.l.s4 1966171168
    %v1825 = vunpack.c.0.s8 %v1824
    %v1826 = vlaneseq
    %v1827 = vshrl.u32 %v1826, 7
    %v1828 = vsub.s32 %v1825, %v1827
    %v1829 = vrot.slane %v1815, %v1828
    %v1830 = vcombine.high %v1822, %v1822
    %v1831 = vcombine.high %v1829, %v1829
    %v1833 = vunpack.c.l.s4 1966171168
    %v1834 = vunpack.c.0.s8 %v1833
    %v1835 = vlaneseq
    %v1836 = vshrl.u32 %v1835, 7
    %v1837 = vsub.s32 %v1834, %v1836
    %v1838 = vrot.slane %v1822, %v1837
    %v1840 = vunpack.c.l.s4 1966171168
    %v1841 = vunpack.c.0.s8 %v1840
    %v1842 = vlaneseq
    %v1843 = vshrl.u32 %v1842, 7
    %v1844 = vsub.s32 %v1841, %v1843
    %v1845 = vrot.slane %v1829, %v1844
    %v1847 = vunpack.c.l.s4 1966171168
    %v1848 = vunpack.c.0.s8 %v1847
    %v1849 = vlaneseq
    %v1850 = vshrl.u32 %v1849, 7
    %v1851 = vsub.s32 %v1848, %v1850
    %v1852 = vrot.slane %v1830, %v1851
    %v1854 = vunpack.c.l.s4 1966171168
    %v1855 = vunpack.c.0.s8 %v1854
    %v1856 = vlaneseq
    %v1857 = vshrl.u32 %v1856, 7
    %v1858 = vsub.s32 %v1855, %v1857
    %v1859 = vrot.slane %v1831, %v1858
    %v1860 = vcombine.high %v1838, %v1838
    %v1861 = vcombine.high %v1845, %v1845
    %v1862 = vcombine.high %v1852, %v1852
    %v1863 = vcombine.high %v1859, %v1859
    %v1864 = vlaneseq
    %v1865 = vshrl.u32 %v1864, 7
    %v1866 = vsub.s32 0, %v1865
    %v1867 = vrot.slane %v1838, %v1866
    %v1868 = vlaneseq
    %v1869 = vshrl.u32 %v1868, 7
    %v1870 = vsub.s32 0, %v1869
    %v1871 = vrot.slane %v1852, %v1870
    %v1872 = vlaneseq
    %v1873 = vshrl.u32 %v1872, 7
    %v1874 = vsub.s32 0, %v1873
    %v1875 = vrot.slane %v1860, %v1874
    %v1876 = vlaneseq
    %v1877 = vshrl.u32 %v1876, 7
    %v1878 = vsub.s32 0, %v1877
    %v1879 = vrot.slane %v1862, %v1878
    %v1880 = vlaneseq
    %v1881 = vshrl.u32 %v1880, 7
    %v1882 = vsub.s32 0, %v1881
    %v1883 = vrot.slane %v1845, %v1882
    %v1884 = vlaneseq
    %v1885 = vshrl.u32 %v1884, 7
    %v1886 = vsub.s32 0, %v1885
    %v1887 = vrot.slane %v1859, %v1886
    %v1888 = vlaneseq
    %v1889 = vshrl.u32 %v1888, 7
    %v1890 = vsub.s32 0, %v1889
    %v1891 = vrot.slane %v1861, %v1890
    %v1892 = vlaneseq
    %v1893 = vshrl.u32 %v1892, 7
    %v1894 = vsub.s32 0, %v1893
    %v1895 = vrot.slane %v1863, %v1894
    %v1904 = vpack.c.bf16 %v1871, %v1867
    %v1905 = vpack.c.bf16 %v1879, %v1875
    %v1906 = vpack.c.bf16 %v1887, %v1883
    %v1907 = vpack.c.bf16 %v1895, %v1891
    %v1908 = vmul.bf16 %v1904, %v75
    %v1909 = vmul.bf16 %v1905, %v75
    %v1910 = vmul.bf16 %v1906, %v75
    %v1911 = vmul.bf16 %v1907, %v75
    %1916 = vrot.lane.b32.xlu0 %v1810, 64
    %v1917 = vpop.permute.xlu0 %1916
    %1918 = vrot.lane.b32.xlu0 %v1811, 64
    %v1919 = vpop.permute.xlu0 %1918
    %1920 = vrot.lane.b32.xlu0 %v1812, 64
    %v1921 = vpop.permute.xlu0 %1920
    %1922 = vrot.lane.b32.xlu0 %v1813, 64
    %v1923 = vpop.permute.xlu0 %1922
    %v1925 = vsel %vm80, %v1715, 0
    %v1928 = vsel %vm80, %v1917, 0
    %v1931 = vsel %vm80, %v1919, 0
    %v1934 = vsel %vm80, %v1921, 0
    %v1937 = vsel %vm80, %v1923, 0
    %1939 = vmatprep.subr.bf16.mxu0 0
    %1940 = vmatpush1.bf16.xpose.msra.mxu0 %v1928
    %1941 = vmatprep.subr.bf16.mxu0 0
    %1942 = vmatpush1.bf16.xpose.msra.mxu0 %v1931
    %1943 = vmatprep.subr.bf16.mxu0 0
    %1944 = vmatpush1.bf16.xpose.msra.mxu0 %v1934
    %1945 = vmatprep.subr.bf16.mxu0 0
    %1946 = vmatpush1.bf16.xpose.msra.mxu0 %v1937
    %1947 = vmatprep.subr.bf16.mxu0 0
    %1948 = vmatpush1.bf16.xpose.msra.mxu0 0
    %1949 = vmatprep.subr.bf16.mxu0 0
    %1950 = vmatpush1.bf16.xpose.msra.mxu0 0
    %1951 = vmatprep.subr.bf16.mxu0 0
    %1952 = vmatpush1.bf16.xpose.msra.mxu0 0
    %1953 = vmatprep.subr.bf16.mxu0 0
    %1954 = vmatpush1.bf16.xpose.msra.mxu0 0
    %1955 = vmatprep.subr.bf16.mxu0 0
    %1956 = vmatpush1.bf16.xpose.msra.mxu0 0
    %1957 = vmatprep.subr.bf16.mxu0 0
    %1958 = vmatpush1.bf16.xpose.msra.mxu0 0
    %1959 = vmatprep.subr.bf16.mxu0 0
    %1960 = vmatpush1.bf16.xpose.msra.mxu0 0
    %1961 = vmatprep.subr.bf16.mxu0 0
    %1962 = vmatpush1.bf16.xpose.msra.mxu0 0
    %1963 = vmatprep.subr.bf16.mxu0 0
    %1964 = vmatpush1.bf16.xpose.msra.mxu0 0
    %1965 = vmatprep.subr.bf16.mxu0 0
    %1966 = vmatpush1.bf16.xpose.msra.mxu0 0
    %1967 = vmatprep.subr.bf16.mxu0 0
    %1968 = vmatpush1.bf16.xpose.msra.mxu0 0
    %1969 = vmatprep.subr.bf16.mxu0 0
    %1970 = vmatpush1.bf16.xpose.msra.mxu0 0
    %1971 = vmatprep.mubr.bf16.mxu0 0
    %1972 = vmatmul.mubr.bf16.gmra.mrb[0].mxu0 %v1925
    %v1973 = vpop.f32.mrb[0].mxu0
    %v1974 = vadd.f32 %v68, %v1973
    %v1975 = vpop.f32.mrb[0].mxu0
    %v1976 = vpop.f32.mrb[0].mxu0
    %v1977 = vpop.f32.mrb[0].mxu0
    %1978 = vdwg.mxu0
    %v1979 = vsel %vm80, %v1974, -inf
    %1980 = vmax.xlane.f32.xlu0 %v1979
    %v1981 = vpop.xlane.xlu0 %1980
    %v1982 = vsub.f32 %v1974, %v1981
    %v1983 = vmul.f32 %v1982, 1.442695
    %v1984 = vpow.pop %v1983
    %v1985 = vpack.c.bf16 %v1984, %v1984
    %v1987 = vsel %vm80, %v1985, 0
    %1989 = vmatprep.subr.bf16.mxu0 0
    %1990 = vmatpush1.bf16.msra.mxu0 %v1908
    %1991 = vmatprep.subr.bf16.mxu0 0
    %1992 = vmatpush1.bf16.msra.mxu0 %v1909
    %1993 = vmatprep.subr.bf16.mxu0 0
    %1994 = vmatpush1.bf16.msra.mxu0 %v1910
    %1995 = vmatprep.subr.bf16.mxu0 0
    %1996 = vmatpush1.bf16.msra.mxu0 %v1911
    %1997 = vmatprep.subr.bf16.mxu0 0
    %1998 = vmatpush1.bf16.msra.mxu0 0
    %1999 = vmatprep.subr.bf16.mxu0 0
    %2000 = vmatpush1.bf16.msra.mxu0 0
    %2001 = vmatprep.subr.bf16.mxu0 0
    %2002 = vmatpush1.bf16.msra.mxu0 0
    %2003 = vmatprep.subr.bf16.mxu0 0
    %2004 = vmatpush1.bf16.msra.mxu0 0
    %2005 = vmatprep.subr.bf16.mxu0 0
    %2006 = vmatpush1.bf16.msra.mxu0 0
    %2007 = vmatprep.subr.bf16.mxu0 0
    %2008 = vmatpush1.bf16.msra.mxu0 0
    %2009 = vmatprep.subr.bf16.mxu0 0
    %2010 = vmatpush1.bf16.msra.mxu0 0
    %2011 = vmatprep.subr.bf16.mxu0 0
    %2012 = vmatpush1.bf16.msra.mxu0 0
    %2013 = vmatprep.subr.bf16.mxu0 0
    %2014 = vmatpush1.bf16.msra.mxu0 0
    %2015 = vmatprep.subr.bf16.mxu0 0
    %2016 = vmatpush1.bf16.msra.mxu0 0
    %2017 = vmatprep.subr.bf16.mxu0 0
    %2018 = vmatpush1.bf16.msra.mxu0 0
    %2019 = vmatprep.subr.bf16.mxu0 0
    %2020 = vmatpush1.bf16.msra.mxu0 0
    %2021 = vmatprep.mubr.bf16.mxu0 0
    %2022 = vmatmul.mubr.bf16.gmra.mrb[0].mxu0 %v1987
    %v2023 = vpop.f32.mrb[0].mxu0
    %v2024 = vadd.f32 0.0, %v2023
    %v2025 = vpop.f32.mrb[0].mxu0
    %v2026 = vpop.f32.mrb[0].mxu0
    %v2027 = vpop.f32.mrb[0].mxu0
    %2028 = vdwg.mxu0
    %2029 = vmatprep.subr.bf16.mxu0 0
    %2030 = vmatpush1.bf16.msra.mxu0 %v75
    %2031 = vmatprep.subr.bf16.mxu0 0
    %2032 = vmatpush1.bf16.msra.mxu0 %v75
    %2033 = vmatprep.subr.bf16.mxu0 0
    %2034 = vmatpush1.bf16.msra.mxu0 %v75
    %2035 = vmatprep.subr.bf16.mxu0 0
    %2036 = vmatpush1.bf16.msra.mxu0 %v75
    %2037 = vmatprep.subr.bf16.mxu0 0
    %2038 = vmatpush1.bf16.msra.mxu0 0
    %2039 = vmatprep.subr.bf16.mxu0 0
    %2040 = vmatpush1.bf16.msra.mxu0 0
    %2041 = vmatprep.subr.bf16.mxu0 0
    %2042 = vmatpush1.bf16.msra.mxu0 0
    %2043 = vmatprep.subr.bf16.mxu0 0
    %2044 = vmatpush1.bf16.msra.mxu0 0
    %2045 = vmatprep.subr.bf16.mxu0 0
    %2046 = vmatpush1.bf16.msra.mxu0 0
    %2047 = vmatprep.subr.bf16.mxu0 0
    %2048 = vmatpush1.bf16.msra.mxu0 0
    %2049 = vmatprep.subr.bf16.mxu0 0
    %2050 = vmatpush1.bf16.msra.mxu0 0
    %2051 = vmatprep.subr.bf16.mxu0 0
    %2052 = vmatpush1.bf16.msra.mxu0 0
    %2053 = vmatprep.subr.bf16.mxu0 0
    %2054 = vmatpush1.bf16.msra.mxu0 0
    %2055 = vmatprep.subr.bf16.mxu0 0
    %2056 = vmatpush1.bf16.msra.mxu0 0
    %2057 = vmatprep.subr.bf16.mxu0 0
    %2058 = vmatpush1.bf16.msra.mxu0 0
    %2059 = vmatprep.subr.bf16.mxu0 0
    %2060 = vmatpush1.bf16.msra.mxu0 0
    %2061 = vmatprep.mubr.bf16.mxu0 0
    %2062 = vmatmul.mubr.bf16.gmra.mrb[0].mxu0 %v1987
    %v2063 = vpop.f32.mrb[0].mxu0
    %v2064 = vadd.f32 0.0, %v2063
    %v2065 = vpop.f32.mrb[0].mxu0
    %v2066 = vpop.f32.mrb[0].mxu0
    %v2067 = vpop.f32.mrb[0].mxu0
    %2068 = vdwg.mxu0
    %v2069 = vrcp.pop %v2064
    %v2070 = vmul.f32 %v2024, %v2069
    %2071 = vst.msk [vmem:[#allocation2] sm:$0xff] %vm80, %v2070
    %v2072 = vpack.c.bf16 %v1714, %v1714
    %v2074 = vcombine.high %v1709, %v1709
    %v2076 = vunpack.c.l.s4 1966171168
    %v2077 = vunpack.c.0.s8 %v2076
    %v2078 = vlaneseq
    %v2079 = vshrl.u32 %v2078, 7
    %v2080 = vsub.s32 %v2077, %v2079
    %v2081 = vrot.slane %v1709, %v2080
    %v2083 = vunpack.c.l.s4 1966171168
    %v2084 = vunpack.c.0.s8 %v2083
    %v2085 = vlaneseq
    %v2086 = vshrl.u32 %v2085, 7
    %v2087 = vsub.s32 %v2084, %v2086
    %v2088 = vrot.slane %v2074, %v2087
    %v2089 = vcombine.high %v2081, %v2081
    %v2090 = vcombine.high %v2088, %v2088
    %v2092 = vunpack.c.l.s4 1966171168
    %v2093 = vunpack.c.0.s8 %v2092
    %v2094 = vlaneseq
    %v2095 = vshrl.u32 %v2094, 7
    %v2096 = vsub.s32 %v2093, %v2095
    %v2097 = vrot.slane %v2081, %v2096
    %v2099 = vunpack.c.l.s4 1966171168
    %v2100 = vunpack.c.0.s8 %v2099
    %v2101 = vlaneseq
    %v2102 = vshrl.u32 %v2101, 7
    %v2103 = vsub.s32 %v2100, %v2102
    %v2104 = vrot.slane %v2088, %v2103
    %v2106 = vunpack.c.l.s4 1966171168
    %v2107 = vunpack.c.0.s8 %v2106
    %v2108 = vlaneseq
    %v2109 = vshrl.u32 %v2108, 7
    %v2110 = vsub.s32 %v2107, %v2109
    %v2111 = vrot.slane %v2089, %v2110
    %v2113 = vunpack.c.l.s4 1966171168
    %v2114 = vunpack.c.0.s8 %v2113
    %v2115 = vlaneseq
    %v2116 = vshrl.u32 %v2115, 7
    %v2117 = vsub.s32 %v2114, %v2116
    %v2118 = vrot.slane %v2090, %v2117
    %v2119 = vcombine.high %v2097, %v2097
    %v2120 = vcombine.high %v2104, %v2104
    %v2121 = vcombine.high %v2111, %v2111
    %v2122 = vcombine.high %v2118, %v2118
    %v2123 = vlaneseq
    %v2124 = vshrl.u32 %v2123, 7
    %v2125 = vsub.s32 0, %v2124
    %v2126 = vrot.slane %v2097, %v2125
    %v2127 = vlaneseq
    %v2128 = vshrl.u32 %v2127, 7
    %v2129 = vsub.s32 0, %v2128
    %v2130 = vrot.slane %v2111, %v2129
    %v2131 = vlaneseq
    %v2132 = vshrl.u32 %v2131, 7
    %v2133 = vsub.s32 0, %v2132
    %v2134 = vrot.slane %v2119, %v2133
    %v2135 = vlaneseq
    %v2136 = vshrl.u32 %v2135, 7
    %v2137 = vsub.s32 0, %v2136
    %v2138 = vrot.slane %v2121, %v2137
    %v2139 = vlaneseq
    %v2140 = vshrl.u32 %v2139, 7
    %v2141 = vsub.s32 0, %v2140
    %v2142 = vrot.slane %v2104, %v2141
    %v2143 = vlaneseq
    %v2144 = vshrl.u32 %v2143, 7
    %v2145 = vsub.s32 0, %v2144
    %v2146 = vrot.slane %v2118, %v2145
    %v2147 = vlaneseq
    %v2148 = vshrl.u32 %v2147, 7
    %v2149 = vsub.s32 0, %v2148
    %v2150 = vrot.slane %v2120, %v2149
    %v2151 = vlaneseq
    %v2152 = vshrl.u32 %v2151, 7
    %v2153 = vsub.s32 0, %v2152
    %v2154 = vrot.slane %v2122, %v2153
    %v2163 = vpack.c.bf16 %v2130, %v2126
    %v2164 = vpack.c.bf16 %v2138, %v2134
    %v2165 = vpack.c.bf16 %v2146, %v2142
    %v2166 = vpack.c.bf16 %v2154, %v2150
    %v2167 = vmul.bf16 %v2163, %v402
    %v2168 = vmul.bf16 %v2164, %v402
    %v2169 = vmul.bf16 %v2165, %v402
    %v2170 = vmul.bf16 %v2166, %v402
    %v2172 = vcombine.high %v1711, %v1711
    %v2174 = vunpack.c.l.s4 1966171168
    %v2175 = vunpack.c.0.s8 %v2174
    %v2176 = vlaneseq
    %v2177 = vshrl.u32 %v2176, 7
    %v2178 = vsub.s32 %v2175, %v2177
    %v2179 = vrot.slane %v1711, %v2178
    %v2181 = vunpack.c.l.s4 1966171168
    %v2182 = vunpack.c.0.s8 %v2181
    %v2183 = vlaneseq
    %v2184 = vshrl.u32 %v2183, 7
    %v2185 = vsub.s32 %v2182, %v2184
    %v2186 = vrot.slane %v2172, %v2185
    %v2187 = vcombine.high %v2179, %v2179
    %v2188 = vcombine.high %v2186, %v2186
    %v2190 = vunpack.c.l.s4 1966171168
    %v2191 = vunpack.c.0.s8 %v2190
    %v2192 = vlaneseq
    %v2193 = vshrl.u32 %v2192, 7
    %v2194 = vsub.s32 %v2191, %v2193
    %v2195 = vrot.slane %v2179, %v2194
    %v2197 = vunpack.c.l.s4 1966171168
    %v2198 = vunpack.c.0.s8 %v2197
    %v2199 = vlaneseq
    %v2200 = vshrl.u32 %v2199, 7
    %v2201 = vsub.s32 %v2198, %v2200
    %v2202 = vrot.slane %v2186, %v2201
    %v2204 = vunpack.c.l.s4 1966171168
    %v2205 = vunpack.c.0.s8 %v2204
    %v2206 = vlaneseq
    %v2207 = vshrl.u32 %v2206, 7
    %v2208 = vsub.s32 %v2205, %v2207
    %v2209 = vrot.slane %v2187, %v2208
    %v2211 = vunpack.c.l.s4 1966171168
    %v2212 = vunpack.c.0.s8 %v2211
    %v2213 = vlaneseq
    %v2214 = vshrl.u32 %v2213, 7
    %v2215 = vsub.s32 %v2212, %v2214
    %v2216 = vrot.slane %v2188, %v2215
    %v2217 = vcombine.high %v2195, %v2195
    %v2218 = vcombine.high %v2202, %v2202
    %v2219 = vcombine.high %v2209, %v2209
    %v2220 = vcombine.high %v2216, %v2216
    %v2221 = vlaneseq
    %v2222 = vshrl.u32 %v2221, 7
    %v2223 = vsub.s32 0, %v2222
    %v2224 = vrot.slane %v2195, %v2223
    %v2225 = vlaneseq
    %v2226 = vshrl.u32 %v2225, 7
    %v2227 = vsub.s32 0, %v2226
    %v2228 = vrot.slane %v2209, %v2227
    %v2229 = vlaneseq
    %v2230 = vshrl.u32 %v2229, 7
    %v2231 = vsub.s32 0, %v2230
    %v2232 = vrot.slane %v2217, %v2231
    %v2233 = vlaneseq
    %v2234 = vshrl.u32 %v2233, 7
    %v2235 = vsub.s32 0, %v2234
    %v2236 = vrot.slane %v2219, %v2235
    %v2237 = vlaneseq
    %v2238 = vshrl.u32 %v2237, 7
    %v2239 = vsub.s32 0, %v2238
    %v2240 = vrot.slane %v2202, %v2239
    %v2241 = vlaneseq
    %v2242 = vshrl.u32 %v2241, 7
    %v2243 = vsub.s32 0, %v2242
    %v2244 = vrot.slane %v2216, %v2243
    %v2245 = vlaneseq
    %v2246 = vshrl.u32 %v2245, 7
    %v2247 = vsub.s32 0, %v2246
    %v2248 = vrot.slane %v2218, %v2247
    %v2249 = vlaneseq
    %v2250 = vshrl.u32 %v2249, 7
    %v2251 = vsub.s32 0, %v2250
    %v2252 = vrot.slane %v2220, %v2251
    %v2261 = vpack.c.bf16 %v2228, %v2224
    %v2262 = vpack.c.bf16 %v2236, %v2232
    %v2263 = vpack.c.bf16 %v2244, %v2240
    %v2264 = vpack.c.bf16 %v2252, %v2248
    %v2265 = vmul.bf16 %v2261, %v75
    %v2266 = vmul.bf16 %v2262, %v75
    %v2267 = vmul.bf16 %v2263, %v75
    %v2268 = vmul.bf16 %v2264, %v75
    %2273 = vrot.lane.b32.xlu0 %v2167, 64
    %v2274 = vpop.permute.xlu0 %2273
    %2275 = vrot.lane.b32.xlu0 %v2168, 64
    %v2276 = vpop.permute.xlu0 %2275
    %2277 = vrot.lane.b32.xlu0 %v2169, 64
    %v2278 = vpop.permute.xlu0 %2277
    %2279 = vrot.lane.b32.xlu0 %v2170, 64
    %v2280 = vpop.permute.xlu0 %2279
    %v2282 = vsel %vm80, %v2072, 0
    %v2285 = vsel %vm80, %v2274, 0
    %v2288 = vsel %vm80, %v2276, 0
    %v2291 = vsel %vm80, %v2278, 0
    %v2294 = vsel %vm80, %v2280, 0
    %2296 = vmatprep.subr.bf16.mxu0 0
    %2297 = vmatpush1.bf16.xpose.msra.mxu0 %v2285
    %2298 = vmatprep.subr.bf16.mxu0 0
    %2299 = vmatpush1.bf16.xpose.msra.mxu0 %v2288
    %2300 = vmatprep.subr.bf16.mxu0 0
    %2301 = vmatpush1.bf16.xpose.msra.mxu0 %v2291
    %2302 = vmatprep.subr.bf16.mxu0 0
    %2303 = vmatpush1.bf16.xpose.msra.mxu0 %v2294
    %2304 = vmatprep.subr.bf16.mxu0 0
    %2305 = vmatpush1.bf16.xpose.msra.mxu0 0
    %2306 = vmatprep.subr.bf16.mxu0 0
    %2307 = vmatpush1.bf16.xpose.msra.mxu0 0
    %2308 = vmatprep.subr.bf16.mxu0 0
    %2309 = vmatpush1.bf16.xpose.msra.mxu0 0
    %2310 = vmatprep.subr.bf16.mxu0 0
    %2311 = vmatpush1.bf16.xpose.msra.mxu0 0
    %2312 = vmatprep.subr.bf16.mxu0 0
    %2313 = vmatpush1.bf16.xpose.msra.mxu0 0
    %2314 = vmatprep.subr.bf16.mxu0 0
    %2315 = vmatpush1.bf16.xpose.msra.mxu0 0
    %2316 = vmatprep.subr.bf16.mxu0 0
    %2317 = vmatpush1.bf16.xpose.msra.mxu0 0
    %2318 = vmatprep.subr.bf16.mxu0 0
    %2319 = vmatpush1.bf16.xpose.msra.mxu0 0
    %2320 = vmatprep.subr.bf16.mxu0 0
    %2321 = vmatpush1.bf16.xpose.msra.mxu0 0
    %2322 = vmatprep.subr.bf16.mxu0 0
    %2323 = vmatpush1.bf16.xpose.msra.mxu0 0
    %2324 = vmatprep.subr.bf16.mxu0 0
    %2325 = vmatpush1.bf16.xpose.msra.mxu0 0
    %2326 = vmatprep.subr.bf16.mxu0 0
    %2327 = vmatpush1.bf16.xpose.msra.mxu0 0
    %2328 = vmatprep.mubr.bf16.mxu0 0
    %2329 = vmatmul.mubr.bf16.gmra.mrb[0].mxu0 %v2282
    %v2330 = vpop.f32.mrb[0].mxu0
    %v2331 = vadd.f32 %v68, %v2330
    %v2332 = vpop.f32.mrb[0].mxu0
    %v2333 = vpop.f32.mrb[0].mxu0
    %v2334 = vpop.f32.mrb[0].mxu0
    %2335 = vdwg.mxu0
    %v2336 = vsel %vm80, %v2331, -inf
    %2337 = vmax.xlane.f32.xlu0 %v2336
    %v2338 = vpop.xlane.xlu0 %2337
    %v2339 = vsub.f32 %v2331, %v2338
    %v2340 = vmul.f32 %v2339, 1.442695
    %v2341 = vpow.pop %v2340
    %v2342 = vpack.c.bf16 %v2341, %v2341
    %v2344 = vsel %vm80, %v2342, 0
    %2346 = vmatprep.subr.bf16.mxu0 0
    %2347 = vmatpush1.bf16.msra.mxu0 %v2265
    %2348 = vmatprep.subr.bf16.mxu0 0
    %2349 = vmatpush1.bf16.msra.mxu0 %v2266
    %2350 = vmatprep.subr.bf16.mxu0 0
    %2351 = vmatpush1.bf16.msra.mxu0 %v2267
    %2352 = vmatprep.subr.bf16.mxu0 0
    %2353 = vmatpush1.bf16.msra.mxu0 %v2268
    %2354 = vmatprep.subr.bf16.mxu0 0
    %2355 = vmatpush1.bf16.msra.mxu0 0
    %2356 = vmatprep.subr.bf16.mxu0 0
    %2357 = vmatpush1.bf16.msra.mxu0 0
    %2358 = vmatprep.subr.bf16.mxu0 0
    %2359 = vmatpush1.bf16.msra.mxu0 0
    %2360 = vmatprep.subr.bf16.mxu0 0
    %2361 = vmatpush1.bf16.msra.mxu0 0
    %2362 = vmatprep.subr.bf16.mxu0 0
    %2363 = vmatpush1.bf16.msra.mxu0 0
    %2364 = vmatprep.subr.bf16.mxu0 0
    %2365 = vmatpush1.bf16.msra.mxu0 0
    %2366 = vmatprep.subr.bf16.mxu0 0
    %2367 = vmatpush1.bf16.msra.mxu0 0
    %2368 = vmatprep.subr.bf16.mxu0 0
    %2369 = vmatpush1.bf16.msra.mxu0 0
    %2370 = vmatprep.subr.bf16.mxu0 0
    %2371 = vmatpush1.bf16.msra.mxu0 0
    %2372 = vmatprep.subr.bf16.mxu0 0
    %2373 = vmatpush1.bf16.msra.mxu0 0
    %2374 = vmatprep.subr.bf16.mxu0 0
    %2375 = vmatpush1.bf16.msra.mxu0 0
    %2376 = vmatprep.subr.bf16.mxu0 0
    %2377 = vmatpush1.bf16.msra.mxu0 0
    %2378 = vmatprep.mubr.bf16.mxu0 0
    %2379 = vmatmul.mubr.bf16.gmra.mrb[0].mxu0 %v2344
    %v2380 = vpop.f32.mrb[0].mxu0
    %v2381 = vadd.f32 0.0, %v2380
    %v2382 = vpop.f32.mrb[0].mxu0
    %v2383 = vpop.f32.mrb[0].mxu0
    %v2384 = vpop.f32.mrb[0].mxu0
    %2385 = vdwg.mxu0
    %2386 = vmatprep.subr.bf16.mxu0 0
    %2387 = vmatpush1.bf16.msra.mxu0 %v75
    %2388 = vmatprep.subr.bf16.mxu0 0
    %2389 = vmatpush1.bf16.msra.mxu0 %v75
    %2390 = vmatprep.subr.bf16.mxu0 0
    %2391 = vmatpush1.bf16.msra.mxu0 %v75
    %2392 = vmatprep.subr.bf16.mxu0 0
    %2393 = vmatpush1.bf16.msra.mxu0 %v75
    %2394 = vmatprep.subr.bf16.mxu0 0
    %2395 = vmatpush1.bf16.msra.mxu0 0
    %2396 = vmatprep.subr.bf16.mxu0 0
    %2397 = vmatpush1.bf16.msra.mxu0 0
    %2398 = vmatprep.subr.bf16.mxu0 0
    %2399 = vmatpush1.bf16.msra.mxu0 0
    %2400 = vmatprep.subr.bf16.mxu0 0
    %2401 = vmatpush1.bf16.msra.mxu0 0
    %2402 = vmatprep.subr.bf16.mxu0 0
    %2403 = vmatpush1.bf16.msra.mxu0 0
    %2404 = vmatprep.subr.bf16.mxu0 0
    %2405 = vmatpush1.bf16.msra.mxu0 0
    %2406 = vmatprep.subr.bf16.mxu0 0
    %2407 = vmatpush1.bf16.msra.mxu0 0
    %2408 = vmatprep.subr.bf16.mxu0 0
    %2409 = vmatpush1.bf16.msra.mxu0 0
    %2410 = vmatprep.subr.bf16.mxu0 0
    %2411 = vmatpush1.bf16.msra.mxu0 0
    %2412 = vmatprep.subr.bf16.mxu0 0
    %2413 = vmatpush1.bf16.msra.mxu0 0
    %2414 = vmatprep.subr.bf16.mxu0 0
    %2415 = vmatpush1.bf16.msra.mxu0 0
    %2416 = vmatprep.subr.bf16.mxu0 0
    %2417 = vmatpush1.bf16.msra.mxu0 0
    %2418 = vmatprep.mubr.bf16.mxu0 0
    %2419 = vmatmul.mubr.bf16.gmra.mrb[0].mxu0 %v2344
    %v2420 = vpop.f32.mrb[0].mxu0
    %v2421 = vadd.f32 0.0, %v2420
    %v2422 = vpop.f32.mrb[0].mxu0
    %v2423 = vpop.f32.mrb[0].mxu0
    %v2424 = vpop.f32.mrb[0].mxu0
    %2425 = vdwg.mxu0
    %v2426 = vrcp.pop %v2421
    %v2427 = vmul.f32 %v2381, %v2426
    %2428 = vst.msk [vmem:[#allocation2 + $0x8] sm:$0xff] %vm80, %v2427
    %v2429 = vld [vmem:[#allocation2] sm:$0xff]
    %v2430 = vld [vmem:[#allocation2 + $0x8] sm:$0xff]
    %v2431 = vpack.c.bf16 %v2430, %v2429
    %s2432 = scalar_lea.vmem %s5, 32
    %v2433 = vld [vmem:[%s2432] sm:$0xf]
    %v2434 = vld [vmem:[%s2432 + $0x4] sm:$0xf]
    %v2435 = vld [vmem:[%s2432 + $0x8] sm:$0xf]
    %v2436 = vld [vmem:[%s2432 + $0xc] sm:$0xf]
    %v2437 = vld [vmem:[%s2432 + $0x10] sm:$0xf]
    %v2438 = vld [vmem:[%s2432 + $0x14] sm:$0xf]
    %v2439 = vld [vmem:[%s2432 + $0x18] sm:$0xf]
    %v2440 = vld [vmem:[%s2432 + $0x1c] sm:$0xf]
    %s2441 = scalar_lea.vmem %s6, 1
    %v2442 = vld [vmem:[%s2441] sm:$0x1]
    %v2444 = vlaneseq
    %v2445 = vshrl.u32 %v2444, 7
    %v2446 = vsub.s32 0, %v2445
    %v2447 = vrot.slane %v2442, %v2446
    %v2457 = vunpack.c.l.b16 %v2433
    %v2458 = vunpack.c.l.b16 %v2434
    %v2459 = vunpack.c.l.b16 %v2435
    %v2460 = vunpack.c.l.b16 %v2436
    %v2461 = vunpack.c.l.b16 %v2437
    %v2462 = vunpack.c.l.b16 %v2438
    %v2463 = vunpack.c.l.b16 %v2439
    %v2464 = vunpack.c.l.b16 %v2440
    %v2465 = vpack.c.b16 %v2458, %v2457
    %v2466 = vpack.c.b16 %v2460, %v2459
    %v2467 = vpack.c.b16 %v2462, %v2461
    %v2468 = vpack.c.b16 %v2464, %v2463
    %v2470 = vsel %vm80, %v2431, 0
    %v2473 = vsel %vm80, %v2465, 0
    %v2476 = vsel %vm80, %v2466, 0
    %v2479 = vsel %vm80, %v2467, 0
    %v2482 = vsel %vm80, %v2468, 0
    %2484 = vmatprep.subr.bf16.mxu0 0
    %2485 = vmatpush1.bf16.xpose.msra.mxu0 %v2473
    %2486 = vmatprep.subr.bf16.mxu0 0
    %2487 = vmatpush1.bf16.xpose.msra.mxu0 %v2476
    %2488 = vmatprep.subr.bf16.mxu0 0
    %2489 = vmatpush1.bf16.xpose.msra.mxu0 %v2479
    %2490 = vmatprep.subr.bf16.mxu0 0
    %2491 = vmatpush1.bf16.xpose.msra.mxu0 %v2482
    %2492 = vmatprep.subr.bf16.mxu0 0
    %2493 = vmatpush1.bf16.xpose.msra.mxu0 0
    %2494 = vmatprep.subr.bf16.mxu0 0
    %2495 = vmatpush1.bf16.xpose.msra.mxu0 0
    %2496 = vmatprep.subr.bf16.mxu0 0
    %2497 = vmatpush1.bf16.xpose.msra.mxu0 0
    %2498 = vmatprep.subr.bf16.mxu0 0
    %2499 = vmatpush1.bf16.xpose.msra.mxu0 0
    %2500 = vmatprep.subr.bf16.mxu0 0
    %2501 = vmatpush1.bf16.xpose.msra.mxu0 0
    %2502 = vmatprep.subr.bf16.mxu0 0
    %2503 = vmatpush1.bf16.xpose.msra.mxu0 0
    %2504 = vmatprep.subr.bf16.mxu0 0
    %2505 = vmatpush1.bf16.xpose.msra.mxu0 0
    %2506 = vmatprep.subr.bf16.mxu0 0
    %2507 = vmatpush1.bf16.xpose.msra.mxu0 0
    %2508 = vmatprep.subr.bf16.mxu0 0
    %2509 = vmatpush1.bf16.xpose.msra.mxu0 0
    %2510 = vmatprep.subr.bf16.mxu0 0
    %2511 = vmatpush1.bf16.xpose.msra.mxu0 0
    %2512 = vmatprep.subr.bf16.mxu0 0
    %2513 = vmatpush1.bf16.xpose.msra.mxu0 0
    %2514 = vmatprep.subr.bf16.mxu0 0
    %2515 = vmatpush1.bf16.xpose.msra.mxu0 0
    %2516 = vmatprep.mubr.bf16.mxu0 0
    %2517 = vmatmul.mubr.bf16.gmra.mrb[0].mxu0 %v2470
    %v2518 = vpop.f32.mrb[0].mxu0
    %v2519 = vadd.f32 %v2447, %v2518
    %v2520 = vpop.f32.mrb[0].mxu0
    %v2521 = vpop.f32.mrb[0].mxu0
    %v2522 = vadd.f32 %v2447, %v2521
    %v2523 = vpop.f32.mrb[0].mxu0
    %2524 = vdwg.mxu0
    %v2525 = vadd.f32 %v1484, %v2519
    %v2526 = vadd.f32 %v1485, %v2522
    %s2527 = scalar_lea.vmem %s7, 1
    %v2528 = vld [vmem:[%s2527] sm:$0x1]
    %s2529 = scalar_lea.vmem %s8, 1
    %v2530 = vld [vmem:[%s2529] sm:$0x1]
    %v2531 = vsel %vm80, %v2525, 0.0
    %2532 = vadd.xlane.f32.xlu0 %v2531
    %v2533 = vpop.xlane.xlu0 %2532
    %v2534 = vsel %vm80, %v2526, 0.0
    %2535 = vadd.xlane.f32.xlu0 %v2534
    %v2536 = vpop.xlane.xlu0 %2535
    %v2537 = vmul.f32 %v2533, %v87
    %v2538 = vmul.f32 %v2536, %v87
    %v2539 = vsub.f32 %v2525, %v2537
    %v2540 = vsub.f32 %v2526, %v2538
    %v2541 = vmul.f32 %v2539, %v2539
    %v2542 = vmul.f32 %v2540, %v2540
    %v2543 = vsel %vm80, %v2541, 0.0
    %2544 = vadd.xlane.f32.xlu0 %v2543
    %v2545 = vpop.xlane.xlu0 %2544
    %v2546 = vsel %vm80, %v2542, 0.0
    %2547 = vadd.xlane.f32.xlu0 %v2546
    %v2548 = vpop.xlane.xlu0 %2547
    %v2549 = vmul.f32 %v2545, %v87
    %v2550 = vmul.f32 %v2548, %v87
    %v2551 = vadd.f32 %v2549, 1e-05
    %v2552 = vadd.f32 %v2550, 1e-05
    %v2553 = vrsqrt.pop %v2551
    %v2554 = vrsqrt.pop %v2552
    %v2555 = vmul.f32 %v2539, %v2553
    %v2556 = vmul.f32 %v2540, %v2554
    %v2558 = vlaneseq
    %v2559 = vshrl.u32 %v2558, 7
    %v2560 = vsub.s32 0, %v2559
    %v2561 = vrot.slane %v2528, %v2560
    %v2563 = vmul.f32 %v2555, %v2561
    %v2564 = vmul.f32 %v2556, %v2561
    %v2566 = vlaneseq
    %v2567 = vshrl.u32 %v2566, 7
    %v2568 = vsub.s32 0, %v2567
    %v2569 = vrot.slane %v2530, %v2568
    %v2571 = vadd.f32 %v2563, %v2569
    %v2572 = vadd.f32 %v2564, %v2569
    %v2573 = vpack.c.bf16 %v2572, %v2571
    %s2574 = scalar_lea.vmem %s9, 128
    %v2575 = vld [vmem:[%s2574] sm:$0xf]
    %v2576 = vld [vmem:[%s2574 + $0x4] sm:$0xf]
    %v2577 = vld [vmem:[%s2574 + $0x8] sm:$0xf]
    %v2578 = vld [vmem:[%s2574 + $0xc] sm:$0xf]
    %v2579 = vld [vmem:[%s2574 + $0x10] sm:$0xf]
    %v2580 = vld [vmem:[%s2574 + $0x14] sm:$0xf]
    %v2581 = vld [vmem:[%s2574 + $0x18] sm:$0xf]
    %v2582 = vld [vmem:[%s2574 + $0x1c] sm:$0xf]
    %v2583 = vld [vmem:[%s2574 + $0x20] sm:$0xf]
    %v2584 = vld [vmem:[%s2574 + $0x24] sm:$0xf]
    %v2585 = vld [vmem:[%s2574 + $0x28] sm:$0xf]
    %v2586 = vld [vmem:[%s2574 + $0x2c] sm:$0xf]
    %v2587 = vld [vmem:[%s2574 + $0x30] sm:$0xf]
    %v2588 = vld [vmem:[%s2574 + $0x34] sm:$0xf]
    %v2589 = vld [vmem:[%s2574 + $0x38] sm:$0xf]
    %v2590 = vld [vmem:[%s2574 + $0x3c] sm:$0xf]
    %v2591 = vld [vmem:[%s2574 + $0x40] sm:$0xf]
    %v2592 = vld [vmem:[%s2574 + $0x44] sm:$0xf]
    %v2593 = vld [vmem:[%s2574 + $0x48] sm:$0xf]
    %v2594 = vld [vmem:[%s2574 + $0x4c] sm:$0xf]
    %v2595 = vld [vmem:[%s2574 + $0x50] sm:$0xf]
    %v2596 = vld [vmem:[%s2574 + $0x54] sm:$0xf]
    %v2597 = vld [vmem:[%s2574 + $0x58] sm:$0xf]
    %v2598 = vld [vmem:[%s2574 + $0x5c] sm:$0xf]
    %v2599 = vld [vmem:[%s2574 + $0x60] sm:$0xf]
    %v2600 = vld [vmem:[%s2574 + $0x64] sm:$0xf]
    %v2601 = vld [vmem:[%s2574 + $0x68] sm:$0xf]
    %v2602 = vld [vmem:[%s2574 + $0x6c] sm:$0xf]
    %v2603 = vld [vmem:[%s2574 + $0x70] sm:$0xf]
    %v2604 = vld [vmem:[%s2574 + $0x74] sm:$0xf]
    %v2605 = vld [vmem:[%s2574 + $0x78] sm:$0xf]
    %v2606 = vld [vmem:[%s2574 + $0x7c] sm:$0xf]
    %s2607 = scalar_lea.vmem %s10, 2
    %v2608 = vld [vmem:[%s2607] sm:$0x3]
    %v2610 = vlaneseq
    %v2611 = vshrl.u32 %v2610, 7
    %v2612 = vsub.s32 0, %v2611
    %v2613 = vrot.slane %v2608, %v2612
    %v2614 = vlaneseq
    %v2615 = vshrl.u32 %v2614, 7
    %v2616 = vsub.s32 1, %v2615
    %v2617 = vrot.slane %v2608, %v2616
    %v2652 = vunpack.c.l.b16 %v2575
    %v2653 = vunpack.c.l.b16 %v2576
    %v2654 = vunpack.c.l.b16 %v2577
    %v2655 = vunpack.c.l.b16 %v2578
    %v2656 = vunpack.c.l.b16 %v2579
    %v2657 = vunpack.c.l.b16 %v2580
    %v2658 = vunpack.c.l.b16 %v2581
    %v2659 = vunpack.c.l.b16 %v2582
    %v2660 = vunpack.c.l.b16 %v2583
    %v2661 = vunpack.c.l.b16 %v2584
    %v2662 = vunpack.c.l.b16 %v2585
    %v2663 = vunpack.c.l.b16 %v2586
    %v2664 = vunpack.c.l.b16 %v2587
    %v2665 = vunpack.c.l.b16 %v2588
    %v2666 = vunpack.c.l.b16 %v2589
    %v2667 = vunpack.c.l.b16 %v2590
    %v2668 = vunpack.c.l.b16 %v2591
    %v2669 = vunpack.c.l.b16 %v2592
    %v2670 = vunpack.c.l.b16 %v2593
    %v2671 = vunpack.c.l.b16 %v2594
    %v2672 = vunpack.c.l.b16 %v2595
    %v2673 = vunpack.c.l.b16 %v2596
    %v2674 = vunpack.c.l.b16 %v2597
    %v2675 = vunpack.c.l.b16 %v2598
    %v2676 = vunpack.c.l.b16 %v2599
    %v2677 = vunpack.c.l.b16 %v2600
    %v2678 = vunpack.c.l.b16 %v2601
    %v2679 = vunpack.c.l.b16 %v2602
    %v2680 = vunpack.c.l.b16 %v2603
    %v2681 = vunpack.c.l.b16 %v2604
    %v2682 = vunpack.c.l.b16 %v2605
    %v2683 = vunpack.c.l.b16 %v2606
    %v2684 = vpack.c.b16 %v2653, %v2652
    %v2685 = vpack.c.b16 %v2655, %v2654
    %v2686 = vpack.c.b16 %v2657, %v2656
    %v2687 = vpack.c.b16 %v2659, %v2658
    %v2688 = vpack.c.b16 %v2661, %v2660
    %v2689 = vpack.c.b16 %v2663, %v2662
    %v2690 = vpack.c.b16 %v2665, %v2664
    %v2691 = vpack.c.b16 %v2667, %v2666
    %v2692 = vpack.c.b16 %v2669, %v2668
    %v2693 = vpack.c.b16 %v2671, %v2670
    %v2694 = vpack.c.b16 %v2673, %v2672
    %v2695 = vpack.c.b16 %v2675, %v2674
    %v2696 = vpack.c.b16 %v2677, %v2676
    %v2697 = vpack.c.b16 %v2679, %v2678
    %v2698 = vpack.c.b16 %v2681, %v2680
    %v2699 = vpack.c.b16 %v2683, %v2682
    %v2701 = vsel %vm80, %v2573, 0
    %v2704 = vsel %vm80, %v2684, 0
    %v2707 = vsel %vm80, %v2685, 0
    %v2710 = vsel %vm80, %v2686, 0
    %v2713 = vsel %vm80, %v2687, 0
    %v2716 = vsel %vm80, %v2688, 0
    %v2719 = vsel %vm80, %v2689, 0
    %v2722 = vsel %vm80, %v2690, 0
    %v2725 = vsel %vm80, %v2691, 0
    %v2728 = vsel %vm80, %v2692, 0
    %v2731 = vsel %vm80, %v2693, 0
    %v2734 = vsel %vm80, %v2694, 0
    %v2737 = vsel %vm80, %v2695, 0
    %v2740 = vsel %vm80, %v2696, 0
    %v2743 = vsel %vm80, %v2697, 0
    %v2746 = vsel %vm80, %v2698, 0
    %v2749 = vsel %vm80, %v2699, 0
    %2751 = vmatprep.subr.bf16.mxu0 0
    %2752 = vmatpush1.bf16.xpose.msra.mxu0 %v2704
    %2753 = vmatprep.subr.bf16.mxu0 0
    %2754 = vmatpush1.bf16.xpose.msra.mxu0 %v2707
    %2755 = vmatprep.subr.bf16.mxu0 0
    %2756 = vmatpush1.bf16.xpose.msra.mxu0 %v2710
    %2757 = vmatprep.subr.bf16.mxu0 0
    %2758 = vmatpush1.bf16.xpose.msra.mxu0 %v2713
    %2759 = vmatprep.subr.bf16.mxu0 0
    %2760 = vmatpush1.bf16.xpose.msra.mxu0 %v2716
    %2761 = vmatprep.subr.bf16.mxu0 0
    %2762 = vmatpush1.bf16.xpose.msra.mxu0 %v2719
    %2763 = vmatprep.subr.bf16.mxu0 0
    %2764 = vmatpush1.bf16.xpose.msra.mxu0 %v2722
    %2765 = vmatprep.subr.bf16.mxu0 0
    %2766 = vmatpush1.bf16.xpose.msra.mxu0 %v2725
    %2767 = vmatprep.subr.bf16.mxu0 0
    %2768 = vmatpush1.bf16.xpose.msra.mxu0 %v2728
    %2769 = vmatprep.subr.bf16.mxu0 0
    %2770 = vmatpush1.bf16.xpose.msra.mxu0 %v2731
    %2771 = vmatprep.subr.bf16.mxu0 0
    %2772 = vmatpush1.bf16.xpose.msra.mxu0 %v2734
    %2773 = vmatprep.subr.bf16.mxu0 0
    %2774 = vmatpush1.bf16.xpose.msra.mxu0 %v2737
    %2775 = vmatprep.subr.bf16.mxu0 0
    %2776 = vmatpush1.bf16.xpose.msra.mxu0 %v2740
    %2777 = vmatprep.subr.bf16.mxu0 0
    %2778 = vmatpush1.bf16.xpose.msra.mxu0 %v2743
    %2779 = vmatprep.subr.bf16.mxu0 0
    %2780 = vmatpush1.bf16.xpose.msra.mxu0 %v2746
    %2781 = vmatprep.subr.bf16.mxu0 0
    %2782 = vmatpush1.bf16.xpose.msra.mxu0 %v2749
    %2783 = vmatprep.mubr.bf16.mxu0 0
    %2784 = vmatmul.mubr.bf16.gmra.mrb[0].mxu0 %v2701
    %v2785 = vpop.f32.mrb[0].mxu0
    %v2786 = vadd.f32 %v2613, %v2785
    %v2787 = vpop.f32.mrb[0].mxu0
    %v2788 = vadd.f32 %v2617, %v2787
    %v2789 = vpop.f32.mrb[0].mxu0
    %v2790 = vadd.f32 %v2613, %v2789
    %v2791 = vpop.f32.mrb[0].mxu0
    %v2792 = vadd.f32 %v2617, %v2791
    %2793 = vdwg.mxu0
    %v2794 = vmax.f32 %v2786, 0.0
    %v2795 = vmax.f32 %v2788, 0.0
    %v2796 = vmax.f32 %v2790, 0.0
    %v2797 = vmax.f32 %v2792, 0.0
    %v2798 = vpack.c.bf16 %v2796, %v2794
    %v2799 = vpack.c.bf16 %v2797, %v2795
    %s2800 = scalar_lea.vmem %s11, 64
    %v2801 = vld [vmem:[%s2800] sm:$0xff]
    %v2802 = vld [vmem:[%s2800 + $0x8] sm:$0xff]
    %v2803 = vld [vmem:[%s2800 + $0x10] sm:$0xff]
    %v2804 = vld [vmem:[%s2800 + $0x18] sm:$0xff]
    %v2805 = vld [vmem:[%s2800 + $0x20] sm:$0xff]
    %v2806 = vld [vmem:[%s2800 + $0x28] sm:$0xff]
    %v2807 = vld [vmem:[%s2800 + $0x30] sm:$0xff]
    %v2808 = vld [vmem:[%s2800 + $0x38] sm:$0xff]
    %s2809 = scalar_lea.vmem %s12, 1
    %v2810 = vld [vmem:[%s2809] sm:$0x1]
    %v2812 = vlaneseq
    %v2813 = vshrl.u32 %v2812, 7
    %v2814 = vsub.s32 0, %v2813
    %v2815 = vrot.slane %v2810, %v2814
    %v2825 = vunpack.c.l.b16 %v2801
    %v2826 = vunpack.c.h.b16 %v2801
    %v2827 = vunpack.c.l.b16 %v2802
    %v2828 = vunpack.c.h.b16 %v2802
    %v2829 = vunpack.c.l.b16 %v2803
    %v2830 = vunpack.c.h.b16 %v2803
    %v2831 = vunpack.c.l.b16 %v2804
    %v2832 = vunpack.c.h.b16 %v2804
    %v2833 = vunpack.c.l.b16 %v2805
    %v2834 = vunpack.c.h.b16 %v2805
    %v2835 = vunpack.c.l.b16 %v2806
    %v2836 = vunpack.c.h.b16 %v2806
    %v2837 = vunpack.c.l.b16 %v2807
    %v2838 = vunpack.c.h.b16 %v2807
    %v2839 = vunpack.c.l.b16 %v2808
    %v2840 = vunpack.c.h.b16 %v2808
    %v2841 = vpack.c.b16 %v2827, %v2825
    %v2842 = vpack.c.b16 %v2828, %v2826
    %v2843 = vpack.c.b16 %v2831, %v2829
    %v2844 = vpack.c.b16 %v2832, %v2830
    %v2845 = vpack.c.b16 %v2835, %v2833
    %v2846 = vpack.c.b16 %v2836, %v2834
    %v2847 = vpack.c.b16 %v2839, %v2837
    %v2848 = vpack.c.b16 %v2840, %v2838
    %2857 = vmatprep.subr.bf16.mxu0 %v2842
    %2858 = vmatpush1.bf16.xpose.msra.mxu0 %v2841
    %2859 = vmatprep.subr.bf16.mxu0 %v2844
    %2860 = vmatpush1.bf16.xpose.msra.mxu0 %v2843
    %2861 = vmatprep.subr.bf16.mxu0 %v2846
    %2862 = vmatpush1.bf16.xpose.msra.mxu0 %v2845
    %2863 = vmatprep.subr.bf16.mxu0 %v2848
    %2864 = vmatpush1.bf16.xpose.msra.mxu0 %v2847
    %2865 = vmatprep.subr.bf16.mxu0 0
    %2866 = vmatpush1.bf16.xpose.msra.mxu0 0
    %2867 = vmatprep.subr.bf16.mxu0 0
    %2868 = vmatpush1.bf16.xpose.msra.mxu0 0
    %2869 = vmatprep.subr.bf16.mxu0 0
    %2870 = vmatpush1.bf16.xpose.msra.mxu0 0
    %2871 = vmatprep.subr.bf16.mxu0 0
    %2872 = vmatpush1.bf16.xpose.msra.mxu0 0
    %2873 = vmatprep.subr.bf16.mxu0 0
    %2874 = vmatpush1.bf16.xpose.msra.mxu0 0
    %2875 = vmatprep.subr.bf16.mxu0 0
    %2876 = vmatpush1.bf16.xpose.msra.mxu0 0
    %2877 = vmatprep.subr.bf16.mxu0 0
    %2878 = vmatpush1.bf16.xpose.msra.mxu0 0
    %2879 = vmatprep.subr.bf16.mxu0 0
    %2880 = vmatpush1.bf16.xpose.msra.mxu0 0
    %2881 = vmatprep.subr.bf16.mxu0 0
    %2882 = vmatpush1.bf16.xpose.msra.mxu0 0
    %2883 = vmatprep.subr.bf16.mxu0 0
    %2884 = vmatpush1.bf16.xpose.msra.mxu0 0
    %2885 = vmatprep.subr.bf16.mxu0 0
    %2886 = vmatpush1.bf16.xpose.msra.mxu0 0
    %2887 = vmatprep.subr.bf16.mxu0 0
    %2888 = vmatpush1.bf16.xpose.msra.mxu0 0
    %2889 = vmatprep.mubr.bf16.mxu0 %v2799
    %2890 = vmatmul.mubr.bf16.gmra.mrb[0].mxu0 %v2798
    %v2891 = vpop.f32.mrb[0].mxu0
    %v2892 = vadd.f32 %v2815, %v2891
    %v2893 = vpop.f32.mrb[0].mxu0
    %v2894 = vpop.f32.mrb[0].mxu0
    %v2895 = vadd.f32 %v2815, %v2894
    %v2896 = vpop.f32.mrb[0].mxu0
    %2897 = vdwg.mxu0
    %v2898 = vadd.f32 %v2525, %v2892
    %v2899 = vadd.f32 %v2526, %v2895
    %v2900 = vld [vmem:[%s13] sm:$0x1]
    %v2901 = vld [vmem:[%s14] sm:$0x1]
    %v2902 = vsel %vm80, %v2898, 0.0
    %2903 = vadd.xlane.f32.xlu0 %v2902
    %v2904 = vpop.xlane.xlu0 %2903
    %v2905 = vsel %vm80, %v2899, 0.0
    %2906 = vadd.xlane.f32.xlu0 %v2905
    %v2907 = vpop.xlane.xlu0 %2906
    %v2908 = vmul.f32 %v2904, %v87
    %v2909 = vmul.f32 %v2907, %v87
    %v2910 = vsub.f32 %v2898, %v2908
    %v2911 = vsub.f32 %v2899, %v2909
    %v2912 = vmul.f32 %v2910, %v2910
    %v2913 = vmul.f32 %v2911, %v2911
    %v2914 = vsel %vm80, %v2912, 0.0
    %2915 = vadd.xlane.f32.xlu0 %v2914
    %v2916 = vpop.xlane.xlu0 %2915
    %v2917 = vsel %vm80, %v2913, 0.0
    %2918 = vadd.xlane.f32.xlu0 %v2917
    %v2919 = vpop.xlane.xlu0 %2918
    %v2920 = vmul.f32 %v2916, %v87
    %v2921 = vmul.f32 %v2919, %v87
    %v2922 = vadd.f32 %v2920, 1e-05
    %v2923 = vadd.f32 %v2921, 1e-05
    %v2924 = vrsqrt.pop %v2922
    %v2925 = vrsqrt.pop %v2923
    %v2926 = vmul.f32 %v2910, %v2924
    %v2927 = vmul.f32 %v2911, %v2925
    %v2929 = vlaneseq
    %v2930 = vshrl.u32 %v2929, 7
    %v2931 = vsub.s32 0, %v2930
    %v2932 = vrot.slane %v2900, %v2931
    %v2934 = vmul.f32 %v2926, %v2932
    %v2935 = vmul.f32 %v2927, %v2932
    %v2937 = vlaneseq
    %v2938 = vshrl.u32 %v2937, 7
    %v2939 = vsub.s32 0, %v2938
    %v2940 = vrot.slane %v2901, %v2939
    %v2942 = vadd.f32 %v2934, %v2940
    %v2943 = vadd.f32 %v2935, %v2940
    %2944 = vst.msk [vmem:[#allocation5] sm:$0xff] %vm80, %v2942
    %2945 = vst.msk [vmem:[#allocation5 + $0x8] sm:$0xff] %vm80, %v2943
    %v2946 = vpack.c.bf16 %v2943, %v2942
    %v2947 = vld [vmem:[%s15] sm:$0xf]
    %v2948 = vld [vmem:[%s15 + $0x4] sm:$0xf]
    %v2949 = vld [vmem:[%s15 + $0x8] sm:$0xf]
    %v2950 = vld [vmem:[%s15 + $0xc] sm:$0xf]
    %v2951 = vld [vmem:[%s15 + $0x10] sm:$0xf]
    %v2952 = vld [vmem:[%s15 + $0x14] sm:$0xf]
    %v2953 = vld [vmem:[%s15 + $0x18] sm:$0xf]
    %v2954 = vld [vmem:[%s15 + $0x1c] sm:$0xf]
    %v2955 = vld [vmem:[%s15 + $0x20] sm:$0xf]
    %v2956 = vld [vmem:[%s15 + $0x24] sm:$0xf]
    %v2957 = vld [vmem:[%s15 + $0x28] sm:$0xf]
    %v2958 = vld [vmem:[%s15 + $0x2c] sm:$0xf]
    %v2959 = vld [vmem:[%s15 + $0x30] sm:$0xf]
    %v2960 = vld [vmem:[%s15 + $0x34] sm:$0xf]
    %v2961 = vld [vmem:[%s15 + $0x38] sm:$0xf]
    %v2962 = vld [vmem:[%s15 + $0x3c] sm:$0xf]
    %v2963 = vld [vmem:[%s16] sm:$0x1]
    %v2965 = vlaneseq
    %v2966 = vshrl.u32 %v2965, 7
    %v2967 = vsub.s32 0, %v2966
    %v2968 = vrot.slane %v2963, %v2967
    %v2986 = vunpack.c.l.b16 %v2947
    %v2987 = vunpack.c.l.b16 %v2948
    %v2988 = vunpack.c.l.b16 %v2949
    %v2989 = vunpack.c.l.b16 %v2950
    %v2990 = vunpack.c.l.b16 %v2951
    %v2991 = vunpack.c.l.b16 %v2952
    %v2992 = vunpack.c.l.b16 %v2953
    %v2993 = vunpack.c.l.b16 %v2954
    %v2994 = vunpack.c.l.b16 %v2955
    %v2995 = vunpack.c.l.b16 %v2956
    %v2996 = vunpack.c.l.b16 %v2957
    %v2997 = vunpack.c.l.b16 %v2958
    %v2998 = vunpack.c.l.b16 %v2959
    %v2999 = vunpack.c.l.b16 %v2960
    %v3000 = vunpack.c.l.b16 %v2961
    %v3001 = vunpack.c.l.b16 %v2962
    %v3002 = vpack.c.b16 %v2987, %v2986
    %v3003 = vpack.c.b16 %v2989, %v2988
    %v3004 = vpack.c.b16 %v2991, %v2990
    %v3005 = vpack.c.b16 %v2993, %v2992
    %v3006 = vpack.c.b16 %v2995, %v2994
    %v3007 = vpack.c.b16 %v2997, %v2996
    %v3008 = vpack.c.b16 %v2999, %v2998
    %v3009 = vpack.c.b16 %v3001, %v3000
    %v3011 = vsel %vm80, %v2946, 0
    %v3014 = vsel %vm80, %v3002, 0
    %v3017 = vsel %vm80, %v3003, 0
    %v3020 = vsel %vm80, %v3004, 0
    %v3023 = vsel %vm80, %v3005, 0
    %v3026 = vsel %vm80, %v3006, 0
    %v3029 = vsel %vm80, %v3007, 0
    %v3032 = vsel %vm80, %v3008, 0
    %v3035 = vsel %vm80, %v3009, 0
    %3037 = vmatprep.subr.bf16.mxu0 0
    %3038 = vmatpush1.bf16.xpose.msra.mxu0 %v3014
    %3039 = vmatprep.subr.bf16.mxu0 0
    %3040 = vmatpush1.bf16.xpose.msra.mxu0 %v3017
    %3041 = vmatprep.subr.bf16.mxu0 0
    %3042 = vmatpush1.bf16.xpose.msra.mxu0 %v3020
    %3043 = vmatprep.subr.bf16.mxu0 0
    %3044 = vmatpush1.bf16.xpose.msra.mxu0 %v3023
    %3045 = vmatprep.subr.bf16.mxu0 0
    %3046 = vmatpush1.bf16.xpose.msra.mxu0 %v3026
    %3047 = vmatprep.subr.bf16.mxu0 0
    %3048 = vmatpush1.bf16.xpose.msra.mxu0 %v3029
    %3049 = vmatprep.subr.bf16.mxu0 0
    %3050 = vmatpush1.bf16.xpose.msra.mxu0 %v3032
    %3051 = vmatprep.subr.bf16.mxu0 0
    %3052 = vmatpush1.bf16.xpose.msra.mxu0 %v3035
    %3053 = vmatprep.subr.bf16.mxu0 0
    %3054 = vmatpush1.bf16.xpose.msra.mxu0 0
    %3055 = vmatprep.subr.bf16.mxu0 0
    %3056 = vmatpush1.bf16.xpose.msra.mxu0 0
    %3057 = vmatprep.subr.bf16.mxu0 0
    %3058 = vmatpush1.bf16.xpose.msra.mxu0 0
    %3059 = vmatprep.subr.bf16.mxu0 0
    %3060 = vmatpush1.bf16.xpose.msra.mxu0 0
    %3061 = vmatprep.subr.bf16.mxu0 0
    %3062 = vmatpush1.bf16.xpose.msra.mxu0 0
    %3063 = vmatprep.subr.bf16.mxu0 0
    %3064 = vmatpush1.bf16.xpose.msra.mxu0 0
    %3065 = vmatprep.subr.bf16.mxu0 0
    %3066 = vmatpush1.bf16.xpose.msra.mxu0 0
    %3067 = vmatprep.subr.bf16.mxu0 0
    %3068 = vmatpush1.bf16.xpose.msra.mxu0 0
    %3069 = vmatprep.mubr.bf16.mxu0 0
    %3070 = vmatmul.mubr.bf16.gmra.mrb[0].mxu0 %v3011
    %v3071 = vpop.f32.mrb[0].mxu0
    %v3072 = vadd.f32 %v2968, %v3071
    %v3073 = vpop.f32.mrb[0].mxu0
    %v3074 = vpop.f32.mrb[0].mxu0
    %v3075 = vadd.f32 %v2968, %v3074
    %v3076 = vpop.f32.mrb[0].mxu0
    %3077 = vdwg.mxu0
    %3078 = vst [vmem:[#allocation3] sm:$0xff] %v3072
    %3079 = vst [vmem:[#allocation3 + $0x8] sm:$0xff] %v3075
    // Predicated region
    $region70: #{tpu_custom_call.1} parent=1 // pred_check
      _
    $region71: #{tpu_custom_call.1} parent=1 // pred_check_branch
      %3081 = sbr.rel (0) target = $region73
    $region72: #{tpu_custom_call.1} parent=1 // pred_region
      %s3083 = ssub.s32 256, 256
      %3084 = vsyncadd [#allocation4], %s3083
      %s3085 = sshll.u32 [#allocation3], 4
      %s3086 = int_to_ptr.vmem [resolvable:$true] %s3085
      %3091 = dma.vmem_to_hbm [thread:$0]  %s3086, 256, %s17, [#allocation4], 128, 128, 8
    $region73: #{tpu_custom_call.1} parent=1 // pred_fallthru
      _
    // Predicated region
    $region74: #{tpu_custom_call.1} parent=1 // pred_check
      _
    $region75: #{tpu_custom_call.1} parent=1 // pred_check_branch
      %3093 = sbr.rel (0) target = $region77
    $region76: #{tpu_custom_call.1} parent=1 // pred_region
      %s3095 = ssub.s32 256, 256
      %3096 = vsyncadd [#allocation6], %s3095
      %s3097 = sshll.u32 [#allocation5], 4
      %s3098 = int_to_ptr.vmem [resolvable:$true] %s3097
      %3103 = dma.vmem_to_hbm [thread:$0]  %s3098, 256, %s18, [#allocation6], 128, 128, 8
    $region77: #{tpu_custom_call.1} parent=1 // pred_fallthru
      _
    // Predicated region
    $region78: #{tpu_custom_call.1} parent=1 // pred_check
      _
    $region79: #{tpu_custom_call.1} parent=1 // pred_check_branch
      %3105 = sbr.rel (0) target = $region81
    $region80: #{tpu_custom_call.1} parent=1 // pred_region
      %3106 = dma.done [#allocation4], 256
    $region81: #{tpu_custom_call.1} parent=1 // pred_fallthru
      _
    // Predicated region
    $region82: #{tpu_custom_call.1} parent=1 // pred_check
      _
    $region83: #{tpu_custom_call.1} parent=1 // pred_check_branch
      %3108 = sbr.rel (0) target = $region85
    $region84: #{tpu_custom_call.1} parent=1 // pred_region
      %3109 = dma.done [#allocation6], 256
    $region85: #{tpu_custom_call.1} parent=1 // pred_fallthru
      _
    %3110 = vsyncpa [#allocation4], 1
    %3111 = vsyncpa [#allocation6], 1

</llo_original>
